<compile_context>
chip_gen: v7x
topology: tpu7x:2x2x1
jax: 0.10.0
libtpu: 0.0.40
codegen_flags: <defaults>
</compile_context>

<pallas_src>
import jax
import jax.numpy as jnp
from jax import lax
from jax.experimental import pallas as pl
from jax.experimental.pallas import tpu as pltpu


def _round_up(x, m):
    return ((x + m - 1) // m) * m


# ------------------ Kernel 1: sequential LSTM recurrence -------------------

def _lstm_kernel(x_ref, w_ih_ref, w_hh_ref, b_ref, h_all_ref,
                 gx_ref, h_scr, c_scr):
    """x_ref: (T, tb, Ep) bf16; w_ih_ref: (Ep, 4Hp) bf16; w_hh_ref: (Hp, 4Hp)
    bf16; b_ref: (1, 4Hp) f32; h_all_ref: (T, tb, Hp) bf16 output.
    gx_ref: (T, tb, 4Hp) f32 scratch; h_scr/c_scr: (tb, Hp) f32 scratch."""
    T, tb, Ep = x_ref.shape
    Hp = h_all_ref.shape[2]

    # ---- phase 1: input projection + bias, hoisted out of the time loop ----
    x2d = x_ref[...].reshape(T * tb, Ep)                       # free reshape (tb % 8 == 0)
    gx = (jnp.dot(x2d, w_ih_ref[...], preferred_element_type=jnp.float32)
          + b_ref[...])                                        # bias broadcast once
    gx_ref[...] = gx.reshape(T, tb, 4 * Hp)

    # ---- phase 2: serial recurrence, only h @ W_hh per step ----------------
    h_scr[...] = jnp.zeros_like(h_scr)
    c_scr[...] = jnp.zeros_like(c_scr)

    def sigmoid(z):                       # single EUP transcendental per call
        return 0.5 * jnp.tanh(0.5 * z) + 0.5

    def step(t, carry):
        h = h_scr[...]
        c = c_scr[...]
        gates = gx_ref[t] + jnp.dot(h.astype(jnp.bfloat16), w_hh_ref[...],
                                    preferred_element_type=jnp.float32)
        # PyTorch LSTM gate order: input, forget, cell(g), output
        i_g = sigmoid(gates[:, 0 * Hp:1 * Hp])
        f_g = sigmoid(gates[:, 1 * Hp:2 * Hp])
        g_g = jnp.tanh(gates[:, 2 * Hp:3 * Hp])
        o_g = sigmoid(gates[:, 3 * Hp:4 * Hp])
        c_new = f_g * c + i_g * g_g
        h_new = o_g * jnp.tanh(c_new)
        h_scr[...] = h_new
        c_scr[...] = c_new
        h_all_ref[t] = h_new.astype(h_all_ref.dtype)
        return carry

    lax.fori_loop(0, T, step, 0, unroll=min(T, 8))


# ------------------ Kernel 2: output projection GEMM ------------------------

def _fc_kernel(h_ref, w_ref, b_ref, o_ref):
    o_ref[...] = (jnp.dot(h_ref[...], w_ref[...],
                          preferred_element_type=jnp.float32)
                  + b_ref[...])


# ------------------ host-side wrapper ---------------------------------------

def decoder_rnn_forward(features, captions, params):
    """features: (B, E) f32; captions: (B, L) int32.  Returns (B, L, V) f32."""
    emb_table = params["embedding"]          # (V, E)
    w_ih_t = params["w_ih_t"]                # (E, 4H)
    w_hh_t = params["w_hh_t"]                # (H, 4H)
    b_gates = params["b_gates"]              # (1, 4H)  == b_ih + b_hh
    w_fc_t = params["w_fc_t"]                # (H, V)
    b_fc = params["b_fc"]                    # (1, V)

    B, E = features.shape
    H = w_hh_t.shape[0]
    V = w_fc_t.shape[1]

    # Glue: embedding lookup of captions[:, :-1] and concat with image features.
    embeds = jnp.take(emb_table, captions[:, :-1], axis=0)          # (B, L-1, E)
    x = jnp.concatenate([features[:, None, :], embeds], axis=1)     # (B, T, E)
    T = x.shape[1]
    x_tm = jnp.transpose(x, (1, 0, 2)).astype(jnp.float32)          # (T, B, E)

    # Hardware-friendly padding: batch -> 8 sublanes, feature dims -> 128 lanes.
    Bp = _round_up(B, 8)
    Ep = _round_up(E, 128)
    Hp = _round_up(H, 128)

    x_pad = (jnp.zeros((T, Bp, Ep), jnp.float32)
             .at[:, :B, :E].set(x_tm).astype(jnp.bfloat16))

    # Per-gate lane-aligned padding; W_ih and W_hh kept separate (no fused concat).
    w_ih_p = jnp.zeros((Ep, 4 * Hp), jnp.float32)
    w_hh_p = jnp.zeros((Hp, 4 * Hp), jnp.float32)
    b_p = jnp.zeros((1, 4 * Hp), jnp.float32)
    for k in range(4):
        w_ih_p = w_ih_p.at[:E, k * Hp:k * Hp + H].set(w_ih_t[:, k * H:(k + 1) * H])
        w_hh_p = w_hh_p.at[:H, k * Hp:k * Hp + H].set(w_hh_t[:, k * H:(k + 1) * H])
        b_p = b_p.at[:, k * Hp:k * Hp + H].set(b_gates[:, k * H:(k + 1) * H])
    w_ih_p = w_ih_p.astype(jnp.bfloat16)
    w_hh_p = w_hh_p.astype(jnp.bfloat16)

    # Batch-block grid: 2 independent blocks when possible (v7x dual TensorCore).
    nb = 2 if (Bp >= 16 and Bp % 16 == 0) else 1
    tb = Bp // nb

    # ---- recurrence: loop in-kernel, parallel over batch blocks -------------
    h_all = pl.pallas_call(
        _lstm_kernel,
        out_shape=jax.ShapeDtypeStruct((T, Bp, Hp), jnp.bfloat16),
        grid_spec=pltpu.PrefetchScalarGridSpec(
            num_scalar_prefetch=0,
            grid=(nb,),
            in_specs=[
                pl.BlockSpec((T, tb, Ep), lambda i: (0, i, 0)),
                pl.BlockSpec((Ep, 4 * Hp), lambda i: (0, 0)),
                pl.BlockSpec((Hp, 4 * Hp), lambda i: (0, 0)),
                pl.BlockSpec((1, 4 * Hp), lambda i: (0, 0)),
            ],
            out_specs=pl.BlockSpec((T, tb, Hp), lambda i: (0, i, 0)),
            scratch_shapes=[
                pltpu.VMEM((T, tb, 4 * Hp), jnp.float32),   # gates_x
                pltpu.VMEM((tb, Hp), jnp.float32),          # h state
                pltpu.VMEM((tb, Hp), jnp.float32),          # c state
            ]),
        compiler_params=pltpu.CompilerParams(
            dimension_semantics=("parallel",),
            vmem_limit_bytes=32 * 1024 * 1024),
    )(x_pad, w_ih_p, w_hh_p, b_p)

    # ---- output projection -------------------------------------------------
    # Transpose the SMALL bf16 hidden tensor to batch-major so the big f32
    # logits come out batch-first with no transpose at the end.
    M = Bp * T
    h_bt = jnp.transpose(h_all, (1, 0, 2)).reshape(M, Hp)            # (M, Hp) bf16

    # Lane-dense vocab tiles: pad Vp up to the chosen tile width.
    if V <= 1024:
        Vp = _round_up(V, 128)
        tn = Vp
    else:
        tn = 512
        Vp = _round_up(V, tn)

    if M <= 256:
        tm, Mp = M, M
    else:
        tm = 256
        Mp = _round_up(M, tm)
    if Mp > M:
        h_bt = jnp.zeros((Mp, Hp), h_bt.dtype).at[:M].set(h_bt)

    w_fc_p = (jnp.zeros((Hp, Vp), jnp.float32)
              .at[:H, :V].set(w_fc_t).astype(jnp.bfloat16))
    b_fc_p = jnp.zeros((1, Vp), jnp.float32).at[:, :V].set(b_fc)

    # Vocab axis OUTER so the (Hp, tn) weight block is reused across all M tiles.
    logits_flat = pl.pallas_call(
        _fc_kernel,
        out_shape=jax.ShapeDtypeStruct((Mp, Vp), jnp.float32),
        grid_spec=pltpu.PrefetchScalarGridSpec(
            num_scalar_prefetch=0,
            grid=(Vp // tn, Mp // tm),
            in_specs=[
                pl.BlockSpec((tm, Hp), lambda vi, mi: (mi, 0)),
                pl.BlockSpec((Hp, tn), lambda vi, mi: (0, vi)),
                pl.BlockSpec((1, tn), lambda vi, mi: (0, vi)),
            ],
            out_specs=pl.BlockSpec((tm, tn), lambda vi, mi: (mi, vi)),
        ),
        compiler_params=pltpu.CompilerParams(
            dimension_semantics=("parallel", "parallel"),
            vmem_limit_bytes=32 * 1024 * 1024),
    )(h_bt, w_fc_p, b_fc_p)

    logits = logits_flat[:M].reshape(Bp, T, Vp)[:B, :, :V]           # (B, T, V)
    return logits


def decoder_rnn_reference(features, captions, params):
    """Pure-JAX f32 reference of the same forward pass (for verification)."""
    emb_table = params["embedding"]
    w_ih_t, w_hh_t = params["w_ih_t"], params["w_hh_t"]
    b_gates, w_fc_t, b_fc = params["b_gates"], params["w_fc_t"], params["b_fc"]
    H = w_hh_t.shape[0]

    embeds = jnp.take(emb_table, captions[:, :-1], axis=0)
    x = jnp.concatenate([features[:, None, :], embeds], axis=1)      # (B, T, E)
    B = x.shape[0]

    def step(carry, x_t):
        h, c = carry
        gates = x_t @ w_ih_t + h @ w_hh_t + b_gates
        i_g = jax.nn.sigmoid(gates[:, 0 * H:1 * H])
        f_g = jax.nn.sigmoid(gates[:, 1 * H:2 * H])
        g_g = jnp.tanh(gates[:, 2 * H:3 * H])
        o_g = jax.nn.sigmoid(gates[:, 3 * H:4 * H])
        c = f_g * c + i_g * g_g
        h = o_g * jnp.tanh(c)
        return (h, c), h @ w_fc_t + b_fc

    init = (jnp.zeros((B, H), jnp.float32), jnp.zeros((B, H), jnp.float32))
    _, outs = jax.lax.scan(step, init, jnp.transpose(x, (1, 0, 2)))
    return jnp.transpose(outs, (1, 0, 2))


def make_params(key, embed_size, hidden_size, vocab_size):
    ks = jax.random.split(key, 7)
    s = 0.1
    return {
        "embedding": s * jax.random.normal(ks[0], (vocab_size, embed_size), jnp.float32),
        "w_ih_t":    s * jax.random.normal(ks[1], (embed_size, 4 * hidden_size), jnp.float32),
        "w_hh_t":    s * jax.random.normal(ks[2], (hidden_size, 4 * hidden_size), jnp.float32),
        "b_gates":   s * jax.random.normal(ks[3], (1, 4 * hidden_size), jnp.float32),
        "w_fc_t":    s * jax.random.normal(ks[4], (hidden_size, vocab_size), jnp.float32),
        "b_fc":      s * jax.random.normal(ks[5], (1, vocab_size), jnp.float32),
    }


if __name__ == "__main__":
    # Small shapes consistent with the module's forward():
    B, E, H, V, L = 2, 32, 32, 128, 8   # captions length L -> sequence length T = L
    key = jax.random.PRNGKey(0)
    kp, kf, kc = jax.random.split(key, 3)

    params = make_params(kp, embed_size=E, hidden_size=H, vocab_size=V)
    features = jax.random.normal(kf, (B, E), jnp.float32)             # encoder image features
    captions = jax.random.randint(kc, (B, L), 0, V, dtype=jnp.int32)  # token ids

    out = decoder_rnn_forward(features, captions, params)
    out = jax.block_until_ready(out)

    ref = decoder_rnn_reference(features, captions, params)
    assert out.shape == (B, L, V), out.shape
    # Tolerance loosened vs the f32 reference because MXU matmuls run in bf16
    # (gate math and c/h state are kept in f32 inside the kernel).
    assert jnp.allclose(out, ref, atol=2e-2, rtol=2e-2), "mismatch vs pure-JAX reference"

    # TODO(synk): generate_caption (greedy decode with vocab.itos) is host-side
    # control flow and not part of the kernel.
    print("KERNEL_OK")
</pallas_src>

<mosaic_0001>
module attributes {stable_mosaic.version = 11 : i64} {
  func.func @_lstm_kernel(%arg0: i32, %arg1: memref<8x8x128xbf16, #tpu.memory_space<vmem>>, %arg2: memref<128x512xbf16, #tpu.memory_space<vmem>>, %arg3: memref<128x512xbf16, #tpu.memory_space<vmem>>, %arg4: memref<1x512xf32, #tpu.memory_space<vmem>>, %arg5: memref<8x8x128xbf16, #tpu.memory_space<vmem>>, %arg6: memref<8x8x512xf32, #tpu.memory_space<vmem>>, %arg7: memref<8x128xf32, #tpu.memory_space<vmem>>, %arg8: memref<8x128xf32, #tpu.memory_space<vmem>>) attributes {dimension_semantics = [#tpu.dimension_semantics<parallel>], iteration_bounds = array<i64: 1>, scalar_prefetch = 0 : i64, scratch_operands = 3 : i64, tpu.core_type = #tpu.core_type<tc>, window_params = [{transform_indices = @transform_0, window_bounds = array<i64: 8, 8, 128>}, {pipeline_mode = #tpu.pipeline_mode<synchronous>, transform_indices = @transform_1, window_bounds = array<i64: 128, 512>}, {pipeline_mode = #tpu.pipeline_mode<synchronous>, transform_indices = @transform_2, window_bounds = array<i64: 128, 512>}, {pipeline_mode = #tpu.pipeline_mode<synchronous>, transform_indices = @transform_3, window_bounds = array<i64: 1, 512>}, {transform_indices = @transform_4, window_bounds = array<i64: 8, 8, 128>}]} {
    %c0 = arith.constant 0 : index
    %c0_0 = arith.constant 0 : index
    %c0_1 = arith.constant 0 : index
    %0 = vector.load %arg1[%c0, %c0_0, %c0_1] : memref<8x8x128xbf16, #tpu.memory_space<vmem>>, vector<8x8x128xbf16>
    %1 = vector.shape_cast %0 : vector<8x8x128xbf16> to vector<64x128xbf16>
    %c0_2 = arith.constant 0 : index
    %c0_3 = arith.constant 0 : index
    %2 = vector.load %arg2[%c0_2, %c0_3] : memref<128x512xbf16, #tpu.memory_space<vmem>>, vector<128x512xbf16>
    %cst = arith.constant dense<0.000000e+00> : vector<64x512xf32>
    %3 = tpu.matmul %1, %2, %cst {dimension_numbers = #tpu.dot_dimension_numbers<[1], [0], [0], [1], [0, 0, 1, 1], [], []>} : vector<64x128xbf16>, vector<128x512xbf16>, vector<64x512xf32> -> vector<64x512xf32>
    %c0_4 = arith.constant 0 : index
    %c0_5 = arith.constant 0 : index
    %4 = vector.load %arg4[%c0_4, %c0_5] : memref<1x512xf32, #tpu.memory_space<vmem>>, vector<1x512xf32>
    %5 = vector.broadcast %4 : vector<1x512xf32> to vector<64x512xf32>
    %6 = arith.addf %3, %5 : vector<64x512xf32>
    %7 = vector.shape_cast %6 : vector<64x512xf32> to vector<8x8x512xf32>
    %c0_6 = arith.constant 0 : index
    %c0_7 = arith.constant 0 : index
    %c0_8 = arith.constant 0 : index
    %8 = vector.load %arg6[%c0_6, %c0_7, %c0_8] : memref<8x8x512xf32, #tpu.memory_space<vmem>>, vector<8x8x512xf32>
    tpu.vector_store %arg6[%c0_6, %c0_7, %c0_8], %7 {strides = array<i32>} : memref<8x8x512xf32, #tpu.memory_space<vmem>>, vector<8x8x512xf32>,
    %cst_9 = arith.constant 0.000000e+00 : f32
    %9 = vector.broadcast %cst_9 : f32 to vector<8x128xf32>
    %c0_10 = arith.constant 0 : index
    %c0_11 = arith.constant 0 : index
    %10 = vector.load %arg7[%c0_10, %c0_11] : memref<8x128xf32, #tpu.memory_space<vmem>>, vector<8x128xf32>
    tpu.vector_store %arg7[%c0_10, %c0_11], %9 {strides = array<i32>} : memref<8x128xf32, #tpu.memory_space<vmem>>, vector<8x128xf32>,
    %cst_12 = arith.constant 0.000000e+00 : f32
    %11 = vector.broadcast %cst_12 : f32 to vector<8x128xf32>
    %c0_13 = arith.constant 0 : index
    %c0_14 = arith.constant 0 : index
    %12 = vector.load %arg8[%c0_13, %c0_14] : memref<8x128xf32, #tpu.memory_space<vmem>>, vector<8x128xf32>
    tpu.vector_store %arg8[%c0_13, %c0_14], %11 {strides = array<i32>} : memref<8x128xf32, #tpu.memory_space<vmem>>, vector<8x128xf32>,
    %c0_i32 = arith.constant 0 : i32
    %c0_15 = arith.constant 0 : index
    %c0_16 = arith.constant 0 : index
    %13 = vector.load %arg7[%c0_15, %c0_16] : memref<8x128xf32, #tpu.memory_space<vmem>>, vector<8x128xf32>
    %c0_17 = arith.constant 0 : index
    %c0_18 = arith.constant 0 : index
    %14 = vector.load %arg8[%c0_17, %c0_18] : memref<8x128xf32, #tpu.memory_space<vmem>>, vector<8x128xf32>
    %15 = arith.index_cast %c0_i32 : i32 to index
    %c0_19 = arith.constant 0 : index
    %c0_20 = arith.constant 0 : index
    %16 = vector.load %arg6[%15, %c0_19, %c0_20] : memref<8x8x512xf32, #tpu.memory_space<vmem>>, vector<1x8x512xf32>
    %17 = vector.shape_cast %16 : vector<1x8x512xf32> to vector<8x512xf32>
    %18 = arith.truncf %13 : vector<8x128xf32> to vector<8x128xbf16>
    %c0_21 = arith.constant 0 : index
    %c0_22 = arith.constant 0 : index
    %19 = vector.load %arg3[%c0_21, %c0_22] : memref<128x512xbf16, #tpu.memory_space<vmem>>, vector<128x512xbf16>
    %cst_23 = arith.constant dense<0.000000e+00> : vector<8x512xf32>
    %20 = tpu.matmul %18, %19, %cst_23 {dimension_numbers = #tpu.dot_dimension_numbers<[1], [0], [0], [1], [0, 0, 1, 1], [], []>} : vector<8x128xbf16>, vector<128x512xbf16>, vector<8x512xf32> -> vector<8x512xf32>
    %21 = arith.addf %17, %20 : vector<8x512xf32>
    %22 = vector.extract_strided_slice %21 {offsets = [0, 0], sizes = [8, 128], strides = [1, 1]} : vector<8x512xf32> to vector<8x128xf32>
    %cst_24 = arith.constant 5.000000e-01 : f32
    %23 = vector.broadcast %cst_24 : f32 to vector<8x128xf32>
    %24 = arith.mulf %23, %22 : vector<8x128xf32>
    %25 = math.tanh %24 : vector<8x128xf32>
    %cst_25 = arith.constant 5.000000e-01 : f32
    %26 = vector.broadcast %cst_25 : f32 to vector<8x128xf32>
    %27 = arith.mulf %26, %25 : vector<8x128xf32>
    %cst_26 = arith.constant 5.000000e-01 : f32
    %28 = vector.broadcast %cst_26 : f32 to vector<8x128xf32>
    %29 = arith.addf %27, %28 : vector<8x128xf32>
    %30 = vector.extract_strided_slice %21 {offsets = [0, 128], sizes = [8, 128], strides = [1, 1]} : vector<8x512xf32> to vector<8x128xf32>
    %cst_27 = arith.constant 5.000000e-01 : f32
    %31 = vector.broadcast %cst_27 : f32 to vector<8x128xf32>
    %32 = arith.mulf %31, %30 : vector<8x128xf32>
    %33 = math.tanh %32 : vector<8x128xf32>
    %cst_28 = arith.constant 5.000000e-01 : f32
    %34 = vector.broadcast %cst_28 : f32 to vector<8x128xf32>
    %35 = arith.mulf %34, %33 : vector<8x128xf32>
    %cst_29 = arith.constant 5.000000e-01 : f32
    %36 = vector.broadcast %cst_29 : f32 to vector<8x128xf32>
    %37 = arith.addf %35, %36 : vector<8x128xf32>
    %38 = vector.extract_strided_slice %21 {offsets = [0, 256], sizes = [8, 128], strides = [1, 1]} : vector<8x512xf32> to vector<8x128xf32>
    %39 = math.tanh %38 : vector<8x128xf32>
    %40 = vector.extract_strided_slice %21 {offsets = [0, 384], sizes = [8, 128], strides = [1, 1]} : vector<8x512xf32> to vector<8x128xf32>
    %cst_30 = arith.constant 5.000000e-01 : f32
    %41 = vector.broadcast %cst_30 : f32 to vector<8x128xf32>
    %42 = arith.mulf %41, %40 : vector<8x128xf32>
    %43 = math.tanh %42 : vector<8x128xf32>
    %cst_31 = arith.constant 5.000000e-01 : f32
    %44 = vector.broadcast %cst_31 : f32 to vector<8x128xf32>
    %45 = arith.mulf %44, %43 : vector<8x128xf32>
    %cst_32 = arith.constant 5.000000e-01 : f32
    %46 = vector.broadcast %cst_32 : f32 to vector<8x128xf32>
    %47 = arith.addf %45, %46 : vector<8x128xf32>
    %48 = arith.mulf %37, %14 : vector<8x128xf32>
    %49 = arith.mulf %29, %39 : vector<8x128xf32>
    %50 = arith.addf %48, %49 : vector<8x128xf32>
    %51 = math.tanh %50 : vector<8x128xf32>
    %52 = arith.mulf %47, %51 : vector<8x128xf32>
    %c0_33 = arith.constant 0 : index
    %c0_34 = arith.constant 0 : index
    %53 = vector.load %arg7[%c0_33, %c0_34] : memref<8x128xf32, #tpu.memory_space<vmem>>, vector<8x128xf32>
    tpu.vector_store %arg7[%c0_33, %c0_34], %52 {strides = array<i32>} : memref<8x128xf32, #tpu.memory_space<vmem>>, vector<8x128xf32>,
    %c0_35 = arith.constant 0 : index
    %c0_36 = arith.constant 0 : index
    %54 = vector.load %arg8[%c0_35, %c0_36] : memref<8x128xf32, #tpu.memory_space<vmem>>, vector<8x128xf32>
    tpu.vector_store %arg8[%c0_35, %c0_36], %50 {strides = array<i32>} : memref<8x128xf32, #tpu.memory_space<vmem>>, vector<8x128xf32>,
    %55 = arith.truncf %52 : vector<8x128xf32> to vector<8x128xbf16>
    %56 = arith.index_cast %c0_i32 : i32 to index
    %c0_37 = arith.constant 0 : index
    %c0_38 = arith.constant 0 : index
    %57 = vector.load %arg5[%56, %c0_37, %c0_38] : memref<8x8x128xbf16, #tpu.memory_space<vmem>>, vector<1x8x128xbf16>
    %58 = vector.shape_cast %57 : vector<1x8x128xbf16> to vector<8x128xbf16>
    %59 = vector.shape_cast %55 : vector<8x128xbf16> to vector<1x8x128xbf16>
    tpu.vector_store %arg5[%56, %c0_37, %c0_38], %59 {strides = array<i32>} : memref<8x8x128xbf16, #tpu.memory_space<vmem>>, vector<1x8x128xbf16>,
    %c1_i32 = arith.constant 1 : i32
    %c0_39 = arith.constant 0 : index
    %c0_40 = arith.constant 0 : index
    %60 = vector.load %arg7[%c0_39, %c0_40] : memref<8x128xf32, #tpu.memory_space<vmem>>, vector<8x128xf32>
    %c0_41 = arith.constant 0 : index
    %c0_42 = arith.constant 0 : index
    %61 = vector.load %arg8[%c0_41, %c0_42] : memref<8x128xf32, #tpu.memory_space<vmem>>, vector<8x128xf32>
    %62 = arith.index_cast %c1_i32 : i32 to index
    %c0_43 = arith.constant 0 : index
    %c0_44 = arith.constant 0 : index
    %63 = vector.load %arg6[%62, %c0_43, %c0_44] : memref<8x8x512xf32, #tpu.memory_space<vmem>>, vector<1x8x512xf32>
    %64 = vector.shape_cast %63 : vector<1x8x512xf32> to vector<8x512xf32>
    %65 = arith.truncf %60 : vector<8x128xf32> to vector<8x128xbf16>
    %c0_45 = arith.constant 0 : index
    %c0_46 = arith.constant 0 : index
    %66 = vector.load %arg3[%c0_45, %c0_46] : memref<128x512xbf16, #tpu.memory_space<vmem>>, vector<128x512xbf16>
    %cst_47 = arith.constant dense<0.000000e+00> : vector<8x512xf32>
    %67 = tpu.matmul %65, %66, %cst_47 {dimension_numbers = #tpu.dot_dimension_numbers<[1], [0], [0], [1], [0, 0, 1, 1], [], []>} : vector<8x128xbf16>, vector<128x512xbf16>, vector<8x512xf32> -> vector<8x512xf32>
    %68 = arith.addf %64, %67 : vector<8x512xf32>
    %69 = vector.extract_strided_slice %68 {offsets = [0, 0], sizes = [8, 128], strides = [1, 1]} : vector<8x512xf32> to vector<8x128xf32>
    %cst_48 = arith.constant 5.000000e-01 : f32
    %70 = vector.broadcast %cst_48 : f32 to vector<8x128xf32>
    %71 = arith.mulf %70, %69 : vector<8x128xf32>
    %72 = math.tanh %71 : vector<8x128xf32>
    %cst_49 = arith.constant 5.000000e-01 : f32
    %73 = vector.broadcast %cst_49 : f32 to vector<8x128xf32>
    %74 = arith.mulf %73, %72 : vector<8x128xf32>
    %cst_50 = arith.constant 5.000000e-01 : f32
    %75 = vector.broadcast %cst_50 : f32 to vector<8x128xf32>
    %76 = arith.addf %74, %75 : vector<8x128xf32>
    %77 = vector.extract_strided_slice %68 {offsets = [0, 128], sizes = [8, 128], strides = [1, 1]} : vector<8x512xf32> to vector<8x128xf32>
    %cst_51 = arith.constant 5.000000e-01 : f32
    %78 = vector.broadcast %cst_51 : f32 to vector<8x128xf32>
    %79 = arith.mulf %78, %77 : vector<8x128xf32>
    %80 = math.tanh %79 : vector<8x128xf32>
    %cst_52 = arith.constant 5.000000e-01 : f32
    %81 = vector.broadcast %cst_52 : f32 to vector<8x128xf32>
    %82 = arith.mulf %81, %80 : vector<8x128xf32>
    %cst_53 = arith.constant 5.000000e-01 : f32
    %83 = vector.broadcast %cst_53 : f32 to vector<8x128xf32>
    %84 = arith.addf %82, %83 : vector<8x128xf32>
    %85 = vector.extract_strided_slice %68 {offsets = [0, 256], sizes = [8, 128], strides = [1, 1]} : vector<8x512xf32> to vector<8x128xf32>
    %86 = math.tanh %85 : vector<8x128xf32>
    %87 = vector.extract_strided_slice %68 {offsets = [0, 384], sizes = [8, 128], strides = [1, 1]} : vector<8x512xf32> to vector<8x128xf32>
    %cst_54 = arith.constant 5.000000e-01 : f32
    %88 = vector.broadcast %cst_54 : f32 to vector<8x128xf32>
    %89 = arith.mulf %88, %87 : vector<8x128xf32>
    %90 = math.tanh %89 : vector<8x128xf32>
    %cst_55 = arith.constant 5.000000e-01 : f32
    %91 = vector.broadcast %cst_55 : f32 to vector<8x128xf32>
    %92 = arith.mulf %91, %90 : vector<8x128xf32>
    %cst_56 = arith.constant 5.000000e-01 : f32
    %93 = vector.broadcast %cst_56 : f32 to vector<8x128xf32>
    %94 = arith.addf %92, %93 : vector<8x128xf32>
    %95 = arith.mulf %84, %61 : vector<8x128xf32>
    %96 = arith.mulf %76, %86 : vector<8x128xf32>
    %97 = arith.addf %95, %96 : vector<8x128xf32>
    %98 = math.tanh %97 : vector<8x128xf32>
    %99 = arith.mulf %94, %98 : vector<8x128xf32>
    %c0_57 = arith.constant 0 : index
    %c0_58 = arith.constant 0 : index
    %100 = vector.load %arg7[%c0_57, %c0_58] : memref<8x128xf32, #tpu.memory_space<vmem>>, vector<8x128xf32>
    tpu.vector_store %arg7[%c0_57, %c0_58], %99 {strides = array<i32>} : memref<8x128xf32, #tpu.memory_space<vmem>>, vector<8x128xf32>,
    %c0_59 = arith.constant 0 : index
    %c0_60 = arith.constant 0 : index
    %101 = vector.load %arg8[%c0_59, %c0_60] : memref<8x128xf32, #tpu.memory_space<vmem>>, vector<8x128xf32>
    tpu.vector_store %arg8[%c0_59, %c0_60], %97 {strides = array<i32>} : memref<8x128xf32, #tpu.memory_space<vmem>>, vector<8x128xf32>,
    %102 = arith.truncf %99 : vector<8x128xf32> to vector<8x128xbf16>
    %103 = arith.index_cast %c1_i32 : i32 to index
    %c0_61 = arith.constant 0 : index
    %c0_62 = arith.constant 0 : index
    %104 = vector.load %arg5[%103, %c0_61, %c0_62] : memref<8x8x128xbf16, #tpu.memory_space<vmem>>, vector<1x8x128xbf16>
    %105 = vector.shape_cast %104 : vector<1x8x128xbf16> to vector<8x128xbf16>
    %106 = vector.shape_cast %102 : vector<8x128xbf16> to vector<1x8x128xbf16>
    tpu.vector_store %arg5[%103, %c0_61, %c0_62], %106 {strides = array<i32>} : memref<8x8x128xbf16, #tpu.memory_space<vmem>>, vector<1x8x128xbf16>,
    %c2_i32 = arith.constant 2 : i32
    %c0_63 = arith.constant 0 : index
    %c0_64 = arith.constant 0 : index
    %107 = vector.load %arg7[%c0_63, %c0_64] : memref<8x128xf32, #tpu.memory_space<vmem>>, vector<8x128xf32>
    %c0_65 = arith.constant 0 : index
    %c0_66 = arith.constant 0 : index
    %108 = vector.load %arg8[%c0_65, %c0_66] : memref<8x128xf32, #tpu.memory_space<vmem>>, vector<8x128xf32>
    %109 = arith.index_cast %c2_i32 : i32 to index
    %c0_67 = arith.constant 0 : index
    %c0_68 = arith.constant 0 : index
    %110 = vector.load %arg6[%109, %c0_67, %c0_68] : memref<8x8x512xf32, #tpu.memory_space<vmem>>, vector<1x8x512xf32>
    %111 = vector.shape_cast %110 : vector<1x8x512xf32> to vector<8x512xf32>
    %112 = arith.truncf %107 : vector<8x128xf32> to vector<8x128xbf16>
    %c0_69 = arith.constant 0 : index
    %c0_70 = arith.constant 0 : index
    %113 = vector.load %arg3[%c0_69, %c0_70] : memref<128x512xbf16, #tpu.memory_space<vmem>>, vector<128x512xbf16>
    %cst_71 = arith.constant dense<0.000000e+00> : vector<8x512xf32>
    %114 = tpu.matmul %112, %113, %cst_71 {dimension_numbers = #tpu.dot_dimension_numbers<[1], [0], [0], [1], [0, 0, 1, 1], [], []>} : vector<8x128xbf16>, vector<128x512xbf16>, vector<8x512xf32> -> vector<8x512xf32>
    %115 = arith.addf %111, %114 : vector<8x512xf32>
    %116 = vector.extract_strided_slice %115 {offsets = [0, 0], sizes = [8, 128], strides = [1, 1]} : vector<8x512xf32> to vector<8x128xf32>
    %cst_72 = arith.constant 5.000000e-01 : f32
    %117 = vector.broadcast %cst_72 : f32 to vector<8x128xf32>
    %118 = arith.mulf %117, %116 : vector<8x128xf32>
    %119 = math.tanh %118 : vector<8x128xf32>
    %cst_73 = arith.constant 5.000000e-01 : f32
    %120 = vector.broadcast %cst_73 : f32 to vector<8x128xf32>
    %121 = arith.mulf %120, %119 : vector<8x128xf32>
    %cst_74 = arith.constant 5.000000e-01 : f32
    %122 = vector.broadcast %cst_74 : f32 to vector<8x128xf32>
    %123 = arith.addf %121, %122 : vector<8x128xf32>
    %124 = vector.extract_strided_slice %115 {offsets = [0, 128], sizes = [8, 128], strides = [1, 1]} : vector<8x512xf32> to vector<8x128xf32>
    %cst_75 = arith.constant 5.000000e-01 : f32
    %125 = vector.broadcast %cst_75 : f32 to vector<8x128xf32>
    %126 = arith.mulf %125, %124 : vector<8x128xf32>
    %127 = math.tanh %126 : vector<8x128xf32>
    %cst_76 = arith.constant 5.000000e-01 : f32
    %128 = vector.broadcast %cst_76 : f32 to vector<8x128xf32>
    %129 = arith.mulf %128, %127 : vector<8x128xf32>
    %cst_77 = arith.constant 5.000000e-01 : f32
    %130 = vector.broadcast %cst_77 : f32 to vector<8x128xf32>
    %131 = arith.addf %129, %130 : vector<8x128xf32>
    %132 = vector.extract_strided_slice %115 {offsets = [0, 256], sizes = [8, 128], strides = [1, 1]} : vector<8x512xf32> to vector<8x128xf32>
    %133 = math.tanh %132 : vector<8x128xf32>
    %134 = vector.extract_strided_slice %115 {offsets = [0, 384], sizes = [8, 128], strides = [1, 1]} : vector<8x512xf32> to vector<8x128xf32>
    %cst_78 = arith.constant 5.000000e-01 : f32
    %135 = vector.broadcast %cst_78 : f32 to vector<8x128xf32>
    %136 = arith.mulf %135, %134 : vector<8x128xf32>
    %137 = math.tanh %136 : vector<8x128xf32>
    %cst_79 = arith.constant 5.000000e-01 : f32
    %138 = vector.broadcast %cst_79 : f32 to vector<8x128xf32>
    %139 = arith.mulf %138, %137 : vector<8x128xf32>
    %cst_80 = arith.constant 5.000000e-01 : f32
    %140 = vector.broadcast %cst_80 : f32 to vector<8x128xf32>
    %141 = arith.addf %139, %140 : vector<8x128xf32>
    %142 = arith.mulf %131, %108 : vector<8x128xf32>
    %143 = arith.mulf %123, %133 : vector<8x128xf32>
    %144 = arith.addf %142, %143 : vector<8x128xf32>
    %145 = math.tanh %144 : vector<8x128xf32>
    %146 = arith.mulf %141, %145 : vector<8x128xf32>
    %c0_81 = arith.constant 0 : index
    %c0_82 = arith.constant 0 : index
    %147 = vector.load %arg7[%c0_81, %c0_82] : memref<8x128xf32, #tpu.memory_space<vmem>>, vector<8x128xf32>
    tpu.vector_store %arg7[%c0_81, %c0_82], %146 {strides = array<i32>} : memref<8x128xf32, #tpu.memory_space<vmem>>, vector<8x128xf32>,
    %c0_83 = arith.constant 0 : index
    %c0_84 = arith.constant 0 : index
    %148 = vector.load %arg8[%c0_83, %c0_84] : memref<8x128xf32, #tpu.memory_space<vmem>>, vector<8x128xf32>
    tpu.vector_store %arg8[%c0_83, %c0_84], %144 {strides = array<i32>} : memref<8x128xf32, #tpu.memory_space<vmem>>, vector<8x128xf32>,
    %149 = arith.truncf %146 : vector<8x128xf32> to vector<8x128xbf16>
    %150 = arith.index_cast %c2_i32 : i32 to index
    %c0_85 = arith.constant 0 : index
    %c0_86 = arith.constant 0 : index
    %151 = vector.load %arg5[%150, %c0_85, %c0_86] : memref<8x8x128xbf16, #tpu.memory_space<vmem>>, vector<1x8x128xbf16>
    %152 = vector.shape_cast %151 : vector<1x8x128xbf16> to vector<8x128xbf16>
    %153 = vector.shape_cast %149 : vector<8x128xbf16> to vector<1x8x128xbf16>
    tpu.vector_store %arg5[%150, %c0_85, %c0_86], %153 {strides = array<i32>} : memref<8x8x128xbf16, #tpu.memory_space<vmem>>, vector<1x8x128xbf16>,
    %c3_i32 = arith.constant 3 : i32
    %c0_87 = arith.constant 0 : index
    %c0_88 = arith.constant 0 : index
    %154 = vector.load %arg7[%c0_87, %c0_88] : memref<8x128xf32, #tpu.memory_space<vmem>>, vector<8x128xf32>
    %c0_89 = arith.constant 0 : index
    %c0_90 = arith.constant 0 : index
    %155 = vector.load %arg8[%c0_89, %c0_90] : memref<8x128xf32, #tpu.memory_space<vmem>>, vector<8x128xf32>
    %156 = arith.index_cast %c3_i32 : i32 to index
    %c0_91 = arith.constant 0 : index
    %c0_92 = arith.constant 0 : index
    %157 = vector.load %arg6[%156, %c0_91, %c0_92] : memref<8x8x512xf32, #tpu.memory_space<vmem>>, vector<1x8x512xf32>
    %158 = vector.shape_cast %157 : vector<1x8x512xf32> to vector<8x512xf32>
    %159 = arith.truncf %154 : vector<8x128xf32> to vector<8x128xbf16>
    %c0_93 = arith.constant 0 : index
    %c0_94 = arith.constant 0 : index
    %160 = vector.load %arg3[%c0_93, %c0_94] : memref<128x512xbf16, #tpu.memory_space<vmem>>, vector<128x512xbf16>
    %cst_95 = arith.constant dense<0.000000e+00> : vector<8x512xf32>
    %161 = tpu.matmul %159, %160, %cst_95 {dimension_numbers = #tpu.dot_dimension_numbers<[1], [0], [0], [1], [0, 0, 1, 1], [], []>} : vector<8x128xbf16>, vector<128x512xbf16>, vector<8x512xf32> -> vector<8x512xf32>
    %162 = arith.addf %158, %161 : vector<8x512xf32>
    %163 = vector.extract_strided_slice %162 {offsets = [0, 0], sizes = [8, 128], strides = [1, 1]} : vector<8x512xf32> to vector<8x128xf32>
    %cst_96 = arith.constant 5.000000e-01 : f32
    %164 = vector.broadcast %cst_96 : f32 to vector<8x128xf32>
    %165 = arith.mulf %164, %163 : vector<8x128xf32>
    %166 = math.tanh %165 : vector<8x128xf32>
    %cst_97 = arith.constant 5.000000e-01 : f32
    %167 = vector.broadcast %cst_97 : f32 to vector<8x128xf32>
    %168 = arith.mulf %167, %166 : vector<8x128xf32>
    %cst_98 = arith.constant 5.000000e-01 : f32
    %169 = vector.broadcast %cst_98 : f32 to vector<8x128xf32>
    %170 = arith.addf %168, %169 : vector<8x128xf32>
    %171 = vector.extract_strided_slice %162 {offsets = [0, 128], sizes = [8, 128], strides = [1, 1]} : vector<8x512xf32> to vector<8x128xf32>
    %cst_99 = arith.constant 5.000000e-01 : f32
    %172 = vector.broadcast %cst_99 : f32 to vector<8x128xf32>
    %173 = arith.mulf %172, %171 : vector<8x128xf32>
    %174 = math.tanh %173 : vector<8x128xf32>
    %cst_100 = arith.constant 5.000000e-01 : f32
    %175 = vector.broadcast %cst_100 : f32 to vector<8x128xf32>
    %176 = arith.mulf %175, %174 : vector<8x128xf32>
    %cst_101 = arith.constant 5.000000e-01 : f32
    %177 = vector.broadcast %cst_101 : f32 to vector<8x128xf32>
    %178 = arith.addf %176, %177 : vector<8x128xf32>
    %179 = vector.extract_strided_slice %162 {offsets = [0, 256], sizes = [8, 128], strides = [1, 1]} : vector<8x512xf32> to vector<8x128xf32>
    %180 = math.tanh %179 : vector<8x128xf32>
    %181 = vector.extract_strided_slice %162 {offsets = [0, 384], sizes = [8, 128], strides = [1, 1]} : vector<8x512xf32> to vector<8x128xf32>
    %cst_102 = arith.constant 5.000000e-01 : f32
    %182 = vector.broadcast %cst_102 : f32 to vector<8x128xf32>
    %183 = arith.mulf %182, %181 : vector<8x128xf32>
    %184 = math.tanh %183 : vector<8x128xf32>
    %cst_103 = arith.constant 5.000000e-01 : f32
    %185 = vector.broadcast %cst_103 : f32 to vector<8x128xf32>
    %186 = arith.mulf %185, %184 : vector<8x128xf32>
    %cst_104 = arith.constant 5.000000e-01 : f32
    %187 = vector.broadcast %cst_104 : f32 to vector<8x128xf32>
    %188 = arith.addf %186, %187 : vector<8x128xf32>
    %189 = arith.mulf %178, %155 : vector<8x128xf32>
    %190 = arith.mulf %170, %180 : vector<8x128xf32>
    %191 = arith.addf %189, %190 : vector<8x128xf32>
    %192 = math.tanh %191 : vector<8x128xf32>
    %193 = arith.mulf %188, %192 : vector<8x128xf32>
    %c0_105 = arith.constant 0 : index
    %c0_106 = arith.constant 0 : index
    %194 = vector.load %arg7[%c0_105, %c0_106] : memref<8x128xf32, #tpu.memory_space<vmem>>, vector<8x128xf32>
    tpu.vector_store %arg7[%c0_105, %c0_106], %193 {strides = array<i32>} : memref<8x128xf32, #tpu.memory_space<vmem>>, vector<8x128xf32>,
    %c0_107 = arith.constant 0 : index
    %c0_108 = arith.constant 0 : index
    %195 = vector.load %arg8[%c0_107, %c0_108] : memref<8x128xf32, #tpu.memory_space<vmem>>, vector<8x128xf32>
    tpu.vector_store %arg8[%c0_107, %c0_108], %191 {strides = array<i32>} : memref<8x128xf32, #tpu.memory_space<vmem>>, vector<8x128xf32>,
    %196 = arith.truncf %193 : vector<8x128xf32> to vector<8x128xbf16>
    %197 = arith.index_cast %c3_i32 : i32 to index
    %c0_109 = arith.constant 0 : index
    %c0_110 = arith.constant 0 : index
    %198 = vector.load %arg5[%197, %c0_109, %c0_110] : memref<8x8x128xbf16, #tpu.memory_space<vmem>>, vector<1x8x128xbf16>
    %199 = vector.shape_cast %198 : vector<1x8x128xbf16> to vector<8x128xbf16>
    %200 = vector.shape_cast %196 : vector<8x128xbf16> to vector<1x8x128xbf16>
    tpu.vector_store %arg5[%197, %c0_109, %c0_110], %200 {strides = array<i32>} : memref<8x8x128xbf16, #tpu.memory_space<vmem>>, vector<1x8x128xbf16>,
    %c4_i32 = arith.constant 4 : i32
    %c0_111 = arith.constant 0 : index
    %c0_112 = arith.constant 0 : index
    %201 = vector.load %arg7[%c0_111, %c0_112] : memref<8x128xf32, #tpu.memory_space<vmem>>, vector<8x128xf32>
    %c0_113 = arith.constant 0 : index
    %c0_114 = arith.constant 0 : index
    %202 = vector.load %arg8[%c0_113, %c0_114] : memref<8x128xf32, #tpu.memory_space<vmem>>, vector<8x128xf32>
    %203 = arith.index_cast %c4_i32 : i32 to index
    %c0_115 = arith.constant 0 : index
    %c0_116 = arith.constant 0 : index
    %204 = vector.load %arg6[%203, %c0_115, %c0_116] : memref<8x8x512xf32, #tpu.memory_space<vmem>>, vector<1x8x512xf32>
    %205 = vector.shape_cast %204 : vector<1x8x512xf32> to vector<8x512xf32>
    %206 = arith.truncf %201 : vector<8x128xf32> to vector<8x128xbf16>
    %c0_117 = arith.constant 0 : index
    %c0_118 = arith.constant 0 : index
    %207 = vector.load %arg3[%c0_117, %c0_118] : memref<128x512xbf16, #tpu.memory_space<vmem>>, vector<128x512xbf16>
    %cst_119 = arith.constant dense<0.000000e+00> : vector<8x512xf32>
    %208 = tpu.matmul %206, %207, %cst_119 {dimension_numbers = #tpu.dot_dimension_numbers<[1], [0], [0], [1], [0, 0, 1, 1], [], []>} : vector<8x128xbf16>, vector<128x512xbf16>, vector<8x512xf32> -> vector<8x512xf32>
    %209 = arith.addf %205, %208 : vector<8x512xf32>
    %210 = vector.extract_strided_slice %209 {offsets = [0, 0], sizes = [8, 128], strides = [1, 1]} : vector<8x512xf32> to vector<8x128xf32>
    %cst_120 = arith.constant 5.000000e-01 : f32
    %211 = vector.broadcast %cst_120 : f32 to vector<8x128xf32>
    %212 = arith.mulf %211, %210 : vector<8x128xf32>
    %213 = math.tanh %212 : vector<8x128xf32>
    %cst_121 = arith.constant 5.000000e-01 : f32
    %214 = vector.broadcast %cst_121 : f32 to vector<8x128xf32>
    %215 = arith.mulf %214, %213 : vector<8x128xf32>
    %cst_122 = arith.constant 5.000000e-01 : f32
    %216 = vector.broadcast %cst_122 : f32 to vector<8x128xf32>
    %217 = arith.addf %215, %216 : vector<8x128xf32>
    %218 = vector.extract_strided_slice %209 {offsets = [0, 128], sizes = [8, 128], strides = [1, 1]} : vector<8x512xf32> to vector<8x128xf32>
    %cst_123 = arith.constant 5.000000e-01 : f32
    %219 = vector.broadcast %cst_123 : f32 to vector<8x128xf32>
    %220 = arith.mulf %219, %218 : vector<8x128xf32>
    %221 = math.tanh %220 : vector<8x128xf32>
    %cst_124 = arith.constant 5.000000e-01 : f32
    %222 = vector.broadcast %cst_124 : f32 to vector<8x128xf32>
    %223 = arith.mulf %222, %221 : vector<8x128xf32>
    %cst_125 = arith.constant 5.000000e-01 : f32
    %224 = vector.broadcast %cst_125 : f32 to vector<8x128xf32>
    %225 = arith.addf %223, %224 : vector<8x128xf32>
    %226 = vector.extract_strided_slice %209 {offsets = [0, 256], sizes = [8, 128], strides = [1, 1]} : vector<8x512xf32> to vector<8x128xf32>
    %227 = math.tanh %226 : vector<8x128xf32>
    %228 = vector.extract_strided_slice %209 {offsets = [0, 384], sizes = [8, 128], strides = [1, 1]} : vector<8x512xf32> to vector<8x128xf32>
    %cst_126 = arith.constant 5.000000e-01 : f32
    %229 = vector.broadcast %cst_126 : f32 to vector<8x128xf32>
    %230 = arith.mulf %229, %228 : vector<8x128xf32>
    %231 = math.tanh %230 : vector<8x128xf32>
    %cst_127 = arith.constant 5.000000e-01 : f32
    %232 = vector.broadcast %cst_127 : f32 to vector<8x128xf32>
    %233 = arith.mulf %232, %231 : vector<8x128xf32>
    %cst_128 = arith.constant 5.000000e-01 : f32
    %234 = vector.broadcast %cst_128 : f32 to vector<8x128xf32>
    %235 = arith.addf %233, %234 : vector<8x128xf32>
    %236 = arith.mulf %225, %202 : vector<8x128xf32>
    %237 = arith.mulf %217, %227 : vector<8x128xf32>
    %238 = arith.addf %236, %237 : vector<8x128xf32>
    %239 = math.tanh %238 : vector<8x128xf32>
    %240 = arith.mulf %235, %239 : vector<8x128xf32>
    %c0_129 = arith.constant 0 : index
    %c0_130 = arith.constant 0 : index
    %241 = vector.load %arg7[%c0_129, %c0_130] : memref<8x128xf32, #tpu.memory_space<vmem>>, vector<8x128xf32>
    tpu.vector_store %arg7[%c0_129, %c0_130], %240 {strides = array<i32>} : memref<8x128xf32, #tpu.memory_space<vmem>>, vector<8x128xf32>,
    %c0_131 = arith.constant 0 : index
    %c0_132 = arith.constant 0 : index
    %242 = vector.load %arg8[%c0_131, %c0_132] : memref<8x128xf32, #tpu.memory_space<vmem>>, vector<8x128xf32>
    tpu.vector_store %arg8[%c0_131, %c0_132], %238 {strides = array<i32>} : memref<8x128xf32, #tpu.memory_space<vmem>>, vector<8x128xf32>,
    %243 = arith.truncf %240 : vector<8x128xf32> to vector<8x128xbf16>
    %244 = arith.index_cast %c4_i32 : i32 to index
    %c0_133 = arith.constant 0 : index
    %c0_134 = arith.constant 0 : index
    %245 = vector.load %arg5[%244, %c0_133, %c0_134] : memref<8x8x128xbf16, #tpu.memory_space<vmem>>, vector<1x8x128xbf16>
    %246 = vector.shape_cast %245 : vector<1x8x128xbf16> to vector<8x128xbf16>
    %247 = vector.shape_cast %243 : vector<8x128xbf16> to vector<1x8x128xbf16>
    tpu.vector_store %arg5[%244, %c0_133, %c0_134], %247 {strides = array<i32>} : memref<8x8x128xbf16, #tpu.memory_space<vmem>>, vector<1x8x128xbf16>,
    %c5_i32 = arith.constant 5 : i32
    %c0_135 = arith.constant 0 : index
    %c0_136 = arith.constant 0 : index
    %248 = vector.load %arg7[%c0_135, %c0_136] : memref<8x128xf32, #tpu.memory_space<vmem>>, vector<8x128xf32>
    %c0_137 = arith.constant 0 : index
    %c0_138 = arith.constant 0 : index
    %249 = vector.load %arg8[%c0_137, %c0_138] : memref<8x128xf32, #tpu.memory_space<vmem>>, vector<8x128xf32>
    %250 = arith.index_cast %c5_i32 : i32 to index
    %c0_139 = arith.constant 0 : index
    %c0_140 = arith.constant 0 : index
    %251 = vector.load %arg6[%250, %c0_139, %c0_140] : memref<8x8x512xf32, #tpu.memory_space<vmem>>, vector<1x8x512xf32>
    %252 = vector.shape_cast %251 : vector<1x8x512xf32> to vector<8x512xf32>
    %253 = arith.truncf %248 : vector<8x128xf32> to vector<8x128xbf16>
    %c0_141 = arith.constant 0 : index
    %c0_142 = arith.constant 0 : index
    %254 = vector.load %arg3[%c0_141, %c0_142] : memref<128x512xbf16, #tpu.memory_space<vmem>>, vector<128x512xbf16>
    %cst_143 = arith.constant dense<0.000000e+00> : vector<8x512xf32>
    %255 = tpu.matmul %253, %254, %cst_143 {dimension_numbers = #tpu.dot_dimension_numbers<[1], [0], [0], [1], [0, 0, 1, 1], [], []>} : vector<8x128xbf16>, vector<128x512xbf16>, vector<8x512xf32> -> vector<8x512xf32>
    %256 = arith.addf %252, %255 : vector<8x512xf32>
    %257 = vector.extract_strided_slice %256 {offsets = [0, 0], sizes = [8, 128], strides = [1, 1]} : vector<8x512xf32> to vector<8x128xf32>
    %cst_144 = arith.constant 5.000000e-01 : f32
    %258 = vector.broadcast %cst_144 : f32 to vector<8x128xf32>
    %259 = arith.mulf %258, %257 : vector<8x128xf32>
    %260 = math.tanh %259 : vector<8x128xf32>
    %cst_145 = arith.constant 5.000000e-01 : f32
    %261 = vector.broadcast %cst_145 : f32 to vector<8x128xf32>
    %262 = arith.mulf %261, %260 : vector<8x128xf32>
    %cst_146 = arith.constant 5.000000e-01 : f32
    %263 = vector.broadcast %cst_146 : f32 to vector<8x128xf32>
    %264 = arith.addf %262, %263 : vector<8x128xf32>
    %265 = vector.extract_strided_slice %256 {offsets = [0, 128], sizes = [8, 128], strides = [1, 1]} : vector<8x512xf32> to vector<8x128xf32>
    %cst_147 = arith.constant 5.000000e-01 : f32
    %266 = vector.broadcast %cst_147 : f32 to vector<8x128xf32>
    %267 = arith.mulf %266, %265 : vector<8x128xf32>
    %268 = math.tanh %267 : vector<8x128xf32>
    %cst_148 = arith.constant 5.000000e-01 : f32
    %269 = vector.broadcast %cst_148 : f32 to vector<8x128xf32>
    %270 = arith.mulf %269, %268 : vector<8x128xf32>
    %cst_149 = arith.constant 5.000000e-01 : f32
    %271 = vector.broadcast %cst_149 : f32 to vector<8x128xf32>
    %272 = arith.addf %270, %271 : vector<8x128xf32>
    %273 = vector.extract_strided_slice %256 {offsets = [0, 256], sizes = [8, 128], strides = [1, 1]} : vector<8x512xf32> to vector<8x128xf32>
    %274 = math.tanh %273 : vector<8x128xf32>
    %275 = vector.extract_strided_slice %256 {offsets = [0, 384], sizes = [8, 128], strides = [1, 1]} : vector<8x512xf32> to vector<8x128xf32>
    %cst_150 = arith.constant 5.000000e-01 : f32
    %276 = vector.broadcast %cst_150 : f32 to vector<8x128xf32>
    %277 = arith.mulf %276, %275 : vector<8x128xf32>
    %278 = math.tanh %277 : vector<8x128xf32>
    %cst_151 = arith.constant 5.000000e-01 : f32
    %279 = vector.broadcast %cst_151 : f32 to vector<8x128xf32>
    %280 = arith.mulf %279, %278 : vector<8x128xf32>
    %cst_152 = arith.constant 5.000000e-01 : f32
    %281 = vector.broadcast %cst_152 : f32 to vector<8x128xf32>
    %282 = arith.addf %280, %281 : vector<8x128xf32>
    %283 = arith.mulf %272, %249 : vector<8x128xf32>
    %284 = arith.mulf %264, %274 : vector<8x128xf32>
    %285 = arith.addf %283, %284 : vector<8x128xf32>
    %286 = math.tanh %285 : vector<8x128xf32>
    %287 = arith.mulf %282, %286 : vector<8x128xf32>
    %c0_153 = arith.constant 0 : index
    %c0_154 = arith.constant 0 : index
    %288 = vector.load %arg7[%c0_153, %c0_154] : memref<8x128xf32, #tpu.memory_space<vmem>>, vector<8x128xf32>
    tpu.vector_store %arg7[%c0_153, %c0_154], %287 {strides = array<i32>} : memref<8x128xf32, #tpu.memory_space<vmem>>, vector<8x128xf32>,
    %c0_155 = arith.constant 0 : index
    %c0_156 = arith.constant 0 : index
    %289 = vector.load %arg8[%c0_155, %c0_156] : memref<8x128xf32, #tpu.memory_space<vmem>>, vector<8x128xf32>
    tpu.vector_store %arg8[%c0_155, %c0_156], %285 {strides = array<i32>} : memref<8x128xf32, #tpu.memory_space<vmem>>, vector<8x128xf32>,
    %290 = arith.truncf %287 : vector<8x128xf32> to vector<8x128xbf16>
    %291 = arith.index_cast %c5_i32 : i32 to index
    %c0_157 = arith.constant 0 : index
    %c0_158 = arith.constant 0 : index
    %292 = vector.load %arg5[%291, %c0_157, %c0_158] : memref<8x8x128xbf16, #tpu.memory_space<vmem>>, vector<1x8x128xbf16>
    %293 = vector.shape_cast %292 : vector<1x8x128xbf16> to vector<8x128xbf16>
    %294 = vector.shape_cast %290 : vector<8x128xbf16> to vector<1x8x128xbf16>
    tpu.vector_store %arg5[%291, %c0_157, %c0_158], %294 {strides = array<i32>} : memref<8x8x128xbf16, #tpu.memory_space<vmem>>, vector<1x8x128xbf16>,
    %c6_i32 = arith.constant 6 : i32
    %c0_159 = arith.constant 0 : index
    %c0_160 = arith.constant 0 : index
    %295 = vector.load %arg7[%c0_159, %c0_160] : memref<8x128xf32, #tpu.memory_space<vmem>>, vector<8x128xf32>
    %c0_161 = arith.constant 0 : index
    %c0_162 = arith.constant 0 : index
    %296 = vector.load %arg8[%c0_161, %c0_162] : memref<8x128xf32, #tpu.memory_space<vmem>>, vector<8x128xf32>
    %297 = arith.index_cast %c6_i32 : i32 to index
    %c0_163 = arith.constant 0 : index
    %c0_164 = arith.constant 0 : index
    %298 = vector.load %arg6[%297, %c0_163, %c0_164] : memref<8x8x512xf32, #tpu.memory_space<vmem>>, vector<1x8x512xf32>
    %299 = vector.shape_cast %298 : vector<1x8x512xf32> to vector<8x512xf32>
    %300 = arith.truncf %295 : vector<8x128xf32> to vector<8x128xbf16>
    %c0_165 = arith.constant 0 : index
    %c0_166 = arith.constant 0 : index
    %301 = vector.load %arg3[%c0_165, %c0_166] : memref<128x512xbf16, #tpu.memory_space<vmem>>, vector<128x512xbf16>
    %cst_167 = arith.constant dense<0.000000e+00> : vector<8x512xf32>
    %302 = tpu.matmul %300, %301, %cst_167 {dimension_numbers = #tpu.dot_dimension_numbers<[1], [0], [0], [1], [0, 0, 1, 1], [], []>} : vector<8x128xbf16>, vector<128x512xbf16>, vector<8x512xf32> -> vector<8x512xf32>
    %303 = arith.addf %299, %302 : vector<8x512xf32>
    %304 = vector.extract_strided_slice %303 {offsets = [0, 0], sizes = [8, 128], strides = [1, 1]} : vector<8x512xf32> to vector<8x128xf32>
    %cst_168 = arith.constant 5.000000e-01 : f32
    %305 = vector.broadcast %cst_168 : f32 to vector<8x128xf32>
    %306 = arith.mulf %305, %304 : vector<8x128xf32>
    %307 = math.tanh %306 : vector<8x128xf32>
    %cst_169 = arith.constant 5.000000e-01 : f32
    %308 = vector.broadcast %cst_169 : f32 to vector<8x128xf32>
    %309 = arith.mulf %308, %307 : vector<8x128xf32>
    %cst_170 = arith.constant 5.000000e-01 : f32
    %310 = vector.broadcast %cst_170 : f32 to vector<8x128xf32>
    %311 = arith.addf %309, %310 : vector<8x128xf32>
    %312 = vector.extract_strided_slice %303 {offsets = [0, 128], sizes = [8, 128], strides = [1, 1]} : vector<8x512xf32> to vector<8x128xf32>
    %cst_171 = arith.constant 5.000000e-01 : f32
    %313 = vector.broadcast %cst_171 : f32 to vector<8x128xf32>
    %314 = arith.mulf %313, %312 : vector<8x128xf32>
    %315 = math.tanh %314 : vector<8x128xf32>
    %cst_172 = arith.constant 5.000000e-01 : f32
    %316 = vector.broadcast %cst_172 : f32 to vector<8x128xf32>
    %317 = arith.mulf %316, %315 : vector<8x128xf32>
    %cst_173 = arith.constant 5.000000e-01 : f32
    %318 = vector.broadcast %cst_173 : f32 to vector<8x128xf32>
    %319 = arith.addf %317, %318 : vector<8x128xf32>
    %320 = vector.extract_strided_slice %303 {offsets = [0, 256], sizes = [8, 128], strides = [1, 1]} : vector<8x512xf32> to vector<8x128xf32>
    %321 = math.tanh %320 : vector<8x128xf32>
    %322 = vector.extract_strided_slice %303 {offsets = [0, 384], sizes = [8, 128], strides = [1, 1]} : vector<8x512xf32> to vector<8x128xf32>
    %cst_174 = arith.constant 5.000000e-01 : f32
    %323 = vector.broadcast %cst_174 : f32 to vector<8x128xf32>
    %324 = arith.mulf %323, %322 : vector<8x128xf32>
    %325 = math.tanh %324 : vector<8x128xf32>
    %cst_175 = arith.constant 5.000000e-01 : f32
    %326 = vector.broadcast %cst_175 : f32 to vector<8x128xf32>
    %327 = arith.mulf %326, %325 : vector<8x128xf32>
    %cst_176 = arith.constant 5.000000e-01 : f32
    %328 = vector.broadcast %cst_176 : f32 to vector<8x128xf32>
    %329 = arith.addf %327, %328 : vector<8x128xf32>
    %330 = arith.mulf %319, %296 : vector<8x128xf32>
    %331 = arith.mulf %311, %321 : vector<8x128xf32>
    %332 = arith.addf %330, %331 : vector<8x128xf32>
    %333 = math.tanh %332 : vector<8x128xf32>
    %334 = arith.mulf %329, %333 : vector<8x128xf32>
    %c0_177 = arith.constant 0 : index
    %c0_178 = arith.constant 0 : index
    %335 = vector.load %arg7[%c0_177, %c0_178] : memref<8x128xf32, #tpu.memory_space<vmem>>, vector<8x128xf32>
    tpu.vector_store %arg7[%c0_177, %c0_178], %334 {strides = array<i32>} : memref<8x128xf32, #tpu.memory_space<vmem>>, vector<8x128xf32>,
    %c0_179 = arith.constant 0 : index
    %c0_180 = arith.constant 0 : index
    %336 = vector.load %arg8[%c0_179, %c0_180] : memref<8x128xf32, #tpu.memory_space<vmem>>, vector<8x128xf32>
    tpu.vector_store %arg8[%c0_179, %c0_180], %332 {strides = array<i32>} : memref<8x128xf32, #tpu.memory_space<vmem>>, vector<8x128xf32>,
    %337 = arith.truncf %334 : vector<8x128xf32> to vector<8x128xbf16>
    %338 = arith.index_cast %c6_i32 : i32 to index
    %c0_181 = arith.constant 0 : index
    %c0_182 = arith.constant 0 : index
    %339 = vector.load %arg5[%338, %c0_181, %c0_182] : memref<8x8x128xbf16, #tpu.memory_space<vmem>>, vector<1x8x128xbf16>
    %340 = vector.shape_cast %339 : vector<1x8x128xbf16> to vector<8x128xbf16>
    %341 = vector.shape_cast %337 : vector<8x128xbf16> to vector<1x8x128xbf16>
    tpu.vector_store %arg5[%338, %c0_181, %c0_182], %341 {strides = array<i32>} : memref<8x8x128xbf16, #tpu.memory_space<vmem>>, vector<1x8x128xbf16>,
    %c7_i32 = arith.constant 7 : i32
    %c0_183 = arith.constant 0 : index
    %c0_184 = arith.constant 0 : index
    %342 = vector.load %arg7[%c0_183, %c0_184] : memref<8x128xf32, #tpu.memory_space<vmem>>, vector<8x128xf32>
    %c0_185 = arith.constant 0 : index
    %c0_186 = arith.constant 0 : index
    %343 = vector.load %arg8[%c0_185, %c0_186] : memref<8x128xf32, #tpu.memory_space<vmem>>, vector<8x128xf32>
    %344 = arith.index_cast %c7_i32 : i32 to index
    %c0_187 = arith.constant 0 : index
    %c0_188 = arith.constant 0 : index
    %345 = vector.load %arg6[%344, %c0_187, %c0_188] : memref<8x8x512xf32, #tpu.memory_space<vmem>>, vector<1x8x512xf32>
    %346 = vector.shape_cast %345 : vector<1x8x512xf32> to vector<8x512xf32>
    %347 = arith.truncf %342 : vector<8x128xf32> to vector<8x128xbf16>
    %c0_189 = arith.constant 0 : index
    %c0_190 = arith.constant 0 : index
    %348 = vector.load %arg3[%c0_189, %c0_190] : memref<128x512xbf16, #tpu.memory_space<vmem>>, vector<128x512xbf16>
    %cst_191 = arith.constant dense<0.000000e+00> : vector<8x512xf32>
    %349 = tpu.matmul %347, %348, %cst_191 {dimension_numbers = #tpu.dot_dimension_numbers<[1], [0], [0], [1], [0, 0, 1, 1], [], []>} : vector<8x128xbf16>, vector<128x512xbf16>, vector<8x512xf32> -> vector<8x512xf32>
    %350 = arith.addf %346, %349 : vector<8x512xf32>
    %351 = vector.extract_strided_slice %350 {offsets = [0, 0], sizes = [8, 128], strides = [1, 1]} : vector<8x512xf32> to vector<8x128xf32>
    %cst_192 = arith.constant 5.000000e-01 : f32
    %352 = vector.broadcast %cst_192 : f32 to vector<8x128xf32>
    %353 = arith.mulf %352, %351 : vector<8x128xf32>
    %354 = math.tanh %353 : vector<8x128xf32>
    %cst_193 = arith.constant 5.000000e-01 : f32
    %355 = vector.broadcast %cst_193 : f32 to vector<8x128xf32>
    %356 = arith.mulf %355, %354 : vector<8x128xf32>
    %cst_194 = arith.constant 5.000000e-01 : f32
    %357 = vector.broadcast %cst_194 : f32 to vector<8x128xf32>
    %358 = arith.addf %356, %357 : vector<8x128xf32>
    %359 = vector.extract_strided_slice %350 {offsets = [0, 128], sizes = [8, 128], strides = [1, 1]} : vector<8x512xf32> to vector<8x128xf32>
    %cst_195 = arith.constant 5.000000e-01 : f32
    %360 = vector.broadcast %cst_195 : f32 to vector<8x128xf32>
    %361 = arith.mulf %360, %359 : vector<8x128xf32>
    %362 = math.tanh %361 : vector<8x128xf32>
    %cst_196 = arith.constant 5.000000e-01 : f32
    %363 = vector.broadcast %cst_196 : f32 to vector<8x128xf32>
    %364 = arith.mulf %363, %362 : vector<8x128xf32>
    %cst_197 = arith.constant 5.000000e-01 : f32
    %365 = vector.broadcast %cst_197 : f32 to vector<8x128xf32>
    %366 = arith.addf %364, %365 : vector<8x128xf32>
    %367 = vector.extract_strided_slice %350 {offsets = [0, 256], sizes = [8, 128], strides = [1, 1]} : vector<8x512xf32> to vector<8x128xf32>
    %368 = math.tanh %367 : vector<8x128xf32>
    %369 = vector.extract_strided_slice %350 {offsets = [0, 384], sizes = [8, 128], strides = [1, 1]} : vector<8x512xf32> to vector<8x128xf32>
    %cst_198 = arith.constant 5.000000e-01 : f32
    %370 = vector.broadcast %cst_198 : f32 to vector<8x128xf32>
    %371 = arith.mulf %370, %369 : vector<8x128xf32>
    %372 = math.tanh %371 : vector<8x128xf32>
    %cst_199 = arith.constant 5.000000e-01 : f32
    %373 = vector.broadcast %cst_199 : f32 to vector<8x128xf32>
    %374 = arith.mulf %373, %372 : vector<8x128xf32>
    %cst_200 = arith.constant 5.000000e-01 : f32
    %375 = vector.broadcast %cst_200 : f32 to vector<8x128xf32>
    %376 = arith.addf %374, %375 : vector<8x128xf32>
    %377 = arith.mulf %366, %343 : vector<8x128xf32>
    %378 = arith.mulf %358, %368 : vector<8x128xf32>
    %379 = arith.addf %377, %378 : vector<8x128xf32>
    %380 = math.tanh %379 : vector<8x128xf32>
    %381 = arith.mulf %376, %380 : vector<8x128xf32>
    %c0_201 = arith.constant 0 : index
    %c0_202 = arith.constant 0 : index
    %382 = vector.load %arg7[%c0_201, %c0_202] : memref<8x128xf32, #tpu.memory_space<vmem>>, vector<8x128xf32>
    tpu.vector_store %arg7[%c0_201, %c0_202], %381 {strides = array<i32>} : memref<8x128xf32, #tpu.memory_space<vmem>>, vector<8x128xf32>,
    %c0_203 = arith.constant 0 : index
    %c0_204 = arith.constant 0 : index
    %383 = vector.load %arg8[%c0_203, %c0_204] : memref<8x128xf32, #tpu.memory_space<vmem>>, vector<8x128xf32>
    tpu.vector_store %arg8[%c0_203, %c0_204], %379 {strides = array<i32>} : memref<8x128xf32, #tpu.memory_space<vmem>>, vector<8x128xf32>,
    %384 = arith.truncf %381 : vector<8x128xf32> to vector<8x128xbf16>
    %385 = arith.index_cast %c7_i32 : i32 to index
    %c0_205 = arith.constant 0 : index
    %c0_206 = arith.constant 0 : index
    %386 = vector.load %arg5[%385, %c0_205, %c0_206] : memref<8x8x128xbf16, #tpu.memory_space<vmem>>, vector<1x8x128xbf16>
    %387 = vector.shape_cast %386 : vector<1x8x128xbf16> to vector<8x128xbf16>
    %388 = vector.shape_cast %384 : vector<8x128xbf16> to vector<1x8x128xbf16>
    tpu.vector_store %arg5[%385, %c0_205, %c0_206], %388 {strides = array<i32>} : memref<8x8x128xbf16, #tpu.memory_space<vmem>>, vector<1x8x128xbf16>,
    %c8_i32 = arith.constant 8 : i32
    return
  }
  func.func @transform_0(%arg0: i32) -> (i32, i32, i32) {
    %c0_i32 = arith.constant 0 : i32
    %c0_i32_0 = arith.constant 0 : i32
    %c0_i32_1 = arith.constant 0 : i32
    return %c0_i32, %arg0, %c0_i32_0 : i32, i32, i32
  }
  func.func @transform_1(%arg0: i32) -> (i32, i32) {
    %c0_i32 = arith.constant 0 : i32
    %c0_i32_0 = arith.constant 0 : i32
    %c0_i32_1 = arith.constant 0 : i32
    return %c0_i32, %c0_i32_0 : i32, i32
  }
  func.func @transform_2(%arg0: i32) -> (i32, i32) {
    %c0_i32 = arith.constant 0 : i32
    %c0_i32_0 = arith.constant 0 : i32
    %c0_i32_1 = arith.constant 0 : i32
    return %c0_i32, %c0_i32_0 : i32, i32
  }
  func.func @transform_3(%arg0: i32) -> (i32, i32) {
    %c0_i32 = arith.constant 0 : i32
    %c0_i32_0 = arith.constant 0 : i32
    %c0_i32_1 = arith.constant 0 : i32
    return %c0_i32, %c0_i32_0 : i32, i32
  }
  func.func @transform_4(%arg0: i32) -> (i32, i32, i32) {
    %c0_i32 = arith.constant 0 : i32
    %c0_i32_0 = arith.constant 0 : i32
    %c0_i32_1 = arith.constant 0 : i32
    return %c0_i32, %arg0, %c0_i32_0 : i32, i32, i32
  }
}

</mosaic_0001>

<llo_original>
// kernel: tpu_custom_call.1
$region0: #{tpu_custom_call.1}
  #allocation0 [shape = 'u32[]', space=smem, size = 0x4, offset = 0x4, fixed_abs, tag = 'smem constant byte address 0x4 - core index']
  #allocation1 [shape = 'u32[144,128]{1,0:T(1,128)}', space=vmem, size = 0x12000, scoped, tag = 'internal scratch']
  #allocation2 [shape = 'f32[8,8,512]{2,1,0:T(8,128)}', space=vmem, size = 0x20000, scoped, tag = 'scratch operand']
  #allocation3 [shape = 'f32[8,128]{1,0:T(8,128)}', space=vmem, size = 0x1000, scoped, tag = 'scratch operand']
  #allocation4 [shape = 'f32[8,128]{1,0:T(8,128)}', space=vmem, size = 0x1000, scoped, tag = 'scratch operand']
  %s0 = inlined_call_operand.hbm [shape: bf16[8,8,128], index: 0, kind: input, shape index: {}]
  %s1 = inlined_call_operand.hbm [shape: bf16[128,512], index: 1, kind: input, shape index: {}]
  %s2 = inlined_call_operand.hbm [shape: bf16[128,512], index: 2, kind: input, shape index: {}]
  %s3 = inlined_call_operand.vmem [shape: f32[1,512], index: 3, kind: input, shape index: {}]
  %s4 = inlined_call_operand.hbm [shape: bf16[8,8,128], index: 4, kind: output, shape index: {}]
  %s5 = sld [smem:[#allocation0]]
  $region38: #{tpu_custom_call.1} parent=0
    _
  %s7 = ssub.s32 1, %s5
  %s8 = scalar_select 0, %s7, %s5
  $region1: #{tpu_custom_call.1} parent=0
    #allocation5 [shape = 'u8[16384]{0}', space=vmem, size = 0x4000, scoped, tag = 'input window, operand 0, single buffered']
    #allocation6 [shape = 's32[1]{0}', space=sflag, size = 0x4, scoped, tag = 'scoped memory for tpu_custom_call.1']
    #allocation7 [shape = 's32[1]{0}', space=sflag, size = 0x4, scoped, tag = 'scoped memory for tpu_custom_call.1']
    #allocation8 [shape = 'u8[131072]{0}', space=vmem, size = 0x20000, scoped, tag = 'input window, operand 1, single buffered']
    #allocation9 [shape = 's32[1]{0}', space=sflag, size = 0x4, scoped, tag = 'scoped memory for tpu_custom_call.1']
    #allocation10 [shape = 'u8[131072]{0}', space=vmem, size = 0x20000, scoped, tag = 'input window, operand 2, single buffered']
    #allocation11 [shape = 'u8[16384]{0}', space=vmem, size = 0x4000, scoped, tag = 'output window, operand 0, single buffered']
    %9 = vsyncpa [#allocation6], 0
    %10 = vsyncpa [#allocation9], 0
    %11 = vsyncpa [#allocation7], 0
    // Predicated region
    $region2: #{tpu_custom_call.1} parent=1 // pred_check
      _
    $region3: #{tpu_custom_call.1} parent=1 // pred_check_branch
      %13 = sbr.rel (0) target = $region5
    $region4: #{tpu_custom_call.1} parent=1 // pred_region
      %s15 = ssub.s32 512, 512
      %16 = vsyncadd [#allocation6], %s15
      %s17 = sshll.u32 [#allocation5], 4
      %s18 = int_to_ptr.vmem [resolvable:$true] %s17
      %23 = dma.hbm_to_vmem [thread:$0]  %s0, 512, %s18, [#allocation6], 64, 64, 4
    $region5: #{tpu_custom_call.1} parent=1 // pred_fallthru
      _
    // Predicated region
    $region6: #{tpu_custom_call.1} parent=1 // pred_check
      _
    $region7: #{tpu_custom_call.1} parent=1 // pred_check_branch
      %25 = sbr.rel (0) target = $region9
    $region8: #{tpu_custom_call.1} parent=1 // pred_region
      %s27 = ssub.s32 4096, 4096
      %28 = vsyncadd [#allocation9], %s27
      %s29 = sshll.u32 [#allocation8], 4
      %s30 = int_to_ptr.vmem [resolvable:$true] %s29
      %35 = dma.hbm_to_vmem [thread:$0]  %s1, 4096, %s30, [#allocation9], 256, 256, 16
    $region9: #{tpu_custom_call.1} parent=1 // pred_fallthru
      _
    // Predicated region
    $region10: #{tpu_custom_call.1} parent=1 // pred_check
      _
    $region11: #{tpu_custom_call.1} parent=1 // pred_check_branch
      %37 = sbr.rel (0) target = $region13
    $region12: #{tpu_custom_call.1} parent=1 // pred_region
      %s39 = ssub.s32 4096, 4096
      %40 = vsyncadd [#allocation9], %s39
      %s41 = sshll.u32 [#allocation10], 4
      %s42 = int_to_ptr.vmem [resolvable:$true] %s41
      %47 = dma.hbm_to_vmem [thread:$0]  %s2, 4096, %s42, [#allocation9], 256, 256, 16
    $region13: #{tpu_custom_call.1} parent=1 // pred_fallthru
      _
    // Predicated region
    $region14: #{tpu_custom_call.1} parent=1 // pred_check
      _
    $region15: #{tpu_custom_call.1} parent=1 // pred_check_branch
      %49 = sbr.rel (0) target = $region17
    $region16: #{tpu_custom_call.1} parent=1 // pred_region
      _
    $region17: #{tpu_custom_call.1} parent=1 // pred_fallthru
      _
    // Predicated region
    $region18: #{tpu_custom_call.1} parent=1 // pred_check
      _
    $region19: #{tpu_custom_call.1} parent=1 // pred_check_branch
      %51 = sbr.rel (0) target = $region21
    $region20: #{tpu_custom_call.1} parent=1 // pred_region
      %52 = dma.done [#allocation6], 512
    $region21: #{tpu_custom_call.1} parent=1 // pred_fallthru
      _
    // Predicated region
    $region22: #{tpu_custom_call.1} parent=1 // pred_check
      _
    $region23: #{tpu_custom_call.1} parent=1 // pred_check_branch
      %54 = sbr.rel (0) target = $region25
    $region24: #{tpu_custom_call.1} parent=1 // pred_region
      %55 = dma.done [#allocation9], 4096
    $region25: #{tpu_custom_call.1} parent=1 // pred_fallthru
      _
    // Predicated region
    $region26: #{tpu_custom_call.1} parent=1 // pred_check
      _
    $region27: #{tpu_custom_call.1} parent=1 // pred_check_branch
      %57 = sbr.rel (0) target = $region29
    $region28: #{tpu_custom_call.1} parent=1 // pred_region
      %58 = dma.done [#allocation9], 4096
    $region29: #{tpu_custom_call.1} parent=1 // pred_fallthru
      _
    %v60 = vld [vmem:[#allocation5] sm:$0xf]
    %v61 = vld [vmem:[#allocation5 + $0x4] sm:$0xf]
    %v62 = vld [vmem:[#allocation5 + $0x8] sm:$0xf]
    %v63 = vld [vmem:[#allocation5 + $0xc] sm:$0xf]
    %v64 = vld [vmem:[#allocation5 + $0x10] sm:$0xf]
    %v65 = vld [vmem:[#allocation5 + $0x14] sm:$0xf]
    %v66 = vld [vmem:[#allocation5 + $0x18] sm:$0xf]
    %v67 = vld [vmem:[#allocation5 + $0x1c] sm:$0xf]
    %v68 = vld [vmem:[#allocation8] sm:$0xff]
    %v69 = vld [vmem:[#allocation8 + $0x8] sm:$0xff]
    %v70 = vld [vmem:[#allocation8 + $0x10] sm:$0xff]
    %v71 = vld [vmem:[#allocation8 + $0x18] sm:$0xff]
    %v72 = vld [vmem:[#allocation8 + $0x20] sm:$0xff]
    %v73 = vld [vmem:[#allocation8 + $0x28] sm:$0xff]
    %v74 = vld [vmem:[#allocation8 + $0x30] sm:$0xff]
    %v75 = vld [vmem:[#allocation8 + $0x38] sm:$0xff]
    %v76 = vld [vmem:[#allocation8 + $0x40] sm:$0xff]
    %v77 = vld [vmem:[#allocation8 + $0x48] sm:$0xff]
    %v78 = vld [vmem:[#allocation8 + $0x50] sm:$0xff]
    %v79 = vld [vmem:[#allocation8 + $0x58] sm:$0xff]
    %v80 = vld [vmem:[#allocation8 + $0x60] sm:$0xff]
    %v81 = vld [vmem:[#allocation8 + $0x68] sm:$0xff]
    %v82 = vld [vmem:[#allocation8 + $0x70] sm:$0xff]
    %v83 = vld [vmem:[#allocation8 + $0x78] sm:$0xff]
    %v84 = vld [vmem:[#allocation8 + $0x80] sm:$0xff]
    %v85 = vld [vmem:[#allocation8 + $0x88] sm:$0xff]
    %v86 = vld [vmem:[#allocation8 + $0x90] sm:$0xff]
    %v87 = vld [vmem:[#allocation8 + $0x98] sm:$0xff]
    %v88 = vld [vmem:[#allocation8 + $0xa0] sm:$0xff]
    %v89 = vld [vmem:[#allocation8 + $0xa8] sm:$0xff]
    %v90 = vld [vmem:[#allocation8 + $0xb0] sm:$0xff]
    %v91 = vld [vmem:[#allocation8 + $0xb8] sm:$0xff]
    %v92 = vld [vmem:[#allocation8 + $0xc0] sm:$0xff]
    %v93 = vld [vmem:[#allocation8 + $0xc8] sm:$0xff]
    %v94 = vld [vmem:[#allocation8 + $0xd0] sm:$0xff]
    %v95 = vld [vmem:[#allocation8 + $0xd8] sm:$0xff]
    %v96 = vld [vmem:[#allocation8 + $0xe0] sm:$0xff]
    %v97 = vld [vmem:[#allocation8 + $0xe8] sm:$0xff]
    %v98 = vld [vmem:[#allocation8 + $0xf0] sm:$0xff]
    %v99 = vld [vmem:[#allocation8 + $0xf8] sm:$0xff]
    %v100 = vld [vmem:[%s3] sm:$0xf]
    %v102 = vlaneseq
    %v103 = vshrl.u32 %v102, 7
    %v104 = vsub.s32 0, %v103
    %v105 = vrot.slane %v100, %v104
    %v106 = vlaneseq
    %v107 = vshrl.u32 %v106, 7
    %v108 = vsub.s32 1, %v107
    %v109 = vrot.slane %v100, %v108
    %v110 = vlaneseq
    %v111 = vshrl.u32 %v110, 7
    %v112 = vsub.s32 2, %v111
    %v113 = vrot.slane %v100, %v112
    %v114 = vlaneseq
    %v115 = vshrl.u32 %v114, 7
    %v116 = vsub.s32 3, %v115
    %v117 = vrot.slane %v100, %v116
    %v130 = vunpack.c.l.b16 %v60
    %v131 = vunpack.c.l.b16 %v61
    %v132 = vunpack.c.l.b16 %v62
    %v133 = vunpack.c.l.b16 %v63
    %v134 = vunpack.c.l.b16 %v64
    %v135 = vunpack.c.l.b16 %v65
    %v136 = vunpack.c.l.b16 %v66
    %v137 = vunpack.c.l.b16 %v67
    %v138 = vpack.c.b16 %v131, %v130
    %v139 = vpack.c.b16 %v133, %v132
    %v140 = vpack.c.b16 %v135, %v134
    %v141 = vpack.c.b16 %v137, %v136
    %v178 = vunpack.c.l.b16 %v68
    %v179 = vunpack.c.h.b16 %v68
    %v180 = vunpack.c.l.b16 %v69
    %v181 = vunpack.c.h.b16 %v69
    %v182 = vunpack.c.l.b16 %v70
    %v183 = vunpack.c.h.b16 %v70
    %v184 = vunpack.c.l.b16 %v71
    %v185 = vunpack.c.h.b16 %v71
    %v186 = vunpack.c.l.b16 %v72
    %v187 = vunpack.c.h.b16 %v72
    %v188 = vunpack.c.l.b16 %v73
    %v189 = vunpack.c.h.b16 %v73
    %v190 = vunpack.c.l.b16 %v74
    %v191 = vunpack.c.h.b16 %v74
    %v192 = vunpack.c.l.b16 %v75
    %v193 = vunpack.c.h.b16 %v75
    %v194 = vunpack.c.l.b16 %v76
    %v195 = vunpack.c.h.b16 %v76
    %v196 = vunpack.c.l.b16 %v77
    %v197 = vunpack.c.h.b16 %v77
    %v198 = vunpack.c.l.b16 %v78
    %v199 = vunpack.c.h.b16 %v78
    %v200 = vunpack.c.l.b16 %v79
    %v201 = vunpack.c.h.b16 %v79
    %v202 = vunpack.c.l.b16 %v80
    %v203 = vunpack.c.h.b16 %v80
    %v204 = vunpack.c.l.b16 %v81
    %v205 = vunpack.c.h.b16 %v81
    %v206 = vunpack.c.l.b16 %v82
    %v207 = vunpack.c.h.b16 %v82
    %v208 = vunpack.c.l.b16 %v83
    %v209 = vunpack.c.h.b16 %v83
    %v210 = vunpack.c.l.b16 %v84
    %v211 = vunpack.c.h.b16 %v84
    %v212 = vunpack.c.l.b16 %v85
    %v213 = vunpack.c.h.b16 %v85
    %v214 = vunpack.c.l.b16 %v86
    %v215 = vunpack.c.h.b16 %v86
    %v216 = vunpack.c.l.b16 %v87
    %v217 = vunpack.c.h.b16 %v87
    %v218 = vunpack.c.l.b16 %v88
    %v219 = vunpack.c.h.b16 %v88
    %v220 = vunpack.c.l.b16 %v89
    %v221 = vunpack.c.h.b16 %v89
    %v222 = vunpack.c.l.b16 %v90
    %v223 = vunpack.c.h.b16 %v90
    %v224 = vunpack.c.l.b16 %v91
    %v225 = vunpack.c.h.b16 %v91
    %v226 = vunpack.c.l.b16 %v92
    %v227 = vunpack.c.h.b16 %v92
    %v228 = vunpack.c.l.b16 %v93
    %v229 = vunpack.c.h.b16 %v93
    %v230 = vunpack.c.l.b16 %v94
    %v231 = vunpack.c.h.b16 %v94
    %v232 = vunpack.c.l.b16 %v95
    %v233 = vunpack.c.h.b16 %v95
    %v234 = vunpack.c.l.b16 %v96
    %v235 = vunpack.c.h.b16 %v96
    %v236 = vunpack.c.l.b16 %v97
    %v237 = vunpack.c.h.b16 %v97
    %v238 = vunpack.c.l.b16 %v98
    %v239 = vunpack.c.h.b16 %v98
    %v240 = vunpack.c.l.b16 %v99
    %v241 = vunpack.c.h.b16 %v99
    %v242 = vpack.c.b16 %v182, %v178
    %v243 = vpack.c.b16 %v183, %v179
    %v244 = vpack.c.b16 %v184, %v180
    %v245 = vpack.c.b16 %v185, %v181
    %v246 = vpack.c.b16 %v190, %v186
    %v247 = vpack.c.b16 %v191, %v187
    %v248 = vpack.c.b16 %v192, %v188
    %v249 = vpack.c.b16 %v193, %v189
    %v250 = vpack.c.b16 %v198, %v194
    %v251 = vpack.c.b16 %v199, %v195
    %v252 = vpack.c.b16 %v200, %v196
    %v253 = vpack.c.b16 %v201, %v197
    %v254 = vpack.c.b16 %v206, %v202
    %v255 = vpack.c.b16 %v207, %v203
    %v256 = vpack.c.b16 %v208, %v204
    %v257 = vpack.c.b16 %v209, %v205
    %v258 = vpack.c.b16 %v214, %v210
    %v259 = vpack.c.b16 %v215, %v211
    %v260 = vpack.c.b16 %v216, %v212
    %v261 = vpack.c.b16 %v217, %v213
    %v262 = vpack.c.b16 %v222, %v218
    %v263 = vpack.c.b16 %v223, %v219
    %v264 = vpack.c.b16 %v224, %v220
    %v265 = vpack.c.b16 %v225, %v221
    %v266 = vpack.c.b16 %v230, %v226
    %v267 = vpack.c.b16 %v231, %v227
    %v268 = vpack.c.b16 %v232, %v228
    %v269 = vpack.c.b16 %v233, %v229
    %v270 = vpack.c.b16 %v238, %v234
    %v271 = vpack.c.b16 %v239, %v235
    %v272 = vpack.c.b16 %v240, %v236
    %v273 = vpack.c.b16 %v241, %v237
    %306 = vmatprep.subr.bf16.mxu0 %v243
    %307 = vmatpush1.bf16.msra.mxu0 %v242
    %308 = vmatprep.subr.bf16.mxu0 %v247
    %309 = vmatpush1.bf16.msra.mxu0 %v246
    %310 = vmatprep.subr.bf16.mxu0 %v251
    %311 = vmatpush1.bf16.msra.mxu0 %v250
    %312 = vmatprep.subr.bf16.mxu0 %v255
    %313 = vmatpush1.bf16.msra.mxu0 %v254
    %314 = vmatprep.subr.bf16.mxu0 %v259
    %315 = vmatpush1.bf16.msra.mxu0 %v258
    %316 = vmatprep.subr.bf16.mxu0 %v263
    %317 = vmatpush1.bf16.msra.mxu0 %v262
    %318 = vmatprep.subr.bf16.mxu0 %v267
    %319 = vmatpush1.bf16.msra.mxu0 %v266
    %320 = vmatprep.subr.bf16.mxu0 %v271
    %321 = vmatpush1.bf16.msra.mxu0 %v270
    %322 = vmatprep.subr.bf16.mxu0 0
    %323 = vmatpush1.bf16.msra.mxu0 0
    %324 = vmatprep.subr.bf16.mxu0 0
    %325 = vmatpush1.bf16.msra.mxu0 0
    %326 = vmatprep.subr.bf16.mxu0 0
    %327 = vmatpush1.bf16.msra.mxu0 0
    %328 = vmatprep.subr.bf16.mxu0 0
    %329 = vmatpush1.bf16.msra.mxu0 0
    %330 = vmatprep.subr.bf16.mxu0 0
    %331 = vmatpush1.bf16.msra.mxu0 0
    %332 = vmatprep.subr.bf16.mxu0 0
    %333 = vmatpush1.bf16.msra.mxu0 0
    %334 = vmatprep.subr.bf16.mxu0 0
    %335 = vmatpush1.bf16.msra.mxu0 0
    %336 = vmatprep.subr.bf16.mxu0 0
    %337 = vmatpush1.bf16.msra.mxu0 0
    %338 = vmatprep.mubr.bf16.mxu0 0
    %339 = vmatmul.mubr.bf16.gmra.mrb[0].mxu0 %v138
    %v340 = vpop.f32.mrb[0].mxu0
    %v341 = vadd.f32 %v105, %v340
    %v342 = vpop.f32.mrb[0].mxu0
    %v343 = vadd.f32 %v109, %v342
    %v344 = vpop.f32.mrb[0].mxu0
    %v345 = vadd.f32 %v105, %v344
    %v346 = vpop.f32.mrb[0].mxu0
    %v347 = vadd.f32 %v109, %v346
    %348 = vmatprep.mubr.bf16.mxu0 0
    %349 = vmatmul.mubr.bf16.gmra.mrb[0].mxu0 %v139
    %v350 = vpop.f32.mrb[0].mxu0
    %v351 = vadd.f32 %v105, %v350
    %v352 = vpop.f32.mrb[0].mxu0
    %v353 = vadd.f32 %v109, %v352
    %v354 = vpop.f32.mrb[0].mxu0
    %v355 = vadd.f32 %v105, %v354
    %v356 = vpop.f32.mrb[0].mxu0
    %v357 = vadd.f32 %v109, %v356
    %358 = vmatprep.mubr.bf16.mxu0 0
    %359 = vmatmul.mubr.bf16.gmra.mrb[0].mxu0 %v140
    %v360 = vpop.f32.mrb[0].mxu0
    %v361 = vadd.f32 %v105, %v360
    %v362 = vpop.f32.mrb[0].mxu0
    %v363 = vadd.f32 %v109, %v362
    %v364 = vpop.f32.mrb[0].mxu0
    %v365 = vadd.f32 %v105, %v364
    %v366 = vpop.f32.mrb[0].mxu0
    %v367 = vadd.f32 %v109, %v366
    %368 = vmatprep.mubr.bf16.mxu0 0
    %369 = vmatmul.mubr.bf16.gmra.mrb[0].mxu0 %v141
    %v370 = vpop.f32.mrb[0].mxu0
    %v371 = vadd.f32 %v105, %v370
    %v372 = vpop.f32.mrb[0].mxu0
    %v373 = vadd.f32 %v109, %v372
    %v374 = vpop.f32.mrb[0].mxu0
    %v375 = vadd.f32 %v105, %v374
    %v376 = vpop.f32.mrb[0].mxu0
    %v377 = vadd.f32 %v109, %v376
    %378 = vdwg.mxu0
    %379 = vmatprep.subr.bf16.mxu0 %v245
    %380 = vmatpush1.bf16.msra.mxu0 %v244
    %381 = vmatprep.subr.bf16.mxu0 %v249
    %382 = vmatpush1.bf16.msra.mxu0 %v248
    %383 = vmatprep.subr.bf16.mxu0 %v253
    %384 = vmatpush1.bf16.msra.mxu0 %v252
    %385 = vmatprep.subr.bf16.mxu0 %v257
    %386 = vmatpush1.bf16.msra.mxu0 %v256
    %387 = vmatprep.subr.bf16.mxu0 %v261
    %388 = vmatpush1.bf16.msra.mxu0 %v260
    %389 = vmatprep.subr.bf16.mxu0 %v265
    %390 = vmatpush1.bf16.msra.mxu0 %v264
    %391 = vmatprep.subr.bf16.mxu0 %v269
    %392 = vmatpush1.bf16.msra.mxu0 %v268
    %393 = vmatprep.subr.bf16.mxu0 %v273
    %394 = vmatpush1.bf16.msra.mxu0 %v272
    %395 = vmatprep.subr.bf16.mxu0 0
    %396 = vmatpush1.bf16.msra.mxu0 0
    %397 = vmatprep.subr.bf16.mxu0 0
    %398 = vmatpush1.bf16.msra.mxu0 0
    %399 = vmatprep.subr.bf16.mxu0 0
    %400 = vmatpush1.bf16.msra.mxu0 0
    %401 = vmatprep.subr.bf16.mxu0 0
    %402 = vmatpush1.bf16.msra.mxu0 0
    %403 = vmatprep.subr.bf16.mxu0 0
    %404 = vmatpush1.bf16.msra.mxu0 0
    %405 = vmatprep.subr.bf16.mxu0 0
    %406 = vmatpush1.bf16.msra.mxu0 0
    %407 = vmatprep.subr.bf16.mxu0 0
    %408 = vmatpush1.bf16.msra.mxu0 0
    %409 = vmatprep.subr.bf16.mxu0 0
    %410 = vmatpush1.bf16.msra.mxu0 0
    %411 = vmatprep.mubr.bf16.mxu0 0
    %412 = vmatmul.mubr.bf16.gmra.mrb[0].mxu0 %v138
    %v413 = vpop.f32.mrb[0].mxu0
    %v414 = vadd.f32 %v113, %v413
    %v415 = vpop.f32.mrb[0].mxu0
    %v416 = vadd.f32 %v117, %v415
    %v417 = vpop.f32.mrb[0].mxu0
    %v418 = vadd.f32 %v113, %v417
    %v419 = vpop.f32.mrb[0].mxu0
    %v420 = vadd.f32 %v117, %v419
    %421 = vmatprep.mubr.bf16.mxu0 0
    %422 = vmatmul.mubr.bf16.gmra.mrb[0].mxu0 %v139
    %v423 = vpop.f32.mrb[0].mxu0
    %v424 = vadd.f32 %v113, %v423
    %v425 = vpop.f32.mrb[0].mxu0
    %v426 = vadd.f32 %v117, %v425
    %v427 = vpop.f32.mrb[0].mxu0
    %v428 = vadd.f32 %v113, %v427
    %v429 = vpop.f32.mrb[0].mxu0
    %v430 = vadd.f32 %v117, %v429
    %431 = vmatprep.mubr.bf16.mxu0 0
    %432 = vmatmul.mubr.bf16.gmra.mrb[0].mxu0 %v140
    %v433 = vpop.f32.mrb[0].mxu0
    %v434 = vadd.f32 %v113, %v433
    %v435 = vpop.f32.mrb[0].mxu0
    %v436 = vadd.f32 %v117, %v435
    %v437 = vpop.f32.mrb[0].mxu0
    %v438 = vadd.f32 %v113, %v437
    %v439 = vpop.f32.mrb[0].mxu0
    %v440 = vadd.f32 %v117, %v439
    %441 = vmatprep.mubr.bf16.mxu0 0
    %442 = vmatmul.mubr.bf16.gmra.mrb[0].mxu0 %v141
    %v443 = vpop.f32.mrb[0].mxu0
    %v444 = vadd.f32 %v113, %v443
    %v445 = vpop.f32.mrb[0].mxu0
    %v446 = vadd.f32 %v117, %v445
    %v447 = vpop.f32.mrb[0].mxu0
    %v448 = vadd.f32 %v113, %v447
    %v449 = vpop.f32.mrb[0].mxu0
    %v450 = vadd.f32 %v117, %v449
    %451 = vdwg.mxu0
    %452 = vst [vmem:[#allocation2] sm:$0xff] %v341
    %453 = vst [vmem:[#allocation2 + $0x8] sm:$0xff] %v343
    %454 = vst [vmem:[#allocation2 + $0x10] sm:$0xff] %v414
    %455 = vst [vmem:[#allocation2 + $0x18] sm:$0xff] %v416
    %456 = vst [vmem:[#allocation2 + $0x20] sm:$0xff] %v345
    %457 = vst [vmem:[#allocation2 + $0x28] sm:$0xff] %v347
    %458 = vst [vmem:[#allocation2 + $0x30] sm:$0xff] %v418
    %459 = vst [vmem:[#allocation2 + $0x38] sm:$0xff] %v420
    %460 = vst [vmem:[#allocation2 + $0x40] sm:$0xff] %v351
    %461 = vst [vmem:[#allocation2 + $0x48] sm:$0xff] %v353
    %462 = vst [vmem:[#allocation2 + $0x50] sm:$0xff] %v424
    %463 = vst [vmem:[#allocation2 + $0x58] sm:$0xff] %v426
    %464 = vst [vmem:[#allocation2 + $0x60] sm:$0xff] %v355
    %465 = vst [vmem:[#allocation2 + $0x68] sm:$0xff] %v357
    %466 = vst [vmem:[#allocation2 + $0x70] sm:$0xff] %v428
    %467 = vst [vmem:[#allocation2 + $0x78] sm:$0xff] %v430
    %468 = vst [vmem:[#allocation2 + $0x80] sm:$0xff] %v361
    %469 = vst [vmem:[#allocation2 + $0x88] sm:$0xff] %v363
    %470 = vst [vmem:[#allocation2 + $0x90] sm:$0xff] %v434
    %471 = vst [vmem:[#allocation2 + $0x98] sm:$0xff] %v436
    %472 = vst [vmem:[#allocation2 + $0xa0] sm:$0xff] %v365
    %473 = vst [vmem:[#allocation2 + $0xa8] sm:$0xff] %v367
    %474 = vst [vmem:[#allocation2 + $0xb0] sm:$0xff] %v438
    %475 = vst [vmem:[#allocation2 + $0xb8] sm:$0xff] %v440
    %476 = vst [vmem:[#allocation2 + $0xc0] sm:$0xff] %v371
    %477 = vst [vmem:[#allocation2 + $0xc8] sm:$0xff] %v373
    %478 = vst [vmem:[#allocation2 + $0xd0] sm:$0xff] %v444
    %479 = vst [vmem:[#allocation2 + $0xd8] sm:$0xff] %v446
    %480 = vst [vmem:[#allocation2 + $0xe0] sm:$0xff] %v375
    %481 = vst [vmem:[#allocation2 + $0xe8] sm:$0xff] %v377
    %482 = vst [vmem:[#allocation2 + $0xf0] sm:$0xff] %v448
    %483 = vst [vmem:[#allocation2 + $0xf8] sm:$0xff] %v450
    %484 = vst [vmem:[#allocation3] sm:$0xff] 0.0
    %485 = vst [vmem:[#allocation4] sm:$0xff] 0.0
    %v486 = vld [vmem:[#allocation3] sm:$0xff]
    %v487 = vld [vmem:[#allocation4] sm:$0xff]
    %v488 = vld [vmem:[#allocation2] sm:$0xff]
    %v489 = vld [vmem:[#allocation2 + $0x8] sm:$0xff]
    %v490 = vld [vmem:[#allocation2 + $0x10] sm:$0xff]
    %v491 = vld [vmem:[#allocation2 + $0x18] sm:$0xff]
    %v492 = vpack.c.bf16 %v486, %v486
    %v493 = vld [vmem:[#allocation10] sm:$0xff]
    %v494 = vld [vmem:[#allocation10 + $0x8] sm:$0xff]
    %v495 = vld [vmem:[#allocation10 + $0x10] sm:$0xff]
    %v496 = vld [vmem:[#allocation10 + $0x18] sm:$0xff]
    %v497 = vld [vmem:[#allocation10 + $0x20] sm:$0xff]
    %v498 = vld [vmem:[#allocation10 + $0x28] sm:$0xff]
    %v499 = vld [vmem:[#allocation10 + $0x30] sm:$0xff]
    %v500 = vld [vmem:[#allocation10 + $0x38] sm:$0xff]
    %v501 = vld [vmem:[#allocation10 + $0x40] sm:$0xff]
    %v502 = vld [vmem:[#allocation10 + $0x48] sm:$0xff]
    %v503 = vld [vmem:[#allocation10 + $0x50] sm:$0xff]
    %v504 = vld [vmem:[#allocation10 + $0x58] sm:$0xff]
    %v505 = vld [vmem:[#allocation10 + $0x60] sm:$0xff]
    %v506 = vld [vmem:[#allocation10 + $0x68] sm:$0xff]
    %v507 = vld [vmem:[#allocation10 + $0x70] sm:$0xff]
    %v508 = vld [vmem:[#allocation10 + $0x78] sm:$0xff]
    %v509 = vld [vmem:[#allocation10 + $0x80] sm:$0xff]
    %v510 = vld [vmem:[#allocation10 + $0x88] sm:$0xff]
    %v511 = vld [vmem:[#allocation10 + $0x90] sm:$0xff]
    %v512 = vld [vmem:[#allocation10 + $0x98] sm:$0xff]
    %v513 = vld [vmem:[#allocation10 + $0xa0] sm:$0xff]
    %v514 = vld [vmem:[#allocation10 + $0xa8] sm:$0xff]
    %v515 = vld [vmem:[#allocation10 + $0xb0] sm:$0xff]
    %v516 = vld [vmem:[#allocation10 + $0xb8] sm:$0xff]
    %v517 = vld [vmem:[#allocation10 + $0xc0] sm:$0xff]
    %v518 = vld [vmem:[#allocation10 + $0xc8] sm:$0xff]
    %v519 = vld [vmem:[#allocation10 + $0xd0] sm:$0xff]
    %v520 = vld [vmem:[#allocation10 + $0xd8] sm:$0xff]
    %v521 = vld [vmem:[#allocation10 + $0xe0] sm:$0xff]
    %v522 = vld [vmem:[#allocation10 + $0xe8] sm:$0xff]
    %v523 = vld [vmem:[#allocation10 + $0xf0] sm:$0xff]
    %v524 = vld [vmem:[#allocation10 + $0xf8] sm:$0xff]
    %v557 = vunpack.c.l.b16 %v493
    %v558 = vunpack.c.h.b16 %v493
    %v559 = vunpack.c.l.b16 %v494
    %v560 = vunpack.c.h.b16 %v494
    %v561 = vunpack.c.l.b16 %v495
    %v562 = vunpack.c.h.b16 %v495
    %v563 = vunpack.c.l.b16 %v496
    %v564 = vunpack.c.h.b16 %v496
    %v565 = vunpack.c.l.b16 %v497
    %v566 = vunpack.c.h.b16 %v497
    %v567 = vunpack.c.l.b16 %v498
    %v568 = vunpack.c.h.b16 %v498
    %v569 = vunpack.c.l.b16 %v499
    %v570 = vunpack.c.h.b16 %v499
    %v571 = vunpack.c.l.b16 %v500
    %v572 = vunpack.c.h.b16 %v500
    %v573 = vunpack.c.l.b16 %v501
    %v574 = vunpack.c.h.b16 %v501
    %v575 = vunpack.c.l.b16 %v502
    %v576 = vunpack.c.h.b16 %v502
    %v577 = vunpack.c.l.b16 %v503
    %v578 = vunpack.c.h.b16 %v503
    %v579 = vunpack.c.l.b16 %v504
    %v580 = vunpack.c.h.b16 %v504
    %v581 = vunpack.c.l.b16 %v505
    %v582 = vunpack.c.h.b16 %v505
    %v583 = vunpack.c.l.b16 %v506
    %v584 = vunpack.c.h.b16 %v506
    %v585 = vunpack.c.l.b16 %v507
    %v586 = vunpack.c.h.b16 %v507
    %v587 = vunpack.c.l.b16 %v508
    %v588 = vunpack.c.h.b16 %v508
    %v589 = vunpack.c.l.b16 %v509
    %v590 = vunpack.c.h.b16 %v509
    %v591 = vunpack.c.l.b16 %v510
    %v592 = vunpack.c.h.b16 %v510
    %v593 = vunpack.c.l.b16 %v511
    %v594 = vunpack.c.h.b16 %v511
    %v595 = vunpack.c.l.b16 %v512
    %v596 = vunpack.c.h.b16 %v512
    %v597 = vunpack.c.l.b16 %v513
    %v598 = vunpack.c.h.b16 %v513
    %v599 = vunpack.c.l.b16 %v514
    %v600 = vunpack.c.h.b16 %v514
    %v601 = vunpack.c.l.b16 %v515
    %v602 = vunpack.c.h.b16 %v515
    %v603 = vunpack.c.l.b16 %v516
    %v604 = vunpack.c.h.b16 %v516
    %v605 = vunpack.c.l.b16 %v517
    %v606 = vunpack.c.h.b16 %v517
    %v607 = vunpack.c.l.b16 %v518
    %v608 = vunpack.c.h.b16 %v518
    %v609 = vunpack.c.l.b16 %v519
    %v610 = vunpack.c.h.b16 %v519
    %v611 = vunpack.c.l.b16 %v520
    %v612 = vunpack.c.h.b16 %v520
    %v613 = vunpack.c.l.b16 %v521
    %v614 = vunpack.c.h.b16 %v521
    %v615 = vunpack.c.l.b16 %v522
    %v616 = vunpack.c.h.b16 %v522
    %v617 = vunpack.c.l.b16 %v523
    %v618 = vunpack.c.h.b16 %v523
    %v619 = vunpack.c.l.b16 %v524
    %v620 = vunpack.c.h.b16 %v524
    %v621 = vpack.c.b16 %v561, %v557
    %v622 = vpack.c.b16 %v562, %v558
    %v623 = vpack.c.b16 %v563, %v559
    %v624 = vpack.c.b16 %v564, %v560
    %v625 = vpack.c.b16 %v569, %v565
    %v626 = vpack.c.b16 %v570, %v566
    %v627 = vpack.c.b16 %v571, %v567
    %v628 = vpack.c.b16 %v572, %v568
    %v629 = vpack.c.b16 %v577, %v573
    %v630 = vpack.c.b16 %v578, %v574
    %v631 = vpack.c.b16 %v579, %v575
    %v632 = vpack.c.b16 %v580, %v576
    %v633 = vpack.c.b16 %v585, %v581
    %v634 = vpack.c.b16 %v586, %v582
    %v635 = vpack.c.b16 %v587, %v583
    %v636 = vpack.c.b16 %v588, %v584
    %v637 = vpack.c.b16 %v593, %v589
    %v638 = vpack.c.b16 %v594, %v590
    %v639 = vpack.c.b16 %v595, %v591
    %v640 = vpack.c.b16 %v596, %v592
    %v641 = vpack.c.b16 %v601, %v597
    %v642 = vpack.c.b16 %v602, %v598
    %v643 = vpack.c.b16 %v603, %v599
    %v644 = vpack.c.b16 %v604, %v600
    %v645 = vpack.c.b16 %v609, %v605
    %v646 = vpack.c.b16 %v610, %v606
    %v647 = vpack.c.b16 %v611, %v607
    %v648 = vpack.c.b16 %v612, %v608
    %v649 = vpack.c.b16 %v617, %v613
    %v650 = vpack.c.b16 %v618, %v614
    %v651 = vpack.c.b16 %v619, %v615
    %v652 = vpack.c.b16 %v620, %v616
    %685 = vmatprep.subr.bf16.mxu0 %v622
    %686 = vmatpush1.bf16.msra.mxu0 %v621
    %687 = vmatprep.subr.bf16.mxu0 %v626
    %688 = vmatpush1.bf16.msra.mxu0 %v625
    %689 = vmatprep.subr.bf16.mxu0 %v630
    %690 = vmatpush1.bf16.msra.mxu0 %v629
    %691 = vmatprep.subr.bf16.mxu0 %v634
    %692 = vmatpush1.bf16.msra.mxu0 %v633
    %693 = vmatprep.subr.bf16.mxu0 %v638
    %694 = vmatpush1.bf16.msra.mxu0 %v637
    %695 = vmatprep.subr.bf16.mxu0 %v642
    %696 = vmatpush1.bf16.msra.mxu0 %v641
    %697 = vmatprep.subr.bf16.mxu0 %v646
    %698 = vmatpush1.bf16.msra.mxu0 %v645
    %699 = vmatprep.subr.bf16.mxu0 %v650
    %700 = vmatpush1.bf16.msra.mxu0 %v649
    %701 = vmatprep.subr.bf16.mxu0 0
    %702 = vmatpush1.bf16.msra.mxu0 0
    %703 = vmatprep.subr.bf16.mxu0 0
    %704 = vmatpush1.bf16.msra.mxu0 0
    %705 = vmatprep.subr.bf16.mxu0 0
    %706 = vmatpush1.bf16.msra.mxu0 0
    %707 = vmatprep.subr.bf16.mxu0 0
    %708 = vmatpush1.bf16.msra.mxu0 0
    %709 = vmatprep.subr.bf16.mxu0 0
    %710 = vmatpush1.bf16.msra.mxu0 0
    %711 = vmatprep.subr.bf16.mxu0 0
    %712 = vmatpush1.bf16.msra.mxu0 0
    %713 = vmatprep.subr.bf16.mxu0 0
    %714 = vmatpush1.bf16.msra.mxu0 0
    %715 = vmatprep.subr.bf16.mxu0 0
    %716 = vmatpush1.bf16.msra.mxu0 0
    %717 = vmatprep.mubr.bf16.mxu0 0
    %718 = vmatmul.mubr.bf16.gmra.mrb[0].mxu0 %v492
    %v719 = vpop.f32.mrb[0].mxu0
    %v720 = vadd.f32 0.0, %v719
    %v721 = vpop.f32.mrb[0].mxu0
    %v722 = vadd.f32 0.0, %v721
    %v723 = vpop.f32.mrb[0].mxu0
    %v724 = vpop.f32.mrb[0].mxu0
    %725 = vdwg.mxu0
    %726 = vmatprep.subr.bf16.mxu0 %v624
    %727 = vmatpush1.bf16.msra.mxu0 %v623
    %728 = vmatprep.subr.bf16.mxu0 %v628
    %729 = vmatpush1.bf16.msra.mxu0 %v627
    %730 = vmatprep.subr.bf16.mxu0 %v632
    %731 = vmatpush1.bf16.msra.mxu0 %v631
    %732 = vmatprep.subr.bf16.mxu0 %v636
    %733 = vmatpush1.bf16.msra.mxu0 %v635
    %734 = vmatprep.subr.bf16.mxu0 %v640
    %735 = vmatpush1.bf16.msra.mxu0 %v639
    %736 = vmatprep.subr.bf16.mxu0 %v644
    %737 = vmatpush1.bf16.msra.mxu0 %v643
    %738 = vmatprep.subr.bf16.mxu0 %v648
    %739 = vmatpush1.bf16.msra.mxu0 %v647
    %740 = vmatprep.subr.bf16.mxu0 %v652
    %741 = vmatpush1.bf16.msra.mxu0 %v651
    %742 = vmatprep.subr.bf16.mxu0 0
    %743 = vmatpush1.bf16.msra.mxu0 0
    %744 = vmatprep.subr.bf16.mxu0 0
    %745 = vmatpush1.bf16.msra.mxu0 0
    %746 = vmatprep.subr.bf16.mxu0 0
    %747 = vmatpush1.bf16.msra.mxu0 0
    %748 = vmatprep.subr.bf16.mxu0 0
    %749 = vmatpush1.bf16.msra.mxu0 0
    %750 = vmatprep.subr.bf16.mxu0 0
    %751 = vmatpush1.bf16.msra.mxu0 0
    %752 = vmatprep.subr.bf16.mxu0 0
    %753 = vmatpush1.bf16.msra.mxu0 0
    %754 = vmatprep.subr.bf16.mxu0 0
    %755 = vmatpush1.bf16.msra.mxu0 0
    %756 = vmatprep.subr.bf16.mxu0 0
    %757 = vmatpush1.bf16.msra.mxu0 0
    %758 = vmatprep.mubr.bf16.mxu0 0
    %759 = vmatmul.mubr.bf16.gmra.mrb[0].mxu0 %v492
    %v760 = vpop.f32.mrb[0].mxu0
    %v761 = vadd.f32 0.0, %v760
    %v762 = vpop.f32.mrb[0].mxu0
    %v763 = vadd.f32 0.0, %v762
    %v764 = vpop.f32.mrb[0].mxu0
    %v765 = vpop.f32.mrb[0].mxu0
    %766 = vdwg.mxu0
    %v767 = vadd.f32 %v488, %v720
    %v768 = vadd.f32 %v489, %v722
    %v769 = vadd.f32 %v490, %v761
    %v770 = vadd.f32 %v491, %v763
    %v771 = vmul.f32 %v767, 0.5
    %v772 = vtanh.pop %v771
    %v773 = vmul.f32 %v772, 0.5
    %v774 = vadd.f32 %v773, 0.5
    %v775 = vmul.f32 %v768, 0.5
    %v776 = vtanh.pop %v775
    %v777 = vmul.f32 %v776, 0.5
    %v778 = vadd.f32 %v777, 0.5
    %v779 = vtanh.pop %v769
    %v780 = vmul.f32 %v770, 0.5
    %v781 = vtanh.pop %v780
    %v782 = vmul.f32 %v781, 0.5
    %v783 = vadd.f32 %v782, 0.5
    %v784 = vmul.f32 %v778, %v487
    %v785 = vmul.f32 %v774, %v779
    %v786 = vadd.f32 %v784, %v785
    %v787 = vtanh.pop %v786
    %v788 = vmul.f32 %v783, %v787
    %789 = vst [vmem:[#allocation3] sm:$0xff] %v788
    %790 = vst [vmem:[#allocation4] sm:$0xff] %v786
    %v791 = vpack.c.bf16 %v788, %v788
    %792 = vst [vmem:[#allocation11] sm:$0xf] %v791
    %v793 = vld [vmem:[#allocation3] sm:$0xff]
    %v794 = vld [vmem:[#allocation4] sm:$0xff]
    %s795 = scalar_lea.vmem [#allocation2], 32
    %v796 = vld [vmem:[%s795] sm:$0xff]
    %v797 = vld [vmem:[%s795 + $0x8] sm:$0xff]
    %v798 = vld [vmem:[%s795 + $0x10] sm:$0xff]
    %v799 = vld [vmem:[%s795 + $0x18] sm:$0xff]
    %v800 = vpack.c.bf16 %v793, %v793
    %v801 = vld [vmem:[#allocation10] sm:$0xff]
    %v802 = vld [vmem:[#allocation10 + $0x8] sm:$0xff]
    %v803 = vld [vmem:[#allocation10 + $0x10] sm:$0xff]
    %v804 = vld [vmem:[#allocation10 + $0x18] sm:$0xff]
    %v805 = vld [vmem:[#allocation10 + $0x20] sm:$0xff]
    %v806 = vld [vmem:[#allocation10 + $0x28] sm:$0xff]
    %v807 = vld [vmem:[#allocation10 + $0x30] sm:$0xff]
    %v808 = vld [vmem:[#allocation10 + $0x38] sm:$0xff]
    %v809 = vld [vmem:[#allocation10 + $0x40] sm:$0xff]
    %v810 = vld [vmem:[#allocation10 + $0x48] sm:$0xff]
    %v811 = vld [vmem:[#allocation10 + $0x50] sm:$0xff]
    %v812 = vld [vmem:[#allocation10 + $0x58] sm:$0xff]
    %v813 = vld [vmem:[#allocation10 + $0x60] sm:$0xff]
    %v814 = vld [vmem:[#allocation10 + $0x68] sm:$0xff]
    %v815 = vld [vmem:[#allocation10 + $0x70] sm:$0xff]
    %v816 = vld [vmem:[#allocation10 + $0x78] sm:$0xff]
    %v817 = vld [vmem:[#allocation10 + $0x80] sm:$0xff]
    %v818 = vld [vmem:[#allocation10 + $0x88] sm:$0xff]
    %v819 = vld [vmem:[#allocation10 + $0x90] sm:$0xff]
    %v820 = vld [vmem:[#allocation10 + $0x98] sm:$0xff]
    %v821 = vld [vmem:[#allocation10 + $0xa0] sm:$0xff]
    %v822 = vld [vmem:[#allocation10 + $0xa8] sm:$0xff]
    %v823 = vld [vmem:[#allocation10 + $0xb0] sm:$0xff]
    %v824 = vld [vmem:[#allocation10 + $0xb8] sm:$0xff]
    %v825 = vld [vmem:[#allocation10 + $0xc0] sm:$0xff]
    %v826 = vld [vmem:[#allocation10 + $0xc8] sm:$0xff]
    %v827 = vld [vmem:[#allocation10 + $0xd0] sm:$0xff]
    %v828 = vld [vmem:[#allocation10 + $0xd8] sm:$0xff]
    %v829 = vld [vmem:[#allocation10 + $0xe0] sm:$0xff]
    %v830 = vld [vmem:[#allocation10 + $0xe8] sm:$0xff]
    %v831 = vld [vmem:[#allocation10 + $0xf0] sm:$0xff]
    %v832 = vld [vmem:[#allocation10 + $0xf8] sm:$0xff]
    %v865 = vunpack.c.l.b16 %v801
    %v866 = vunpack.c.h.b16 %v801
    %v867 = vunpack.c.l.b16 %v802
    %v868 = vunpack.c.h.b16 %v802
    %v869 = vunpack.c.l.b16 %v803
    %v870 = vunpack.c.h.b16 %v803
    %v871 = vunpack.c.l.b16 %v804
    %v872 = vunpack.c.h.b16 %v804
    %v873 = vunpack.c.l.b16 %v805
    %v874 = vunpack.c.h.b16 %v805
    %v875 = vunpack.c.l.b16 %v806
    %v876 = vunpack.c.h.b16 %v806
    %v877 = vunpack.c.l.b16 %v807
    %v878 = vunpack.c.h.b16 %v807
    %v879 = vunpack.c.l.b16 %v808
    %v880 = vunpack.c.h.b16 %v808
    %v881 = vunpack.c.l.b16 %v809
    %v882 = vunpack.c.h.b16 %v809
    %v883 = vunpack.c.l.b16 %v810
    %v884 = vunpack.c.h.b16 %v810
    %v885 = vunpack.c.l.b16 %v811
    %v886 = vunpack.c.h.b16 %v811
    %v887 = vunpack.c.l.b16 %v812
    %v888 = vunpack.c.h.b16 %v812
    %v889 = vunpack.c.l.b16 %v813
    %v890 = vunpack.c.h.b16 %v813
    %v891 = vunpack.c.l.b16 %v814
    %v892 = vunpack.c.h.b16 %v814
    %v893 = vunpack.c.l.b16 %v815
    %v894 = vunpack.c.h.b16 %v815
    %v895 = vunpack.c.l.b16 %v816
    %v896 = vunpack.c.h.b16 %v816
    %v897 = vunpack.c.l.b16 %v817
    %v898 = vunpack.c.h.b16 %v817
    %v899 = vunpack.c.l.b16 %v818
    %v900 = vunpack.c.h.b16 %v818
    %v901 = vunpack.c.l.b16 %v819
    %v902 = vunpack.c.h.b16 %v819
    %v903 = vunpack.c.l.b16 %v820
    %v904 = vunpack.c.h.b16 %v820
    %v905 = vunpack.c.l.b16 %v821
    %v906 = vunpack.c.h.b16 %v821
    %v907 = vunpack.c.l.b16 %v822
    %v908 = vunpack.c.h.b16 %v822
    %v909 = vunpack.c.l.b16 %v823
    %v910 = vunpack.c.h.b16 %v823
    %v911 = vunpack.c.l.b16 %v824
    %v912 = vunpack.c.h.b16 %v824
    %v913 = vunpack.c.l.b16 %v825
    %v914 = vunpack.c.h.b16 %v825
    %v915 = vunpack.c.l.b16 %v826
    %v916 = vunpack.c.h.b16 %v826
    %v917 = vunpack.c.l.b16 %v827
    %v918 = vunpack.c.h.b16 %v827
    %v919 = vunpack.c.l.b16 %v828
    %v920 = vunpack.c.h.b16 %v828
    %v921 = vunpack.c.l.b16 %v829
    %v922 = vunpack.c.h.b16 %v829
    %v923 = vunpack.c.l.b16 %v830
    %v924 = vunpack.c.h.b16 %v830
    %v925 = vunpack.c.l.b16 %v831
    %v926 = vunpack.c.h.b16 %v831
    %v927 = vunpack.c.l.b16 %v832
    %v928 = vunpack.c.h.b16 %v832
    %v929 = vpack.c.b16 %v869, %v865
    %v930 = vpack.c.b16 %v870, %v866
    %v931 = vpack.c.b16 %v871, %v867
    %v932 = vpack.c.b16 %v872, %v868
    %v933 = vpack.c.b16 %v877, %v873
    %v934 = vpack.c.b16 %v878, %v874
    %v935 = vpack.c.b16 %v879, %v875
    %v936 = vpack.c.b16 %v880, %v876
    %v937 = vpack.c.b16 %v885, %v881
    %v938 = vpack.c.b16 %v886, %v882
    %v939 = vpack.c.b16 %v887, %v883
    %v940 = vpack.c.b16 %v888, %v884
    %v941 = vpack.c.b16 %v893, %v889
    %v942 = vpack.c.b16 %v894, %v890
    %v943 = vpack.c.b16 %v895, %v891
    %v944 = vpack.c.b16 %v896, %v892
    %v945 = vpack.c.b16 %v901, %v897
    %v946 = vpack.c.b16 %v902, %v898
    %v947 = vpack.c.b16 %v903, %v899
    %v948 = vpack.c.b16 %v904, %v900
    %v949 = vpack.c.b16 %v909, %v905
    %v950 = vpack.c.b16 %v910, %v906
    %v951 = vpack.c.b16 %v911, %v907
    %v952 = vpack.c.b16 %v912, %v908
    %v953 = vpack.c.b16 %v917, %v913
    %v954 = vpack.c.b16 %v918, %v914
    %v955 = vpack.c.b16 %v919, %v915
    %v956 = vpack.c.b16 %v920, %v916
    %v957 = vpack.c.b16 %v925, %v921
    %v958 = vpack.c.b16 %v926, %v922
    %v959 = vpack.c.b16 %v927, %v923
    %v960 = vpack.c.b16 %v928, %v924
    %993 = vmatprep.subr.bf16.mxu0 %v930
    %994 = vmatpush1.bf16.msra.mxu0 %v929
    %995 = vmatprep.subr.bf16.mxu0 %v934
    %996 = vmatpush1.bf16.msra.mxu0 %v933
    %997 = vmatprep.subr.bf16.mxu0 %v938
    %998 = vmatpush1.bf16.msra.mxu0 %v937
    %999 = vmatprep.subr.bf16.mxu0 %v942
    %1000 = vmatpush1.bf16.msra.mxu0 %v941
    %1001 = vmatprep.subr.bf16.mxu0 %v946
    %1002 = vmatpush1.bf16.msra.mxu0 %v945
    %1003 = vmatprep.subr.bf16.mxu0 %v950
    %1004 = vmatpush1.bf16.msra.mxu0 %v949
    %1005 = vmatprep.subr.bf16.mxu0 %v954
    %1006 = vmatpush1.bf16.msra.mxu0 %v953
    %1007 = vmatprep.subr.bf16.mxu0 %v958
    %1008 = vmatpush1.bf16.msra.mxu0 %v957
    %1009 = vmatprep.subr.bf16.mxu0 0
    %1010 = vmatpush1.bf16.msra.mxu0 0
    %1011 = vmatprep.subr.bf16.mxu0 0
    %1012 = vmatpush1.bf16.msra.mxu0 0
    %1013 = vmatprep.subr.bf16.mxu0 0
    %1014 = vmatpush1.bf16.msra.mxu0 0
    %1015 = vmatprep.subr.bf16.mxu0 0
    %1016 = vmatpush1.bf16.msra.mxu0 0
    %1017 = vmatprep.subr.bf16.mxu0 0
    %1018 = vmatpush1.bf16.msra.mxu0 0
    %1019 = vmatprep.subr.bf16.mxu0 0
    %1020 = vmatpush1.bf16.msra.mxu0 0
    %1021 = vmatprep.subr.bf16.mxu0 0
    %1022 = vmatpush1.bf16.msra.mxu0 0
    %1023 = vmatprep.subr.bf16.mxu0 0
    %1024 = vmatpush1.bf16.msra.mxu0 0
    %1025 = vmatprep.mubr.bf16.mxu0 0
    %1026 = vmatmul.mubr.bf16.gmra.mrb[0].mxu0 %v800
    %v1027 = vpop.f32.mrb[0].mxu0
    %v1028 = vadd.f32 0.0, %v1027
    %v1029 = vpop.f32.mrb[0].mxu0
    %v1030 = vadd.f32 0.0, %v1029
    %v1031 = vpop.f32.mrb[0].mxu0
    %v1032 = vpop.f32.mrb[0].mxu0
    %1033 = vdwg.mxu0
    %1034 = vmatprep.subr.bf16.mxu0 %v932
    %1035 = vmatpush1.bf16.msra.mxu0 %v931
    %1036 = vmatprep.subr.bf16.mxu0 %v936
    %1037 = vmatpush1.bf16.msra.mxu0 %v935
    %1038 = vmatprep.subr.bf16.mxu0 %v940
    %1039 = vmatpush1.bf16.msra.mxu0 %v939
    %1040 = vmatprep.subr.bf16.mxu0 %v944
    %1041 = vmatpush1.bf16.msra.mxu0 %v943
    %1042 = vmatprep.subr.bf16.mxu0 %v948
    %1043 = vmatpush1.bf16.msra.mxu0 %v947
    %1044 = vmatprep.subr.bf16.mxu0 %v952
    %1045 = vmatpush1.bf16.msra.mxu0 %v951
    %1046 = vmatprep.subr.bf16.mxu0 %v956
    %1047 = vmatpush1.bf16.msra.mxu0 %v955
    %1048 = vmatprep.subr.bf16.mxu0 %v960
    %1049 = vmatpush1.bf16.msra.mxu0 %v959
    %1050 = vmatprep.subr.bf16.mxu0 0
    %1051 = vmatpush1.bf16.msra.mxu0 0
    %1052 = vmatprep.subr.bf16.mxu0 0
    %1053 = vmatpush1.bf16.msra.mxu0 0
    %1054 = vmatprep.subr.bf16.mxu0 0
    %1055 = vmatpush1.bf16.msra.mxu0 0
    %1056 = vmatprep.subr.bf16.mxu0 0
    %1057 = vmatpush1.bf16.msra.mxu0 0
    %1058 = vmatprep.subr.bf16.mxu0 0
    %1059 = vmatpush1.bf16.msra.mxu0 0
    %1060 = vmatprep.subr.bf16.mxu0 0
    %1061 = vmatpush1.bf16.msra.mxu0 0
    %1062 = vmatprep.subr.bf16.mxu0 0
    %1063 = vmatpush1.bf16.msra.mxu0 0
    %1064 = vmatprep.subr.bf16.mxu0 0
    %1065 = vmatpush1.bf16.msra.mxu0 0
    %1066 = vmatprep.mubr.bf16.mxu0 0
    %1067 = vmatmul.mubr.bf16.gmra.mrb[0].mxu0 %v800
    %v1068 = vpop.f32.mrb[0].mxu0
    %v1069 = vadd.f32 0.0, %v1068
    %v1070 = vpop.f32.mrb[0].mxu0
    %v1071 = vadd.f32 0.0, %v1070
    %v1072 = vpop.f32.mrb[0].mxu0
    %v1073 = vpop.f32.mrb[0].mxu0
    %1074 = vdwg.mxu0
    %v1075 = vadd.f32 %v796, %v1028
    %v1076 = vadd.f32 %v797, %v1030
    %v1077 = vadd.f32 %v798, %v1069
    %v1078 = vadd.f32 %v799, %v1071
    %v1079 = vmul.f32 %v1075, 0.5
    %v1080 = vtanh.pop %v1079
    %v1081 = vmul.f32 %v1080, 0.5
    %v1082 = vadd.f32 %v1081, 0.5
    %v1083 = vmul.f32 %v1076, 0.5
    %v1084 = vtanh.pop %v1083
    %v1085 = vmul.f32 %v1084, 0.5
    %v1086 = vadd.f32 %v1085, 0.5
    %v1087 = vtanh.pop %v1077
    %v1088 = vmul.f32 %v1078, 0.5
    %v1089 = vtanh.pop %v1088
    %v1090 = vmul.f32 %v1089, 0.5
    %v1091 = vadd.f32 %v1090, 0.5
    %v1092 = vmul.f32 %v1086, %v794
    %v1093 = vmul.f32 %v1082, %v1087
    %v1094 = vadd.f32 %v1092, %v1093
    %v1095 = vtanh.pop %v1094
    %v1096 = vmul.f32 %v1091, %v1095
    %1097 = vst [vmem:[#allocation3] sm:$0xff] %v1096
    %1098 = vst [vmem:[#allocation4] sm:$0xff] %v1094
    %v1099 = vpack.c.bf16 %v1096, %v1096
    %s1100 = scalar_lea.vmem [#allocation11], 4
    %1101 = vst [vmem:[%s1100] sm:$0xf] %v1099
    %v1102 = vld [vmem:[#allocation3] sm:$0xff]
    %v1103 = vld [vmem:[#allocation4] sm:$0xff]
    %s1104 = scalar_lea.vmem [#allocation2], 64
    %v1105 = vld [vmem:[%s1104] sm:$0xff]
    %v1106 = vld [vmem:[%s1104 + $0x8] sm:$0xff]
    %v1107 = vld [vmem:[%s1104 + $0x10] sm:$0xff]
    %v1108 = vld [vmem:[%s1104 + $0x18] sm:$0xff]
    %v1109 = vpack.c.bf16 %v1102, %v1102
    %v1110 = vld [vmem:[#allocation10] sm:$0xff]
    %v1111 = vld [vmem:[#allocation10 + $0x8] sm:$0xff]
    %v1112 = vld [vmem:[#allocation10 + $0x10] sm:$0xff]
    %v1113 = vld [vmem:[#allocation10 + $0x18] sm:$0xff]
    %v1114 = vld [vmem:[#allocation10 + $0x20] sm:$0xff]
    %v1115 = vld [vmem:[#allocation10 + $0x28] sm:$0xff]
    %v1116 = vld [vmem:[#allocation10 + $0x30] sm:$0xff]
    %v1117 = vld [vmem:[#allocation10 + $0x38] sm:$0xff]
    %v1118 = vld [vmem:[#allocation10 + $0x40] sm:$0xff]
    %v1119 = vld [vmem:[#allocation10 + $0x48] sm:$0xff]
    %v1120 = vld [vmem:[#allocation10 + $0x50] sm:$0xff]
    %v1121 = vld [vmem:[#allocation10 + $0x58] sm:$0xff]
    %v1122 = vld [vmem:[#allocation10 + $0x60] sm:$0xff]
    %v1123 = vld [vmem:[#allocation10 + $0x68] sm:$0xff]
    %v1124 = vld [vmem:[#allocation10 + $0x70] sm:$0xff]
    %v1125 = vld [vmem:[#allocation10 + $0x78] sm:$0xff]
    %v1126 = vld [vmem:[#allocation10 + $0x80] sm:$0xff]
    %v1127 = vld [vmem:[#allocation10 + $0x88] sm:$0xff]
    %v1128 = vld [vmem:[#allocation10 + $0x90] sm:$0xff]
    %v1129 = vld [vmem:[#allocation10 + $0x98] sm:$0xff]
    %v1130 = vld [vmem:[#allocation10 + $0xa0] sm:$0xff]
    %v1131 = vld [vmem:[#allocation10 + $0xa8] sm:$0xff]
    %v1132 = vld [vmem:[#allocation10 + $0xb0] sm:$0xff]
    %v1133 = vld [vmem:[#allocation10 + $0xb8] sm:$0xff]
    %v1134 = vld [vmem:[#allocation10 + $0xc0] sm:$0xff]
    %v1135 = vld [vmem:[#allocation10 + $0xc8] sm:$0xff]
    %v1136 = vld [vmem:[#allocation10 + $0xd0] sm:$0xff]
    %v1137 = vld [vmem:[#allocation10 + $0xd8] sm:$0xff]
    %v1138 = vld [vmem:[#allocation10 + $0xe0] sm:$0xff]
    %v1139 = vld [vmem:[#allocation10 + $0xe8] sm:$0xff]
    %v1140 = vld [vmem:[#allocation10 + $0xf0] sm:$0xff]
    %v1141 = vld [vmem:[#allocation10 + $0xf8] sm:$0xff]
    %v1174 = vunpack.c.l.b16 %v1110
    %v1175 = vunpack.c.h.b16 %v1110
    %v1176 = vunpack.c.l.b16 %v1111
    %v1177 = vunpack.c.h.b16 %v1111
    %v1178 = vunpack.c.l.b16 %v1112
    %v1179 = vunpack.c.h.b16 %v1112
    %v1180 = vunpack.c.l.b16 %v1113
    %v1181 = vunpack.c.h.b16 %v1113
    %v1182 = vunpack.c.l.b16 %v1114
    %v1183 = vunpack.c.h.b16 %v1114
    %v1184 = vunpack.c.l.b16 %v1115
    %v1185 = vunpack.c.h.b16 %v1115
    %v1186 = vunpack.c.l.b16 %v1116
    %v1187 = vunpack.c.h.b16 %v1116
    %v1188 = vunpack.c.l.b16 %v1117
    %v1189 = vunpack.c.h.b16 %v1117
    %v1190 = vunpack.c.l.b16 %v1118
    %v1191 = vunpack.c.h.b16 %v1118
    %v1192 = vunpack.c.l.b16 %v1119
    %v1193 = vunpack.c.h.b16 %v1119
    %v1194 = vunpack.c.l.b16 %v1120
    %v1195 = vunpack.c.h.b16 %v1120
    %v1196 = vunpack.c.l.b16 %v1121
    %v1197 = vunpack.c.h.b16 %v1121
    %v1198 = vunpack.c.l.b16 %v1122
    %v1199 = vunpack.c.h.b16 %v1122
    %v1200 = vunpack.c.l.b16 %v1123
    %v1201 = vunpack.c.h.b16 %v1123
    %v1202 = vunpack.c.l.b16 %v1124
    %v1203 = vunpack.c.h.b16 %v1124
    %v1204 = vunpack.c.l.b16 %v1125
    %v1205 = vunpack.c.h.b16 %v1125
    %v1206 = vunpack.c.l.b16 %v1126
    %v1207 = vunpack.c.h.b16 %v1126
    %v1208 = vunpack.c.l.b16 %v1127
    %v1209 = vunpack.c.h.b16 %v1127
    %v1210 = vunpack.c.l.b16 %v1128
    %v1211 = vunpack.c.h.b16 %v1128
    %v1212 = vunpack.c.l.b16 %v1129
    %v1213 = vunpack.c.h.b16 %v1129
    %v1214 = vunpack.c.l.b16 %v1130
    %v1215 = vunpack.c.h.b16 %v1130
    %v1216 = vunpack.c.l.b16 %v1131
    %v1217 = vunpack.c.h.b16 %v1131
    %v1218 = vunpack.c.l.b16 %v1132
    %v1219 = vunpack.c.h.b16 %v1132
    %v1220 = vunpack.c.l.b16 %v1133
    %v1221 = vunpack.c.h.b16 %v1133
    %v1222 = vunpack.c.l.b16 %v1134
    %v1223 = vunpack.c.h.b16 %v1134
    %v1224 = vunpack.c.l.b16 %v1135
    %v1225 = vunpack.c.h.b16 %v1135
    %v1226 = vunpack.c.l.b16 %v1136
    %v1227 = vunpack.c.h.b16 %v1136
    %v1228 = vunpack.c.l.b16 %v1137
    %v1229 = vunpack.c.h.b16 %v1137
    %v1230 = vunpack.c.l.b16 %v1138
    %v1231 = vunpack.c.h.b16 %v1138
    %v1232 = vunpack.c.l.b16 %v1139
    %v1233 = vunpack.c.h.b16 %v1139
    %v1234 = vunpack.c.l.b16 %v1140
    %v1235 = vunpack.c.h.b16 %v1140
    %v1236 = vunpack.c.l.b16 %v1141
    %v1237 = vunpack.c.h.b16 %v1141
    %v1238 = vpack.c.b16 %v1178, %v1174
    %v1239 = vpack.c.b16 %v1179, %v1175
    %v1240 = vpack.c.b16 %v1180, %v1176
    %v1241 = vpack.c.b16 %v1181, %v1177
    %v1242 = vpack.c.b16 %v1186, %v1182
    %v1243 = vpack.c.b16 %v1187, %v1183
    %v1244 = vpack.c.b16 %v1188, %v1184
    %v1245 = vpack.c.b16 %v1189, %v1185
    %v1246 = vpack.c.b16 %v1194, %v1190
    %v1247 = vpack.c.b16 %v1195, %v1191
    %v1248 = vpack.c.b16 %v1196, %v1192
    %v1249 = vpack.c.b16 %v1197, %v1193
    %v1250 = vpack.c.b16 %v1202, %v1198
    %v1251 = vpack.c.b16 %v1203, %v1199
    %v1252 = vpack.c.b16 %v1204, %v1200
    %v1253 = vpack.c.b16 %v1205, %v1201
    %v1254 = vpack.c.b16 %v1210, %v1206
    %v1255 = vpack.c.b16 %v1211, %v1207
    %v1256 = vpack.c.b16 %v1212, %v1208
    %v1257 = vpack.c.b16 %v1213, %v1209
    %v1258 = vpack.c.b16 %v1218, %v1214
    %v1259 = vpack.c.b16 %v1219, %v1215
    %v1260 = vpack.c.b16 %v1220, %v1216
    %v1261 = vpack.c.b16 %v1221, %v1217
    %v1262 = vpack.c.b16 %v1226, %v1222
    %v1263 = vpack.c.b16 %v1227, %v1223
    %v1264 = vpack.c.b16 %v1228, %v1224
    %v1265 = vpack.c.b16 %v1229, %v1225
    %v1266 = vpack.c.b16 %v1234, %v1230
    %v1267 = vpack.c.b16 %v1235, %v1231
    %v1268 = vpack.c.b16 %v1236, %v1232
    %v1269 = vpack.c.b16 %v1237, %v1233
    %1302 = vmatprep.subr.bf16.mxu0 %v1239
    %1303 = vmatpush1.bf16.msra.mxu0 %v1238
    %1304 = vmatprep.subr.bf16.mxu0 %v1243
    %1305 = vmatpush1.bf16.msra.mxu0 %v1242
    %1306 = vmatprep.subr.bf16.mxu0 %v1247
    %1307 = vmatpush1.bf16.msra.mxu0 %v1246
    %1308 = vmatprep.subr.bf16.mxu0 %v1251
    %1309 = vmatpush1.bf16.msra.mxu0 %v1250
    %1310 = vmatprep.subr.bf16.mxu0 %v1255
    %1311 = vmatpush1.bf16.msra.mxu0 %v1254
    %1312 = vmatprep.subr.bf16.mxu0 %v1259
    %1313 = vmatpush1.bf16.msra.mxu0 %v1258
    %1314 = vmatprep.subr.bf16.mxu0 %v1263
    %1315 = vmatpush1.bf16.msra.mxu0 %v1262
    %1316 = vmatprep.subr.bf16.mxu0 %v1267
    %1317 = vmatpush1.bf16.msra.mxu0 %v1266
    %1318 = vmatprep.subr.bf16.mxu0 0
    %1319 = vmatpush1.bf16.msra.mxu0 0
    %1320 = vmatprep.subr.bf16.mxu0 0
    %1321 = vmatpush1.bf16.msra.mxu0 0
    %1322 = vmatprep.subr.bf16.mxu0 0
    %1323 = vmatpush1.bf16.msra.mxu0 0
    %1324 = vmatprep.subr.bf16.mxu0 0
    %1325 = vmatpush1.bf16.msra.mxu0 0
    %1326 = vmatprep.subr.bf16.mxu0 0
    %1327 = vmatpush1.bf16.msra.mxu0 0
    %1328 = vmatprep.subr.bf16.mxu0 0
    %1329 = vmatpush1.bf16.msra.mxu0 0
    %1330 = vmatprep.subr.bf16.mxu0 0
    %1331 = vmatpush1.bf16.msra.mxu0 0
    %1332 = vmatprep.subr.bf16.mxu0 0
    %1333 = vmatpush1.bf16.msra.mxu0 0
    %1334 = vmatprep.mubr.bf16.mxu0 0
    %1335 = vmatmul.mubr.bf16.gmra.mrb[0].mxu0 %v1109
    %v1336 = vpop.f32.mrb[0].mxu0
    %v1337 = vadd.f32 0.0, %v1336
    %v1338 = vpop.f32.mrb[0].mxu0
    %v1339 = vadd.f32 0.0, %v1338
    %v1340 = vpop.f32.mrb[0].mxu0
    %v1341 = vpop.f32.mrb[0].mxu0
    %1342 = vdwg.mxu0
    %1343 = vmatprep.subr.bf16.mxu0 %v1241
    %1344 = vmatpush1.bf16.msra.mxu0 %v1240
    %1345 = vmatprep.subr.bf16.mxu0 %v1245
    %1346 = vmatpush1.bf16.msra.mxu0 %v1244
    %1347 = vmatprep.subr.bf16.mxu0 %v1249
    %1348 = vmatpush1.bf16.msra.mxu0 %v1248
    %1349 = vmatprep.subr.bf16.mxu0 %v1253
    %1350 = vmatpush1.bf16.msra.mxu0 %v1252
    %1351 = vmatprep.subr.bf16.mxu0 %v1257
    %1352 = vmatpush1.bf16.msra.mxu0 %v1256
    %1353 = vmatprep.subr.bf16.mxu0 %v1261
    %1354 = vmatpush1.bf16.msra.mxu0 %v1260
    %1355 = vmatprep.subr.bf16.mxu0 %v1265
    %1356 = vmatpush1.bf16.msra.mxu0 %v1264
    %1357 = vmatprep.subr.bf16.mxu0 %v1269
    %1358 = vmatpush1.bf16.msra.mxu0 %v1268
    %1359 = vmatprep.subr.bf16.mxu0 0
    %1360 = vmatpush1.bf16.msra.mxu0 0
    %1361 = vmatprep.subr.bf16.mxu0 0
    %1362 = vmatpush1.bf16.msra.mxu0 0
    %1363 = vmatprep.subr.bf16.mxu0 0
    %1364 = vmatpush1.bf16.msra.mxu0 0
    %1365 = vmatprep.subr.bf16.mxu0 0
    %1366 = vmatpush1.bf16.msra.mxu0 0
    %1367 = vmatprep.subr.bf16.mxu0 0
    %1368 = vmatpush1.bf16.msra.mxu0 0
    %1369 = vmatprep.subr.bf16.mxu0 0
    %1370 = vmatpush1.bf16.msra.mxu0 0
    %1371 = vmatprep.subr.bf16.mxu0 0
    %1372 = vmatpush1.bf16.msra.mxu0 0
    %1373 = vmatprep.subr.bf16.mxu0 0
    %1374 = vmatpush1.bf16.msra.mxu0 0
    %1375 = vmatprep.mubr.bf16.mxu0 0
    %1376 = vmatmul.mubr.bf16.gmra.mrb[0].mxu0 %v1109
    %v1377 = vpop.f32.mrb[0].mxu0
    %v1378 = vadd.f32 0.0, %v1377
    %v1379 = vpop.f32.mrb[0].mxu0
    %v1380 = vadd.f32 0.0, %v1379
    %v1381 = vpop.f32.mrb[0].mxu0
    %v1382 = vpop.f32.mrb[0].mxu0
    %1383 = vdwg.mxu0
    %v1384 = vadd.f32 %v1105, %v1337
    %v1385 = vadd.f32 %v1106, %v1339
    %v1386 = vadd.f32 %v1107, %v1378
    %v1387 = vadd.f32 %v1108, %v1380
    %v1388 = vmul.f32 %v1384, 0.5
    %v1389 = vtanh.pop %v1388
    %v1390 = vmul.f32 %v1389, 0.5
    %v1391 = vadd.f32 %v1390, 0.5
    %v1392 = vmul.f32 %v1385, 0.5
    %v1393 = vtanh.pop %v1392
    %v1394 = vmul.f32 %v1393, 0.5
    %v1395 = vadd.f32 %v1394, 0.5
    %v1396 = vtanh.pop %v1386
    %v1397 = vmul.f32 %v1387, 0.5
    %v1398 = vtanh.pop %v1397
    %v1399 = vmul.f32 %v1398, 0.5
    %v1400 = vadd.f32 %v1399, 0.5
    %v1401 = vmul.f32 %v1395, %v1103
    %v1402 = vmul.f32 %v1391, %v1396
    %v1403 = vadd.f32 %v1401, %v1402
    %v1404 = vtanh.pop %v1403
    %v1405 = vmul.f32 %v1400, %v1404
    %1406 = vst [vmem:[#allocation3] sm:$0xff] %v1405
    %1407 = vst [vmem:[#allocation4] sm:$0xff] %v1403
    %v1408 = vpack.c.bf16 %v1405, %v1405
    %s1409 = scalar_lea.vmem [#allocation11], 8
    %1410 = vst [vmem:[%s1409] sm:$0xf] %v1408
    %v1411 = vld [vmem:[#allocation3] sm:$0xff]
    %v1412 = vld [vmem:[#allocation4] sm:$0xff]
    %s1413 = scalar_lea.vmem [#allocation2], 96
    %v1414 = vld [vmem:[%s1413] sm:$0xff]
    %v1415 = vld [vmem:[%s1413 + $0x8] sm:$0xff]
    %v1416 = vld [vmem:[%s1413 + $0x10] sm:$0xff]
    %v1417 = vld [vmem:[%s1413 + $0x18] sm:$0xff]
    %v1418 = vpack.c.bf16 %v1411, %v1411
    %v1419 = vld [vmem:[#allocation10] sm:$0xff]
    %v1420 = vld [vmem:[#allocation10 + $0x8] sm:$0xff]
    %v1421 = vld [vmem:[#allocation10 + $0x10] sm:$0xff]
    %v1422 = vld [vmem:[#allocation10 + $0x18] sm:$0xff]
    %v1423 = vld [vmem:[#allocation10 + $0x20] sm:$0xff]
    %v1424 = vld [vmem:[#allocation10 + $0x28] sm:$0xff]
    %v1425 = vld [vmem:[#allocation10 + $0x30] sm:$0xff]
    %v1426 = vld [vmem:[#allocation10 + $0x38] sm:$0xff]
    %v1427 = vld [vmem:[#allocation10 + $0x40] sm:$0xff]
    %v1428 = vld [vmem:[#allocation10 + $0x48] sm:$0xff]
    %v1429 = vld [vmem:[#allocation10 + $0x50] sm:$0xff]
    %v1430 = vld [vmem:[#allocation10 + $0x58] sm:$0xff]
    %v1431 = vld [vmem:[#allocation10 + $0x60] sm:$0xff]
    %v1432 = vld [vmem:[#allocation10 + $0x68] sm:$0xff]
    %v1433 = vld [vmem:[#allocation10 + $0x70] sm:$0xff]
    %v1434 = vld [vmem:[#allocation10 + $0x78] sm:$0xff]
    %v1435 = vld [vmem:[#allocation10 + $0x80] sm:$0xff]
    %v1436 = vld [vmem:[#allocation10 + $0x88] sm:$0xff]
    %v1437 = vld [vmem:[#allocation10 + $0x90] sm:$0xff]
    %v1438 = vld [vmem:[#allocation10 + $0x98] sm:$0xff]
    %v1439 = vld [vmem:[#allocation10 + $0xa0] sm:$0xff]
    %v1440 = vld [vmem:[#allocation10 + $0xa8] sm:$0xff]
    %v1441 = vld [vmem:[#allocation10 + $0xb0] sm:$0xff]
    %v1442 = vld [vmem:[#allocation10 + $0xb8] sm:$0xff]
    %v1443 = vld [vmem:[#allocation10 + $0xc0] sm:$0xff]
    %v1444 = vld [vmem:[#allocation10 + $0xc8] sm:$0xff]
    %v1445 = vld [vmem:[#allocation10 + $0xd0] sm:$0xff]
    %v1446 = vld [vmem:[#allocation10 + $0xd8] sm:$0xff]
    %v1447 = vld [vmem:[#allocation10 + $0xe0] sm:$0xff]
    %v1448 = vld [vmem:[#allocation10 + $0xe8] sm:$0xff]
    %v1449 = vld [vmem:[#allocation10 + $0xf0] sm:$0xff]
    %v1450 = vld [vmem:[#allocation10 + $0xf8] sm:$0xff]
    %v1483 = vunpack.c.l.b16 %v1419
    %v1484 = vunpack.c.h.b16 %v1419
    %v1485 = vunpack.c.l.b16 %v1420
    %v1486 = vunpack.c.h.b16 %v1420
    %v1487 = vunpack.c.l.b16 %v1421
    %v1488 = vunpack.c.h.b16 %v1421
    %v1489 = vunpack.c.l.b16 %v1422
    %v1490 = vunpack.c.h.b16 %v1422
    %v1491 = vunpack.c.l.b16 %v1423
    %v1492 = vunpack.c.h.b16 %v1423
    %v1493 = vunpack.c.l.b16 %v1424
    %v1494 = vunpack.c.h.b16 %v1424
    %v1495 = vunpack.c.l.b16 %v1425
    %v1496 = vunpack.c.h.b16 %v1425
    %v1497 = vunpack.c.l.b16 %v1426
    %v1498 = vunpack.c.h.b16 %v1426
    %v1499 = vunpack.c.l.b16 %v1427
    %v1500 = vunpack.c.h.b16 %v1427
    %v1501 = vunpack.c.l.b16 %v1428
    %v1502 = vunpack.c.h.b16 %v1428
    %v1503 = vunpack.c.l.b16 %v1429
    %v1504 = vunpack.c.h.b16 %v1429
    %v1505 = vunpack.c.l.b16 %v1430
    %v1506 = vunpack.c.h.b16 %v1430
    %v1507 = vunpack.c.l.b16 %v1431
    %v1508 = vunpack.c.h.b16 %v1431
    %v1509 = vunpack.c.l.b16 %v1432
    %v1510 = vunpack.c.h.b16 %v1432
    %v1511 = vunpack.c.l.b16 %v1433
    %v1512 = vunpack.c.h.b16 %v1433
    %v1513 = vunpack.c.l.b16 %v1434
    %v1514 = vunpack.c.h.b16 %v1434
    %v1515 = vunpack.c.l.b16 %v1435
    %v1516 = vunpack.c.h.b16 %v1435
    %v1517 = vunpack.c.l.b16 %v1436
    %v1518 = vunpack.c.h.b16 %v1436
    %v1519 = vunpack.c.l.b16 %v1437
    %v1520 = vunpack.c.h.b16 %v1437
    %v1521 = vunpack.c.l.b16 %v1438
    %v1522 = vunpack.c.h.b16 %v1438
    %v1523 = vunpack.c.l.b16 %v1439
    %v1524 = vunpack.c.h.b16 %v1439
    %v1525 = vunpack.c.l.b16 %v1440
    %v1526 = vunpack.c.h.b16 %v1440
    %v1527 = vunpack.c.l.b16 %v1441
    %v1528 = vunpack.c.h.b16 %v1441
    %v1529 = vunpack.c.l.b16 %v1442
    %v1530 = vunpack.c.h.b16 %v1442
    %v1531 = vunpack.c.l.b16 %v1443
    %v1532 = vunpack.c.h.b16 %v1443
    %v1533 = vunpack.c.l.b16 %v1444
    %v1534 = vunpack.c.h.b16 %v1444
    %v1535 = vunpack.c.l.b16 %v1445
    %v1536 = vunpack.c.h.b16 %v1445
    %v1537 = vunpack.c.l.b16 %v1446
    %v1538 = vunpack.c.h.b16 %v1446
    %v1539 = vunpack.c.l.b16 %v1447
    %v1540 = vunpack.c.h.b16 %v1447
    %v1541 = vunpack.c.l.b16 %v1448
    %v1542 = vunpack.c.h.b16 %v1448
    %v1543 = vunpack.c.l.b16 %v1449
    %v1544 = vunpack.c.h.b16 %v1449
    %v1545 = vunpack.c.l.b16 %v1450
    %v1546 = vunpack.c.h.b16 %v1450
    %v1547 = vpack.c.b16 %v1487, %v1483
    %v1548 = vpack.c.b16 %v1488, %v1484
    %v1549 = vpack.c.b16 %v1489, %v1485
    %v1550 = vpack.c.b16 %v1490, %v1486
    %v1551 = vpack.c.b16 %v1495, %v1491
    %v1552 = vpack.c.b16 %v1496, %v1492
    %v1553 = vpack.c.b16 %v1497, %v1493
    %v1554 = vpack.c.b16 %v1498, %v1494
    %v1555 = vpack.c.b16 %v1503, %v1499
    %v1556 = vpack.c.b16 %v1504, %v1500
    %v1557 = vpack.c.b16 %v1505, %v1501
    %v1558 = vpack.c.b16 %v1506, %v1502
    %v1559 = vpack.c.b16 %v1511, %v1507
    %v1560 = vpack.c.b16 %v1512, %v1508
    %v1561 = vpack.c.b16 %v1513, %v1509
    %v1562 = vpack.c.b16 %v1514, %v1510
    %v1563 = vpack.c.b16 %v1519, %v1515
    %v1564 = vpack.c.b16 %v1520, %v1516
    %v1565 = vpack.c.b16 %v1521, %v1517
    %v1566 = vpack.c.b16 %v1522, %v1518
    %v1567 = vpack.c.b16 %v1527, %v1523
    %v1568 = vpack.c.b16 %v1528, %v1524
    %v1569 = vpack.c.b16 %v1529, %v1525
    %v1570 = vpack.c.b16 %v1530, %v1526
    %v1571 = vpack.c.b16 %v1535, %v1531
    %v1572 = vpack.c.b16 %v1536, %v1532
    %v1573 = vpack.c.b16 %v1537, %v1533
    %v1574 = vpack.c.b16 %v1538, %v1534
    %v1575 = vpack.c.b16 %v1543, %v1539
    %v1576 = vpack.c.b16 %v1544, %v1540
    %v1577 = vpack.c.b16 %v1545, %v1541
    %v1578 = vpack.c.b16 %v1546, %v1542
    %1611 = vmatprep.subr.bf16.mxu0 %v1548
    %1612 = vmatpush1.bf16.msra.mxu0 %v1547
    %1613 = vmatprep.subr.bf16.mxu0 %v1552
    %1614 = vmatpush1.bf16.msra.mxu0 %v1551
    %1615 = vmatprep.subr.bf16.mxu0 %v1556
    %1616 = vmatpush1.bf16.msra.mxu0 %v1555
    %1617 = vmatprep.subr.bf16.mxu0 %v1560
    %1618 = vmatpush1.bf16.msra.mxu0 %v1559
    %1619 = vmatprep.subr.bf16.mxu0 %v1564
    %1620 = vmatpush1.bf16.msra.mxu0 %v1563
    %1621 = vmatprep.subr.bf16.mxu0 %v1568
    %1622 = vmatpush1.bf16.msra.mxu0 %v1567
    %1623 = vmatprep.subr.bf16.mxu0 %v1572
    %1624 = vmatpush1.bf16.msra.mxu0 %v1571
    %1625 = vmatprep.subr.bf16.mxu0 %v1576
    %1626 = vmatpush1.bf16.msra.mxu0 %v1575
    %1627 = vmatprep.subr.bf16.mxu0 0
    %1628 = vmatpush1.bf16.msra.mxu0 0
    %1629 = vmatprep.subr.bf16.mxu0 0
    %1630 = vmatpush1.bf16.msra.mxu0 0
    %1631 = vmatprep.subr.bf16.mxu0 0
    %1632 = vmatpush1.bf16.msra.mxu0 0
    %1633 = vmatprep.subr.bf16.mxu0 0
    %1634 = vmatpush1.bf16.msra.mxu0 0
    %1635 = vmatprep.subr.bf16.mxu0 0
    %1636 = vmatpush1.bf16.msra.mxu0 0
    %1637 = vmatprep.subr.bf16.mxu0 0
    %1638 = vmatpush1.bf16.msra.mxu0 0
    %1639 = vmatprep.subr.bf16.mxu0 0
    %1640 = vmatpush1.bf16.msra.mxu0 0
    %1641 = vmatprep.subr.bf16.mxu0 0
    %1642 = vmatpush1.bf16.msra.mxu0 0
    %1643 = vmatprep.mubr.bf16.mxu0 0
    %1644 = vmatmul.mubr.bf16.gmra.mrb[0].mxu0 %v1418
    %v1645 = vpop.f32.mrb[0].mxu0
    %v1646 = vadd.f32 0.0, %v1645
    %v1647 = vpop.f32.mrb[0].mxu0
    %v1648 = vadd.f32 0.0, %v1647
    %v1649 = vpop.f32.mrb[0].mxu0
    %v1650 = vpop.f32.mrb[0].mxu0
    %1651 = vdwg.mxu0
    %1652 = vmatprep.subr.bf16.mxu0 %v1550
    %1653 = vmatpush1.bf16.msra.mxu0 %v1549
    %1654 = vmatprep.subr.bf16.mxu0 %v1554
    %1655 = vmatpush1.bf16.msra.mxu0 %v1553
    %1656 = vmatprep.subr.bf16.mxu0 %v1558
    %1657 = vmatpush1.bf16.msra.mxu0 %v1557
    %1658 = vmatprep.subr.bf16.mxu0 %v1562
    %1659 = vmatpush1.bf16.msra.mxu0 %v1561
    %1660 = vmatprep.subr.bf16.mxu0 %v1566
    %1661 = vmatpush1.bf16.msra.mxu0 %v1565
    %1662 = vmatprep.subr.bf16.mxu0 %v1570
    %1663 = vmatpush1.bf16.msra.mxu0 %v1569
    %1664 = vmatprep.subr.bf16.mxu0 %v1574
    %1665 = vmatpush1.bf16.msra.mxu0 %v1573
    %1666 = vmatprep.subr.bf16.mxu0 %v1578
    %1667 = vmatpush1.bf16.msra.mxu0 %v1577
    %1668 = vmatprep.subr.bf16.mxu0 0
    %1669 = vmatpush1.bf16.msra.mxu0 0
    %1670 = vmatprep.subr.bf16.mxu0 0
    %1671 = vmatpush1.bf16.msra.mxu0 0
    %1672 = vmatprep.subr.bf16.mxu0 0
    %1673 = vmatpush1.bf16.msra.mxu0 0
    %1674 = vmatprep.subr.bf16.mxu0 0
    %1675 = vmatpush1.bf16.msra.mxu0 0
    %1676 = vmatprep.subr.bf16.mxu0 0
    %1677 = vmatpush1.bf16.msra.mxu0 0
    %1678 = vmatprep.subr.bf16.mxu0 0
    %1679 = vmatpush1.bf16.msra.mxu0 0
    %1680 = vmatprep.subr.bf16.mxu0 0
    %1681 = vmatpush1.bf16.msra.mxu0 0
    %1682 = vmatprep.subr.bf16.mxu0 0
    %1683 = vmatpush1.bf16.msra.mxu0 0
    %1684 = vmatprep.mubr.bf16.mxu0 0
    %1685 = vmatmul.mubr.bf16.gmra.mrb[0].mxu0 %v1418
    %v1686 = vpop.f32.mrb[0].mxu0
    %v1687 = vadd.f32 0.0, %v1686
    %v1688 = vpop.f32.mrb[0].mxu0
    %v1689 = vadd.f32 0.0, %v1688
    %v1690 = vpop.f32.mrb[0].mxu0
    %v1691 = vpop.f32.mrb[0].mxu0
    %1692 = vdwg.mxu0
    %v1693 = vadd.f32 %v1414, %v1646
    %v1694 = vadd.f32 %v1415, %v1648
    %v1695 = vadd.f32 %v1416, %v1687
    %v1696 = vadd.f32 %v1417, %v1689
    %v1697 = vmul.f32 %v1693, 0.5
    %v1698 = vtanh.pop %v1697
    %v1699 = vmul.f32 %v1698, 0.5
    %v1700 = vadd.f32 %v1699, 0.5
    %v1701 = vmul.f32 %v1694, 0.5
    %v1702 = vtanh.pop %v1701
    %v1703 = vmul.f32 %v1702, 0.5
    %v1704 = vadd.f32 %v1703, 0.5
    %v1705 = vtanh.pop %v1695
    %v1706 = vmul.f32 %v1696, 0.5
    %v1707 = vtanh.pop %v1706
    %v1708 = vmul.f32 %v1707, 0.5
    %v1709 = vadd.f32 %v1708, 0.5
    %v1710 = vmul.f32 %v1704, %v1412
    %v1711 = vmul.f32 %v1700, %v1705
    %v1712 = vadd.f32 %v1710, %v1711
    %v1713 = vtanh.pop %v1712
    %v1714 = vmul.f32 %v1709, %v1713
    %1715 = vst [vmem:[#allocation3] sm:$0xff] %v1714
    %1716 = vst [vmem:[#allocation4] sm:$0xff] %v1712
    %v1717 = vpack.c.bf16 %v1714, %v1714
    %s1718 = scalar_lea.vmem [#allocation11], 12
    %1719 = vst [vmem:[%s1718] sm:$0xf] %v1717
    %v1720 = vld [vmem:[#allocation3] sm:$0xff]
    %v1721 = vld [vmem:[#allocation4] sm:$0xff]
    %s1722 = scalar_lea.vmem [#allocation2], 128
    %v1723 = vld [vmem:[%s1722] sm:$0xff]
    %v1724 = vld [vmem:[%s1722 + $0x8] sm:$0xff]
    %v1725 = vld [vmem:[%s1722 + $0x10] sm:$0xff]
    %v1726 = vld [vmem:[%s1722 + $0x18] sm:$0xff]
    %v1727 = vpack.c.bf16 %v1720, %v1720
    %v1728 = vld [vmem:[#allocation10] sm:$0xff]
    %v1729 = vld [vmem:[#allocation10 + $0x8] sm:$0xff]
    %v1730 = vld [vmem:[#allocation10 + $0x10] sm:$0xff]
    %v1731 = vld [vmem:[#allocation10 + $0x18] sm:$0xff]
    %v1732 = vld [vmem:[#allocation10 + $0x20] sm:$0xff]
    %v1733 = vld [vmem:[#allocation10 + $0x28] sm:$0xff]
    %v1734 = vld [vmem:[#allocation10 + $0x30] sm:$0xff]
    %v1735 = vld [vmem:[#allocation10 + $0x38] sm:$0xff]
    %v1736 = vld [vmem:[#allocation10 + $0x40] sm:$0xff]
    %v1737 = vld [vmem:[#allocation10 + $0x48] sm:$0xff]
    %v1738 = vld [vmem:[#allocation10 + $0x50] sm:$0xff]
    %v1739 = vld [vmem:[#allocation10 + $0x58] sm:$0xff]
    %v1740 = vld [vmem:[#allocation10 + $0x60] sm:$0xff]
    %v1741 = vld [vmem:[#allocation10 + $0x68] sm:$0xff]
    %v1742 = vld [vmem:[#allocation10 + $0x70] sm:$0xff]
    %v1743 = vld [vmem:[#allocation10 + $0x78] sm:$0xff]
    %v1744 = vld [vmem:[#allocation10 + $0x80] sm:$0xff]
    %v1745 = vld [vmem:[#allocation10 + $0x88] sm:$0xff]
    %v1746 = vld [vmem:[#allocation10 + $0x90] sm:$0xff]
    %v1747 = vld [vmem:[#allocation10 + $0x98] sm:$0xff]
    %v1748 = vld [vmem:[#allocation10 + $0xa0] sm:$0xff]
    %v1749 = vld [vmem:[#allocation10 + $0xa8] sm:$0xff]
    %v1750 = vld [vmem:[#allocation10 + $0xb0] sm:$0xff]
    %v1751 = vld [vmem:[#allocation10 + $0xb8] sm:$0xff]
    %v1752 = vld [vmem:[#allocation10 + $0xc0] sm:$0xff]
    %v1753 = vld [vmem:[#allocation10 + $0xc8] sm:$0xff]
    %v1754 = vld [vmem:[#allocation10 + $0xd0] sm:$0xff]
    %v1755 = vld [vmem:[#allocation10 + $0xd8] sm:$0xff]
    %v1756 = vld [vmem:[#allocation10 + $0xe0] sm:$0xff]
    %v1757 = vld [vmem:[#allocation10 + $0xe8] sm:$0xff]
    %v1758 = vld [vmem:[#allocation10 + $0xf0] sm:$0xff]
    %v1759 = vld [vmem:[#allocation10 + $0xf8] sm:$0xff]
    %v1792 = vunpack.c.l.b16 %v1728
    %v1793 = vunpack.c.h.b16 %v1728
    %v1794 = vunpack.c.l.b16 %v1729
    %v1795 = vunpack.c.h.b16 %v1729
    %v1796 = vunpack.c.l.b16 %v1730
    %v1797 = vunpack.c.h.b16 %v1730
    %v1798 = vunpack.c.l.b16 %v1731
    %v1799 = vunpack.c.h.b16 %v1731
    %v1800 = vunpack.c.l.b16 %v1732
    %v1801 = vunpack.c.h.b16 %v1732
    %v1802 = vunpack.c.l.b16 %v1733
    %v1803 = vunpack.c.h.b16 %v1733
    %v1804 = vunpack.c.l.b16 %v1734
    %v1805 = vunpack.c.h.b16 %v1734
    %v1806 = vunpack.c.l.b16 %v1735
    %v1807 = vunpack.c.h.b16 %v1735
    %v1808 = vunpack.c.l.b16 %v1736
    %v1809 = vunpack.c.h.b16 %v1736
    %v1810 = vunpack.c.l.b16 %v1737
    %v1811 = vunpack.c.h.b16 %v1737
    %v1812 = vunpack.c.l.b16 %v1738
    %v1813 = vunpack.c.h.b16 %v1738
    %v1814 = vunpack.c.l.b16 %v1739
    %v1815 = vunpack.c.h.b16 %v1739
    %v1816 = vunpack.c.l.b16 %v1740
    %v1817 = vunpack.c.h.b16 %v1740
    %v1818 = vunpack.c.l.b16 %v1741
    %v1819 = vunpack.c.h.b16 %v1741
    %v1820 = vunpack.c.l.b16 %v1742
    %v1821 = vunpack.c.h.b16 %v1742
    %v1822 = vunpack.c.l.b16 %v1743
    %v1823 = vunpack.c.h.b16 %v1743
    %v1824 = vunpack.c.l.b16 %v1744
    %v1825 = vunpack.c.h.b16 %v1744
    %v1826 = vunpack.c.l.b16 %v1745
    %v1827 = vunpack.c.h.b16 %v1745
    %v1828 = vunpack.c.l.b16 %v1746
    %v1829 = vunpack.c.h.b16 %v1746
    %v1830 = vunpack.c.l.b16 %v1747
    %v1831 = vunpack.c.h.b16 %v1747
    %v1832 = vunpack.c.l.b16 %v1748
    %v1833 = vunpack.c.h.b16 %v1748
    %v1834 = vunpack.c.l.b16 %v1749
    %v1835 = vunpack.c.h.b16 %v1749
    %v1836 = vunpack.c.l.b16 %v1750
    %v1837 = vunpack.c.h.b16 %v1750
    %v1838 = vunpack.c.l.b16 %v1751
    %v1839 = vunpack.c.h.b16 %v1751
    %v1840 = vunpack.c.l.b16 %v1752
    %v1841 = vunpack.c.h.b16 %v1752
    %v1842 = vunpack.c.l.b16 %v1753
    %v1843 = vunpack.c.h.b16 %v1753
    %v1844 = vunpack.c.l.b16 %v1754
    %v1845 = vunpack.c.h.b16 %v1754
    %v1846 = vunpack.c.l.b16 %v1755
    %v1847 = vunpack.c.h.b16 %v1755
    %v1848 = vunpack.c.l.b16 %v1756
    %v1849 = vunpack.c.h.b16 %v1756
    %v1850 = vunpack.c.l.b16 %v1757
    %v1851 = vunpack.c.h.b16 %v1757
    %v1852 = vunpack.c.l.b16 %v1758
    %v1853 = vunpack.c.h.b16 %v1758
    %v1854 = vunpack.c.l.b16 %v1759
    %v1855 = vunpack.c.h.b16 %v1759
    %v1856 = vpack.c.b16 %v1796, %v1792
    %v1857 = vpack.c.b16 %v1797, %v1793
    %v1858 = vpack.c.b16 %v1798, %v1794
    %v1859 = vpack.c.b16 %v1799, %v1795
    %v1860 = vpack.c.b16 %v1804, %v1800
    %v1861 = vpack.c.b16 %v1805, %v1801
    %v1862 = vpack.c.b16 %v1806, %v1802
    %v1863 = vpack.c.b16 %v1807, %v1803
    %v1864 = vpack.c.b16 %v1812, %v1808
    %v1865 = vpack.c.b16 %v1813, %v1809
    %v1866 = vpack.c.b16 %v1814, %v1810
    %v1867 = vpack.c.b16 %v1815, %v1811
    %v1868 = vpack.c.b16 %v1820, %v1816
    %v1869 = vpack.c.b16 %v1821, %v1817
    %v1870 = vpack.c.b16 %v1822, %v1818
    %v1871 = vpack.c.b16 %v1823, %v1819
    %v1872 = vpack.c.b16 %v1828, %v1824
    %v1873 = vpack.c.b16 %v1829, %v1825
    %v1874 = vpack.c.b16 %v1830, %v1826
    %v1875 = vpack.c.b16 %v1831, %v1827
    %v1876 = vpack.c.b16 %v1836, %v1832
    %v1877 = vpack.c.b16 %v1837, %v1833
    %v1878 = vpack.c.b16 %v1838, %v1834
    %v1879 = vpack.c.b16 %v1839, %v1835
    %v1880 = vpack.c.b16 %v1844, %v1840
    %v1881 = vpack.c.b16 %v1845, %v1841
    %v1882 = vpack.c.b16 %v1846, %v1842
    %v1883 = vpack.c.b16 %v1847, %v1843
    %v1884 = vpack.c.b16 %v1852, %v1848
    %v1885 = vpack.c.b16 %v1853, %v1849
    %v1886 = vpack.c.b16 %v1854, %v1850
    %v1887 = vpack.c.b16 %v1855, %v1851
    %1920 = vmatprep.subr.bf16.mxu0 %v1857
    %1921 = vmatpush1.bf16.msra.mxu0 %v1856
    %1922 = vmatprep.subr.bf16.mxu0 %v1861
    %1923 = vmatpush1.bf16.msra.mxu0 %v1860
    %1924 = vmatprep.subr.bf16.mxu0 %v1865
    %1925 = vmatpush1.bf16.msra.mxu0 %v1864
    %1926 = vmatprep.subr.bf16.mxu0 %v1869
    %1927 = vmatpush1.bf16.msra.mxu0 %v1868
    %1928 = vmatprep.subr.bf16.mxu0 %v1873
    %1929 = vmatpush1.bf16.msra.mxu0 %v1872
    %1930 = vmatprep.subr.bf16.mxu0 %v1877
    %1931 = vmatpush1.bf16.msra.mxu0 %v1876
    %1932 = vmatprep.subr.bf16.mxu0 %v1881
    %1933 = vmatpush1.bf16.msra.mxu0 %v1880
    %1934 = vmatprep.subr.bf16.mxu0 %v1885
    %1935 = vmatpush1.bf16.msra.mxu0 %v1884
    %1936 = vmatprep.subr.bf16.mxu0 0
    %1937 = vmatpush1.bf16.msra.mxu0 0
    %1938 = vmatprep.subr.bf16.mxu0 0
    %1939 = vmatpush1.bf16.msra.mxu0 0
    %1940 = vmatprep.subr.bf16.mxu0 0
    %1941 = vmatpush1.bf16.msra.mxu0 0
    %1942 = vmatprep.subr.bf16.mxu0 0
    %1943 = vmatpush1.bf16.msra.mxu0 0
    %1944 = vmatprep.subr.bf16.mxu0 0
    %1945 = vmatpush1.bf16.msra.mxu0 0
    %1946 = vmatprep.subr.bf16.mxu0 0
    %1947 = vmatpush1.bf16.msra.mxu0 0
    %1948 = vmatprep.subr.bf16.mxu0 0
    %1949 = vmatpush1.bf16.msra.mxu0 0
    %1950 = vmatprep.subr.bf16.mxu0 0
    %1951 = vmatpush1.bf16.msra.mxu0 0
    %1952 = vmatprep.mubr.bf16.mxu0 0
    %1953 = vmatmul.mubr.bf16.gmra.mrb[0].mxu0 %v1727
    %v1954 = vpop.f32.mrb[0].mxu0
    %v1955 = vadd.f32 0.0, %v1954
    %v1956 = vpop.f32.mrb[0].mxu0
    %v1957 = vadd.f32 0.0, %v1956
    %v1958 = vpop.f32.mrb[0].mxu0
    %v1959 = vpop.f32.mrb[0].mxu0
    %1960 = vdwg.mxu0
    %1961 = vmatprep.subr.bf16.mxu0 %v1859
    %1962 = vmatpush1.bf16.msra.mxu0 %v1858
    %1963 = vmatprep.subr.bf16.mxu0 %v1863
    %1964 = vmatpush1.bf16.msra.mxu0 %v1862
    %1965 = vmatprep.subr.bf16.mxu0 %v1867
    %1966 = vmatpush1.bf16.msra.mxu0 %v1866
    %1967 = vmatprep.subr.bf16.mxu0 %v1871
    %1968 = vmatpush1.bf16.msra.mxu0 %v1870
    %1969 = vmatprep.subr.bf16.mxu0 %v1875
    %1970 = vmatpush1.bf16.msra.mxu0 %v1874
    %1971 = vmatprep.subr.bf16.mxu0 %v1879
    %1972 = vmatpush1.bf16.msra.mxu0 %v1878
    %1973 = vmatprep.subr.bf16.mxu0 %v1883
    %1974 = vmatpush1.bf16.msra.mxu0 %v1882
    %1975 = vmatprep.subr.bf16.mxu0 %v1887
    %1976 = vmatpush1.bf16.msra.mxu0 %v1886
    %1977 = vmatprep.subr.bf16.mxu0 0
    %1978 = vmatpush1.bf16.msra.mxu0 0
    %1979 = vmatprep.subr.bf16.mxu0 0
    %1980 = vmatpush1.bf16.msra.mxu0 0
    %1981 = vmatprep.subr.bf16.mxu0 0
    %1982 = vmatpush1.bf16.msra.mxu0 0
    %1983 = vmatprep.subr.bf16.mxu0 0
    %1984 = vmatpush1.bf16.msra.mxu0 0
    %1985 = vmatprep.subr.bf16.mxu0 0
    %1986 = vmatpush1.bf16.msra.mxu0 0
    %1987 = vmatprep.subr.bf16.mxu0 0
    %1988 = vmatpush1.bf16.msra.mxu0 0
    %1989 = vmatprep.subr.bf16.mxu0 0
    %1990 = vmatpush1.bf16.msra.mxu0 0
    %1991 = vmatprep.subr.bf16.mxu0 0
    %1992 = vmatpush1.bf16.msra.mxu0 0
    %1993 = vmatprep.mubr.bf16.mxu0 0
    %1994 = vmatmul.mubr.bf16.gmra.mrb[0].mxu0 %v1727
    %v1995 = vpop.f32.mrb[0].mxu0
    %v1996 = vadd.f32 0.0, %v1995
    %v1997 = vpop.f32.mrb[0].mxu0
    %v1998 = vadd.f32 0.0, %v1997
    %v1999 = vpop.f32.mrb[0].mxu0
    %v2000 = vpop.f32.mrb[0].mxu0
    %2001 = vdwg.mxu0
    %v2002 = vadd.f32 %v1723, %v1955
    %v2003 = vadd.f32 %v1724, %v1957
    %v2004 = vadd.f32 %v1725, %v1996
    %v2005 = vadd.f32 %v1726, %v1998
    %v2006 = vmul.f32 %v2002, 0.5
    %v2007 = vtanh.pop %v2006
    %v2008 = vmul.f32 %v2007, 0.5
    %v2009 = vadd.f32 %v2008, 0.5
    %v2010 = vmul.f32 %v2003, 0.5
    %v2011 = vtanh.pop %v2010
    %v2012 = vmul.f32 %v2011, 0.5
    %v2013 = vadd.f32 %v2012, 0.5
    %v2014 = vtanh.pop %v2004
    %v2015 = vmul.f32 %v2005, 0.5
    %v2016 = vtanh.pop %v2015
    %v2017 = vmul.f32 %v2016, 0.5
    %v2018 = vadd.f32 %v2017, 0.5
    %v2019 = vmul.f32 %v2013, %v1721
    %v2020 = vmul.f32 %v2009, %v2014
    %v2021 = vadd.f32 %v2019, %v2020
    %v2022 = vtanh.pop %v2021
    %v2023 = vmul.f32 %v2018, %v2022
    %2024 = vst [vmem:[#allocation3] sm:$0xff] %v2023
    %2025 = vst [vmem:[#allocation4] sm:$0xff] %v2021
    %v2026 = vpack.c.bf16 %v2023, %v2023
    %s2027 = scalar_lea.vmem [#allocation11], 16
    %2028 = vst [vmem:[%s2027] sm:$0xf] %v2026
    %v2029 = vld [vmem:[#allocation3] sm:$0xff]
    %v2030 = vld [vmem:[#allocation4] sm:$0xff]
    %s2031 = scalar_lea.vmem [#allocation2], 160
    %v2032 = vld [vmem:[%s2031] sm:$0xff]
    %v2033 = vld [vmem:[%s2031 + $0x8] sm:$0xff]
    %v2034 = vld [vmem:[%s2031 + $0x10] sm:$0xff]
    %v2035 = vld [vmem:[%s2031 + $0x18] sm:$0xff]
    %v2036 = vpack.c.bf16 %v2029, %v2029
    %v2037 = vld [vmem:[#allocation10] sm:$0xff]
    %v2038 = vld [vmem:[#allocation10 + $0x8] sm:$0xff]
    %v2039 = vld [vmem:[#allocation10 + $0x10] sm:$0xff]
    %v2040 = vld [vmem:[#allocation10 + $0x18] sm:$0xff]
    %v2041 = vld [vmem:[#allocation10 + $0x20] sm:$0xff]
    %v2042 = vld [vmem:[#allocation10 + $0x28] sm:$0xff]
    %v2043 = vld [vmem:[#allocation10 + $0x30] sm:$0xff]
    %v2044 = vld [vmem:[#allocation10 + $0x38] sm:$0xff]
    %v2045 = vld [vmem:[#allocation10 + $0x40] sm:$0xff]
    %v2046 = vld [vmem:[#allocation10 + $0x48] sm:$0xff]
    %v2047 = vld [vmem:[#allocation10 + $0x50] sm:$0xff]
    %v2048 = vld [vmem:[#allocation10 + $0x58] sm:$0xff]
    %v2049 = vld [vmem:[#allocation10 + $0x60] sm:$0xff]
    %v2050 = vld [vmem:[#allocation10 + $0x68] sm:$0xff]
    %v2051 = vld [vmem:[#allocation10 + $0x70] sm:$0xff]
    %v2052 = vld [vmem:[#allocation10 + $0x78] sm:$0xff]
    %v2053 = vld [vmem:[#allocation10 + $0x80] sm:$0xff]
    %v2054 = vld [vmem:[#allocation10 + $0x88] sm:$0xff]
    %v2055 = vld [vmem:[#allocation10 + $0x90] sm:$0xff]
    %v2056 = vld [vmem:[#allocation10 + $0x98] sm:$0xff]
    %v2057 = vld [vmem:[#allocation10 + $0xa0] sm:$0xff]
    %v2058 = vld [vmem:[#allocation10 + $0xa8] sm:$0xff]
    %v2059 = vld [vmem:[#allocation10 + $0xb0] sm:$0xff]
    %v2060 = vld [vmem:[#allocation10 + $0xb8] sm:$0xff]
    %v2061 = vld [vmem:[#allocation10 + $0xc0] sm:$0xff]
    %v2062 = vld [vmem:[#allocation10 + $0xc8] sm:$0xff]
    %v2063 = vld [vmem:[#allocation10 + $0xd0] sm:$0xff]
    %v2064 = vld [vmem:[#allocation10 + $0xd8] sm:$0xff]
    %v2065 = vld [vmem:[#allocation10 + $0xe0] sm:$0xff]
    %v2066 = vld [vmem:[#allocation10 + $0xe8] sm:$0xff]
    %v2067 = vld [vmem:[#allocation10 + $0xf0] sm:$0xff]
    %v2068 = vld [vmem:[#allocation10 + $0xf8] sm:$0xff]
    %v2101 = vunpack.c.l.b16 %v2037
    %v2102 = vunpack.c.h.b16 %v2037
    %v2103 = vunpack.c.l.b16 %v2038
    %v2104 = vunpack.c.h.b16 %v2038
    %v2105 = vunpack.c.l.b16 %v2039
    %v2106 = vunpack.c.h.b16 %v2039
    %v2107 = vunpack.c.l.b16 %v2040
    %v2108 = vunpack.c.h.b16 %v2040
    %v2109 = vunpack.c.l.b16 %v2041
    %v2110 = vunpack.c.h.b16 %v2041
    %v2111 = vunpack.c.l.b16 %v2042
    %v2112 = vunpack.c.h.b16 %v2042
    %v2113 = vunpack.c.l.b16 %v2043
    %v2114 = vunpack.c.h.b16 %v2043
    %v2115 = vunpack.c.l.b16 %v2044
    %v2116 = vunpack.c.h.b16 %v2044
    %v2117 = vunpack.c.l.b16 %v2045
    %v2118 = vunpack.c.h.b16 %v2045
    %v2119 = vunpack.c.l.b16 %v2046
    %v2120 = vunpack.c.h.b16 %v2046
    %v2121 = vunpack.c.l.b16 %v2047
    %v2122 = vunpack.c.h.b16 %v2047
    %v2123 = vunpack.c.l.b16 %v2048
    %v2124 = vunpack.c.h.b16 %v2048
    %v2125 = vunpack.c.l.b16 %v2049
    %v2126 = vunpack.c.h.b16 %v2049
    %v2127 = vunpack.c.l.b16 %v2050
    %v2128 = vunpack.c.h.b16 %v2050
    %v2129 = vunpack.c.l.b16 %v2051
    %v2130 = vunpack.c.h.b16 %v2051
    %v2131 = vunpack.c.l.b16 %v2052
    %v2132 = vunpack.c.h.b16 %v2052
    %v2133 = vunpack.c.l.b16 %v2053
    %v2134 = vunpack.c.h.b16 %v2053
    %v2135 = vunpack.c.l.b16 %v2054
    %v2136 = vunpack.c.h.b16 %v2054
    %v2137 = vunpack.c.l.b16 %v2055
    %v2138 = vunpack.c.h.b16 %v2055
    %v2139 = vunpack.c.l.b16 %v2056
    %v2140 = vunpack.c.h.b16 %v2056
    %v2141 = vunpack.c.l.b16 %v2057
    %v2142 = vunpack.c.h.b16 %v2057
    %v2143 = vunpack.c.l.b16 %v2058
    %v2144 = vunpack.c.h.b16 %v2058
    %v2145 = vunpack.c.l.b16 %v2059
    %v2146 = vunpack.c.h.b16 %v2059
    %v2147 = vunpack.c.l.b16 %v2060
    %v2148 = vunpack.c.h.b16 %v2060
    %v2149 = vunpack.c.l.b16 %v2061
    %v2150 = vunpack.c.h.b16 %v2061
    %v2151 = vunpack.c.l.b16 %v2062
    %v2152 = vunpack.c.h.b16 %v2062
    %v2153 = vunpack.c.l.b16 %v2063
    %v2154 = vunpack.c.h.b16 %v2063
    %v2155 = vunpack.c.l.b16 %v2064
    %v2156 = vunpack.c.h.b16 %v2064
    %v2157 = vunpack.c.l.b16 %v2065
    %v2158 = vunpack.c.h.b16 %v2065
    %v2159 = vunpack.c.l.b16 %v2066
    %v2160 = vunpack.c.h.b16 %v2066
    %v2161 = vunpack.c.l.b16 %v2067
    %v2162 = vunpack.c.h.b16 %v2067
    %v2163 = vunpack.c.l.b16 %v2068
    %v2164 = vunpack.c.h.b16 %v2068
    %v2165 = vpack.c.b16 %v2105, %v2101
    %v2166 = vpack.c.b16 %v2106, %v2102
    %v2167 = vpack.c.b16 %v2107, %v2103
    %v2168 = vpack.c.b16 %v2108, %v2104
    %v2169 = vpack.c.b16 %v2113, %v2109
    %v2170 = vpack.c.b16 %v2114, %v2110
    %v2171 = vpack.c.b16 %v2115, %v2111
    %v2172 = vpack.c.b16 %v2116, %v2112
    %v2173 = vpack.c.b16 %v2121, %v2117
    %v2174 = vpack.c.b16 %v2122, %v2118
    %v2175 = vpack.c.b16 %v2123, %v2119
    %v2176 = vpack.c.b16 %v2124, %v2120
    %v2177 = vpack.c.b16 %v2129, %v2125
    %v2178 = vpack.c.b16 %v2130, %v2126
    %v2179 = vpack.c.b16 %v2131, %v2127
    %v2180 = vpack.c.b16 %v2132, %v2128
    %v2181 = vpack.c.b16 %v2137, %v2133
    %v2182 = vpack.c.b16 %v2138, %v2134
    %v2183 = vpack.c.b16 %v2139, %v2135
    %v2184 = vpack.c.b16 %v2140, %v2136
    %v2185 = vpack.c.b16 %v2145, %v2141
    %v2186 = vpack.c.b16 %v2146, %v2142
    %v2187 = vpack.c.b16 %v2147, %v2143
    %v2188 = vpack.c.b16 %v2148, %v2144
    %v2189 = vpack.c.b16 %v2153, %v2149
    %v2190 = vpack.c.b16 %v2154, %v2150
    %v2191 = vpack.c.b16 %v2155, %v2151
    %v2192 = vpack.c.b16 %v2156, %v2152
    %v2193 = vpack.c.b16 %v2161, %v2157
    %v2194 = vpack.c.b16 %v2162, %v2158
    %v2195 = vpack.c.b16 %v2163, %v2159
    %v2196 = vpack.c.b16 %v2164, %v2160
    %2229 = vmatprep.subr.bf16.mxu0 %v2166
    %2230 = vmatpush1.bf16.msra.mxu0 %v2165
    %2231 = vmatprep.subr.bf16.mxu0 %v2170
    %2232 = vmatpush1.bf16.msra.mxu0 %v2169
    %2233 = vmatprep.subr.bf16.mxu0 %v2174
    %2234 = vmatpush1.bf16.msra.mxu0 %v2173
    %2235 = vmatprep.subr.bf16.mxu0 %v2178
    %2236 = vmatpush1.bf16.msra.mxu0 %v2177
    %2237 = vmatprep.subr.bf16.mxu0 %v2182
    %2238 = vmatpush1.bf16.msra.mxu0 %v2181
    %2239 = vmatprep.subr.bf16.mxu0 %v2186
    %2240 = vmatpush1.bf16.msra.mxu0 %v2185
    %2241 = vmatprep.subr.bf16.mxu0 %v2190
    %2242 = vmatpush1.bf16.msra.mxu0 %v2189
    %2243 = vmatprep.subr.bf16.mxu0 %v2194
    %2244 = vmatpush1.bf16.msra.mxu0 %v2193
    %2245 = vmatprep.subr.bf16.mxu0 0
    %2246 = vmatpush1.bf16.msra.mxu0 0
    %2247 = vmatprep.subr.bf16.mxu0 0
    %2248 = vmatpush1.bf16.msra.mxu0 0
    %2249 = vmatprep.subr.bf16.mxu0 0
    %2250 = vmatpush1.bf16.msra.mxu0 0
    %2251 = vmatprep.subr.bf16.mxu0 0
    %2252 = vmatpush1.bf16.msra.mxu0 0
    %2253 = vmatprep.subr.bf16.mxu0 0
    %2254 = vmatpush1.bf16.msra.mxu0 0
    %2255 = vmatprep.subr.bf16.mxu0 0
    %2256 = vmatpush1.bf16.msra.mxu0 0
    %2257 = vmatprep.subr.bf16.mxu0 0
    %2258 = vmatpush1.bf16.msra.mxu0 0
    %2259 = vmatprep.subr.bf16.mxu0 0
    %2260 = vmatpush1.bf16.msra.mxu0 0
    %2261 = vmatprep.mubr.bf16.mxu0 0
    %2262 = vmatmul.mubr.bf16.gmra.mrb[0].mxu0 %v2036
    %v2263 = vpop.f32.mrb[0].mxu0
    %v2264 = vadd.f32 0.0, %v2263
    %v2265 = vpop.f32.mrb[0].mxu0
    %v2266 = vadd.f32 0.0, %v2265
    %v2267 = vpop.f32.mrb[0].mxu0
    %v2268 = vpop.f32.mrb[0].mxu0
    %2269 = vdwg.mxu0
    %2270 = vmatprep.subr.bf16.mxu0 %v2168
    %2271 = vmatpush1.bf16.msra.mxu0 %v2167
    %2272 = vmatprep.subr.bf16.mxu0 %v2172
    %2273 = vmatpush1.bf16.msra.mxu0 %v2171
    %2274 = vmatprep.subr.bf16.mxu0 %v2176
    %2275 = vmatpush1.bf16.msra.mxu0 %v2175
    %2276 = vmatprep.subr.bf16.mxu0 %v2180
    %2277 = vmatpush1.bf16.msra.mxu0 %v2179
    %2278 = vmatprep.subr.bf16.mxu0 %v2184
    %2279 = vmatpush1.bf16.msra.mxu0 %v2183
    %2280 = vmatprep.subr.bf16.mxu0 %v2188
    %2281 = vmatpush1.bf16.msra.mxu0 %v2187
    %2282 = vmatprep.subr.bf16.mxu0 %v2192
    %2283 = vmatpush1.bf16.msra.mxu0 %v2191
    %2284 = vmatprep.subr.bf16.mxu0 %v2196
    %2285 = vmatpush1.bf16.msra.mxu0 %v2195
    %2286 = vmatprep.subr.bf16.mxu0 0
    %2287 = vmatpush1.bf16.msra.mxu0 0
    %2288 = vmatprep.subr.bf16.mxu0 0
    %2289 = vmatpush1.bf16.msra.mxu0 0
    %2290 = vmatprep.subr.bf16.mxu0 0
    %2291 = vmatpush1.bf16.msra.mxu0 0
    %2292 = vmatprep.subr.bf16.mxu0 0
    %2293 = vmatpush1.bf16.msra.mxu0 0
    %2294 = vmatprep.subr.bf16.mxu0 0
    %2295 = vmatpush1.bf16.msra.mxu0 0
    %2296 = vmatprep.subr.bf16.mxu0 0
    %2297 = vmatpush1.bf16.msra.mxu0 0
    %2298 = vmatprep.subr.bf16.mxu0 0
    %2299 = vmatpush1.bf16.msra.mxu0 0
    %2300 = vmatprep.subr.bf16.mxu0 0
    %2301 = vmatpush1.bf16.msra.mxu0 0
    %2302 = vmatprep.mubr.bf16.mxu0 0
    %2303 = vmatmul.mubr.bf16.gmra.mrb[0].mxu0 %v2036
    %v2304 = vpop.f32.mrb[0].mxu0
    %v2305 = vadd.f32 0.0, %v2304
    %v2306 = vpop.f32.mrb[0].mxu0
    %v2307 = vadd.f32 0.0, %v2306
    %v2308 = vpop.f32.mrb[0].mxu0
    %v2309 = vpop.f32.mrb[0].mxu0
    %2310 = vdwg.mxu0
    %v2311 = vadd.f32 %v2032, %v2264
    %v2312 = vadd.f32 %v2033, %v2266
    %v2313 = vadd.f32 %v2034, %v2305
    %v2314 = vadd.f32 %v2035, %v2307
    %v2315 = vmul.f32 %v2311, 0.5
    %v2316 = vtanh.pop %v2315
    %v2317 = vmul.f32 %v2316, 0.5
    %v2318 = vadd.f32 %v2317, 0.5
    %v2319 = vmul.f32 %v2312, 0.5
    %v2320 = vtanh.pop %v2319
    %v2321 = vmul.f32 %v2320, 0.5
    %v2322 = vadd.f32 %v2321, 0.5
    %v2323 = vtanh.pop %v2313
    %v2324 = vmul.f32 %v2314, 0.5
    %v2325 = vtanh.pop %v2324
    %v2326 = vmul.f32 %v2325, 0.5
    %v2327 = vadd.f32 %v2326, 0.5
    %v2328 = vmul.f32 %v2322, %v2030
    %v2329 = vmul.f32 %v2318, %v2323
    %v2330 = vadd.f32 %v2328, %v2329
    %v2331 = vtanh.pop %v2330
    %v2332 = vmul.f32 %v2327, %v2331
    %2333 = vst [vmem:[#allocation3] sm:$0xff] %v2332
    %2334 = vst [vmem:[#allocation4] sm:$0xff] %v2330
    %v2335 = vpack.c.bf16 %v2332, %v2332
    %s2336 = scalar_lea.vmem [#allocation11], 20
    %2337 = vst [vmem:[%s2336] sm:$0xf] %v2335
    %v2338 = vld [vmem:[#allocation3] sm:$0xff]
    %v2339 = vld [vmem:[#allocation4] sm:$0xff]
    %s2340 = scalar_lea.vmem [#allocation2], 192
    %v2341 = vld [vmem:[%s2340] sm:$0xff]
    %v2342 = vld [vmem:[%s2340 + $0x8] sm:$0xff]
    %v2343 = vld [vmem:[%s2340 + $0x10] sm:$0xff]
    %v2344 = vld [vmem:[%s2340 + $0x18] sm:$0xff]
    %v2345 = vpack.c.bf16 %v2338, %v2338
    %v2346 = vld [vmem:[#allocation10] sm:$0xff]
    %v2347 = vld [vmem:[#allocation10 + $0x8] sm:$0xff]
    %v2348 = vld [vmem:[#allocation10 + $0x10] sm:$0xff]
    %v2349 = vld [vmem:[#allocation10 + $0x18] sm:$0xff]
    %v2350 = vld [vmem:[#allocation10 + $0x20] sm:$0xff]
    %v2351 = vld [vmem:[#allocation10 + $0x28] sm:$0xff]
    %v2352 = vld [vmem:[#allocation10 + $0x30] sm:$0xff]
    %v2353 = vld [vmem:[#allocation10 + $0x38] sm:$0xff]
    %v2354 = vld [vmem:[#allocation10 + $0x40] sm:$0xff]
    %v2355 = vld [vmem:[#allocation10 + $0x48] sm:$0xff]
    %v2356 = vld [vmem:[#allocation10 + $0x50] sm:$0xff]
    %v2357 = vld [vmem:[#allocation10 + $0x58] sm:$0xff]
    %v2358 = vld [vmem:[#allocation10 + $0x60] sm:$0xff]
    %v2359 = vld [vmem:[#allocation10 + $0x68] sm:$0xff]
    %v2360 = vld [vmem:[#allocation10 + $0x70] sm:$0xff]
    %v2361 = vld [vmem:[#allocation10 + $0x78] sm:$0xff]
    %v2362 = vld [vmem:[#allocation10 + $0x80] sm:$0xff]
    %v2363 = vld [vmem:[#allocation10 + $0x88] sm:$0xff]
    %v2364 = vld [vmem:[#allocation10 + $0x90] sm:$0xff]
    %v2365 = vld [vmem:[#allocation10 + $0x98] sm:$0xff]
    %v2366 = vld [vmem:[#allocation10 + $0xa0] sm:$0xff]
    %v2367 = vld [vmem:[#allocation10 + $0xa8] sm:$0xff]
    %v2368 = vld [vmem:[#allocation10 + $0xb0] sm:$0xff]
    %v2369 = vld [vmem:[#allocation10 + $0xb8] sm:$0xff]
    %v2370 = vld [vmem:[#allocation10 + $0xc0] sm:$0xff]
    %v2371 = vld [vmem:[#allocation10 + $0xc8] sm:$0xff]
    %v2372 = vld [vmem:[#allocation10 + $0xd0] sm:$0xff]
    %v2373 = vld [vmem:[#allocation10 + $0xd8] sm:$0xff]
    %v2374 = vld [vmem:[#allocation10 + $0xe0] sm:$0xff]
    %v2375 = vld [vmem:[#allocation10 + $0xe8] sm:$0xff]
    %v2376 = vld [vmem:[#allocation10 + $0xf0] sm:$0xff]
    %v2377 = vld [vmem:[#allocation10 + $0xf8] sm:$0xff]
    %v2410 = vunpack.c.l.b16 %v2346
    %v2411 = vunpack.c.h.b16 %v2346
    %v2412 = vunpack.c.l.b16 %v2347
    %v2413 = vunpack.c.h.b16 %v2347
    %v2414 = vunpack.c.l.b16 %v2348
    %v2415 = vunpack.c.h.b16 %v2348
    %v2416 = vunpack.c.l.b16 %v2349
    %v2417 = vunpack.c.h.b16 %v2349
    %v2418 = vunpack.c.l.b16 %v2350
    %v2419 = vunpack.c.h.b16 %v2350
    %v2420 = vunpack.c.l.b16 %v2351
    %v2421 = vunpack.c.h.b16 %v2351
    %v2422 = vunpack.c.l.b16 %v2352
    %v2423 = vunpack.c.h.b16 %v2352
    %v2424 = vunpack.c.l.b16 %v2353
    %v2425 = vunpack.c.h.b16 %v2353
    %v2426 = vunpack.c.l.b16 %v2354
    %v2427 = vunpack.c.h.b16 %v2354
    %v2428 = vunpack.c.l.b16 %v2355
    %v2429 = vunpack.c.h.b16 %v2355
    %v2430 = vunpack.c.l.b16 %v2356
    %v2431 = vunpack.c.h.b16 %v2356
    %v2432 = vunpack.c.l.b16 %v2357
    %v2433 = vunpack.c.h.b16 %v2357
    %v2434 = vunpack.c.l.b16 %v2358
    %v2435 = vunpack.c.h.b16 %v2358
    %v2436 = vunpack.c.l.b16 %v2359
    %v2437 = vunpack.c.h.b16 %v2359
    %v2438 = vunpack.c.l.b16 %v2360
    %v2439 = vunpack.c.h.b16 %v2360
    %v2440 = vunpack.c.l.b16 %v2361
    %v2441 = vunpack.c.h.b16 %v2361
    %v2442 = vunpack.c.l.b16 %v2362
    %v2443 = vunpack.c.h.b16 %v2362
    %v2444 = vunpack.c.l.b16 %v2363
    %v2445 = vunpack.c.h.b16 %v2363
    %v2446 = vunpack.c.l.b16 %v2364
    %v2447 = vunpack.c.h.b16 %v2364
    %v2448 = vunpack.c.l.b16 %v2365
    %v2449 = vunpack.c.h.b16 %v2365
    %v2450 = vunpack.c.l.b16 %v2366
    %v2451 = vunpack.c.h.b16 %v2366
    %v2452 = vunpack.c.l.b16 %v2367
    %v2453 = vunpack.c.h.b16 %v2367
    %v2454 = vunpack.c.l.b16 %v2368
    %v2455 = vunpack.c.h.b16 %v2368
    %v2456 = vunpack.c.l.b16 %v2369
    %v2457 = vunpack.c.h.b16 %v2369
    %v2458 = vunpack.c.l.b16 %v2370
    %v2459 = vunpack.c.h.b16 %v2370
    %v2460 = vunpack.c.l.b16 %v2371
    %v2461 = vunpack.c.h.b16 %v2371
    %v2462 = vunpack.c.l.b16 %v2372
    %v2463 = vunpack.c.h.b16 %v2372
    %v2464 = vunpack.c.l.b16 %v2373
    %v2465 = vunpack.c.h.b16 %v2373
    %v2466 = vunpack.c.l.b16 %v2374
    %v2467 = vunpack.c.h.b16 %v2374
    %v2468 = vunpack.c.l.b16 %v2375
    %v2469 = vunpack.c.h.b16 %v2375
    %v2470 = vunpack.c.l.b16 %v2376
    %v2471 = vunpack.c.h.b16 %v2376
    %v2472 = vunpack.c.l.b16 %v2377
    %v2473 = vunpack.c.h.b16 %v2377
    %v2474 = vpack.c.b16 %v2414, %v2410
    %v2475 = vpack.c.b16 %v2415, %v2411
    %v2476 = vpack.c.b16 %v2416, %v2412
    %v2477 = vpack.c.b16 %v2417, %v2413
    %v2478 = vpack.c.b16 %v2422, %v2418
    %v2479 = vpack.c.b16 %v2423, %v2419
    %v2480 = vpack.c.b16 %v2424, %v2420
    %v2481 = vpack.c.b16 %v2425, %v2421
    %v2482 = vpack.c.b16 %v2430, %v2426
    %v2483 = vpack.c.b16 %v2431, %v2427
    %v2484 = vpack.c.b16 %v2432, %v2428
    %v2485 = vpack.c.b16 %v2433, %v2429
    %v2486 = vpack.c.b16 %v2438, %v2434
    %v2487 = vpack.c.b16 %v2439, %v2435
    %v2488 = vpack.c.b16 %v2440, %v2436
    %v2489 = vpack.c.b16 %v2441, %v2437
    %v2490 = vpack.c.b16 %v2446, %v2442
    %v2491 = vpack.c.b16 %v2447, %v2443
    %v2492 = vpack.c.b16 %v2448, %v2444
    %v2493 = vpack.c.b16 %v2449, %v2445
    %v2494 = vpack.c.b16 %v2454, %v2450
    %v2495 = vpack.c.b16 %v2455, %v2451
    %v2496 = vpack.c.b16 %v2456, %v2452
    %v2497 = vpack.c.b16 %v2457, %v2453
    %v2498 = vpack.c.b16 %v2462, %v2458
    %v2499 = vpack.c.b16 %v2463, %v2459
    %v2500 = vpack.c.b16 %v2464, %v2460
    %v2501 = vpack.c.b16 %v2465, %v2461
    %v2502 = vpack.c.b16 %v2470, %v2466
    %v2503 = vpack.c.b16 %v2471, %v2467
    %v2504 = vpack.c.b16 %v2472, %v2468
    %v2505 = vpack.c.b16 %v2473, %v2469
    %2538 = vmatprep.subr.bf16.mxu0 %v2475
    %2539 = vmatpush1.bf16.msra.mxu0 %v2474
    %2540 = vmatprep.subr.bf16.mxu0 %v2479
    %2541 = vmatpush1.bf16.msra.mxu0 %v2478
    %2542 = vmatprep.subr.bf16.mxu0 %v2483
    %2543 = vmatpush1.bf16.msra.mxu0 %v2482
    %2544 = vmatprep.subr.bf16.mxu0 %v2487
    %2545 = vmatpush1.bf16.msra.mxu0 %v2486
    %2546 = vmatprep.subr.bf16.mxu0 %v2491
    %2547 = vmatpush1.bf16.msra.mxu0 %v2490
    %2548 = vmatprep.subr.bf16.mxu0 %v2495
    %2549 = vmatpush1.bf16.msra.mxu0 %v2494
    %2550 = vmatprep.subr.bf16.mxu0 %v2499
    %2551 = vmatpush1.bf16.msra.mxu0 %v2498
    %2552 = vmatprep.subr.bf16.mxu0 %v2503
    %2553 = vmatpush1.bf16.msra.mxu0 %v2502
    %2554 = vmatprep.subr.bf16.mxu0 0
    %2555 = vmatpush1.bf16.msra.mxu0 0
    %2556 = vmatprep.subr.bf16.mxu0 0
    %2557 = vmatpush1.bf16.msra.mxu0 0
    %2558 = vmatprep.subr.bf16.mxu0 0
    %2559 = vmatpush1.bf16.msra.mxu0 0
    %2560 = vmatprep.subr.bf16.mxu0 0
    %2561 = vmatpush1.bf16.msra.mxu0 0
    %2562 = vmatprep.subr.bf16.mxu0 0
    %2563 = vmatpush1.bf16.msra.mxu0 0
    %2564 = vmatprep.subr.bf16.mxu0 0
    %2565 = vmatpush1.bf16.msra.mxu0 0
    %2566 = vmatprep.subr.bf16.mxu0 0
    %2567 = vmatpush1.bf16.msra.mxu0 0
    %2568 = vmatprep.subr.bf16.mxu0 0
    %2569 = vmatpush1.bf16.msra.mxu0 0
    %2570 = vmatprep.mubr.bf16.mxu0 0
    %2571 = vmatmul.mubr.bf16.gmra.mrb[0].mxu0 %v2345
    %v2572 = vpop.f32.mrb[0].mxu0
    %v2573 = vadd.f32 0.0, %v2572
    %v2574 = vpop.f32.mrb[0].mxu0
    %v2575 = vadd.f32 0.0, %v2574
    %v2576 = vpop.f32.mrb[0].mxu0
    %v2577 = vpop.f32.mrb[0].mxu0
    %2578 = vdwg.mxu0
    %2579 = vmatprep.subr.bf16.mxu0 %v2477
    %2580 = vmatpush1.bf16.msra.mxu0 %v2476
    %2581 = vmatprep.subr.bf16.mxu0 %v2481
    %2582 = vmatpush1.bf16.msra.mxu0 %v2480
    %2583 = vmatprep.subr.bf16.mxu0 %v2485
    %2584 = vmatpush1.bf16.msra.mxu0 %v2484
    %2585 = vmatprep.subr.bf16.mxu0 %v2489
    %2586 = vmatpush1.bf16.msra.mxu0 %v2488
    %2587 = vmatprep.subr.bf16.mxu0 %v2493
    %2588 = vmatpush1.bf16.msra.mxu0 %v2492
    %2589 = vmatprep.subr.bf16.mxu0 %v2497
    %2590 = vmatpush1.bf16.msra.mxu0 %v2496
    %2591 = vmatprep.subr.bf16.mxu0 %v2501
    %2592 = vmatpush1.bf16.msra.mxu0 %v2500
    %2593 = vmatprep.subr.bf16.mxu0 %v2505
    %2594 = vmatpush1.bf16.msra.mxu0 %v2504
    %2595 = vmatprep.subr.bf16.mxu0 0
    %2596 = vmatpush1.bf16.msra.mxu0 0
    %2597 = vmatprep.subr.bf16.mxu0 0
    %2598 = vmatpush1.bf16.msra.mxu0 0
    %2599 = vmatprep.subr.bf16.mxu0 0
    %2600 = vmatpush1.bf16.msra.mxu0 0
    %2601 = vmatprep.subr.bf16.mxu0 0
    %2602 = vmatpush1.bf16.msra.mxu0 0
    %2603 = vmatprep.subr.bf16.mxu0 0
    %2604 = vmatpush1.bf16.msra.mxu0 0
    %2605 = vmatprep.subr.bf16.mxu0 0
    %2606 = vmatpush1.bf16.msra.mxu0 0
    %2607 = vmatprep.subr.bf16.mxu0 0
    %2608 = vmatpush1.bf16.msra.mxu0 0
    %2609 = vmatprep.subr.bf16.mxu0 0
    %2610 = vmatpush1.bf16.msra.mxu0 0
    %2611 = vmatprep.mubr.bf16.mxu0 0
    %2612 = vmatmul.mubr.bf16.gmra.mrb[0].mxu0 %v2345
    %v2613 = vpop.f32.mrb[0].mxu0
    %v2614 = vadd.f32 0.0, %v2613
    %v2615 = vpop.f32.mrb[0].mxu0
    %v2616 = vadd.f32 0.0, %v2615
    %v2617 = vpop.f32.mrb[0].mxu0
    %v2618 = vpop.f32.mrb[0].mxu0
    %2619 = vdwg.mxu0
    %v2620 = vadd.f32 %v2341, %v2573
    %v2621 = vadd.f32 %v2342, %v2575
    %v2622 = vadd.f32 %v2343, %v2614
    %v2623 = vadd.f32 %v2344, %v2616
    %v2624 = vmul.f32 %v2620, 0.5
    %v2625 = vtanh.pop %v2624
    %v2626 = vmul.f32 %v2625, 0.5
    %v2627 = vadd.f32 %v2626, 0.5
    %v2628 = vmul.f32 %v2621, 0.5
    %v2629 = vtanh.pop %v2628
    %v2630 = vmul.f32 %v2629, 0.5
    %v2631 = vadd.f32 %v2630, 0.5
    %v2632 = vtanh.pop %v2622
    %v2633 = vmul.f32 %v2623, 0.5
    %v2634 = vtanh.pop %v2633
    %v2635 = vmul.f32 %v2634, 0.5
    %v2636 = vadd.f32 %v2635, 0.5
    %v2637 = vmul.f32 %v2631, %v2339
    %v2638 = vmul.f32 %v2627, %v2632
    %v2639 = vadd.f32 %v2637, %v2638
    %v2640 = vtanh.pop %v2639
    %v2641 = vmul.f32 %v2636, %v2640
    %2642 = vst [vmem:[#allocation3] sm:$0xff] %v2641
    %2643 = vst [vmem:[#allocation4] sm:$0xff] %v2639
    %v2644 = vpack.c.bf16 %v2641, %v2641
    %s2645 = scalar_lea.vmem [#allocation11], 24
    %2646 = vst [vmem:[%s2645] sm:$0xf] %v2644
    %v2647 = vld [vmem:[#allocation3] sm:$0xff]
    %v2648 = vld [vmem:[#allocation4] sm:$0xff]
    %s2649 = scalar_lea.vmem [#allocation2], 224
    %v2650 = vld [vmem:[%s2649] sm:$0xff]
    %v2651 = vld [vmem:[%s2649 + $0x8] sm:$0xff]
    %v2652 = vld [vmem:[%s2649 + $0x10] sm:$0xff]
    %v2653 = vld [vmem:[%s2649 + $0x18] sm:$0xff]
    %v2654 = vpack.c.bf16 %v2647, %v2647
    %v2655 = vld [vmem:[#allocation10] sm:$0xff]
    %v2656 = vld [vmem:[#allocation10 + $0x8] sm:$0xff]
    %v2657 = vld [vmem:[#allocation10 + $0x10] sm:$0xff]
    %v2658 = vld [vmem:[#allocation10 + $0x18] sm:$0xff]
    %v2659 = vld [vmem:[#allocation10 + $0x20] sm:$0xff]
    %v2660 = vld [vmem:[#allocation10 + $0x28] sm:$0xff]
    %v2661 = vld [vmem:[#allocation10 + $0x30] sm:$0xff]
    %v2662 = vld [vmem:[#allocation10 + $0x38] sm:$0xff]
    %v2663 = vld [vmem:[#allocation10 + $0x40] sm:$0xff]
    %v2664 = vld [vmem:[#allocation10 + $0x48] sm:$0xff]
    %v2665 = vld [vmem:[#allocation10 + $0x50] sm:$0xff]
    %v2666 = vld [vmem:[#allocation10 + $0x58] sm:$0xff]
    %v2667 = vld [vmem:[#allocation10 + $0x60] sm:$0xff]
    %v2668 = vld [vmem:[#allocation10 + $0x68] sm:$0xff]
    %v2669 = vld [vmem:[#allocation10 + $0x70] sm:$0xff]
    %v2670 = vld [vmem:[#allocation10 + $0x78] sm:$0xff]
    %v2671 = vld [vmem:[#allocation10 + $0x80] sm:$0xff]
    %v2672 = vld [vmem:[#allocation10 + $0x88] sm:$0xff]
    %v2673 = vld [vmem:[#allocation10 + $0x90] sm:$0xff]
    %v2674 = vld [vmem:[#allocation10 + $0x98] sm:$0xff]
    %v2675 = vld [vmem:[#allocation10 + $0xa0] sm:$0xff]
    %v2676 = vld [vmem:[#allocation10 + $0xa8] sm:$0xff]
    %v2677 = vld [vmem:[#allocation10 + $0xb0] sm:$0xff]
    %v2678 = vld [vmem:[#allocation10 + $0xb8] sm:$0xff]
    %v2679 = vld [vmem:[#allocation10 + $0xc0] sm:$0xff]
    %v2680 = vld [vmem:[#allocation10 + $0xc8] sm:$0xff]
    %v2681 = vld [vmem:[#allocation10 + $0xd0] sm:$0xff]
    %v2682 = vld [vmem:[#allocation10 + $0xd8] sm:$0xff]
    %v2683 = vld [vmem:[#allocation10 + $0xe0] sm:$0xff]
    %v2684 = vld [vmem:[#allocation10 + $0xe8] sm:$0xff]
    %v2685 = vld [vmem:[#allocation10 + $0xf0] sm:$0xff]
    %v2686 = vld [vmem:[#allocation10 + $0xf8] sm:$0xff]
    %v2719 = vunpack.c.l.b16 %v2655
    %v2720 = vunpack.c.h.b16 %v2655
    %v2721 = vunpack.c.l.b16 %v2656
    %v2722 = vunpack.c.h.b16 %v2656
    %v2723 = vunpack.c.l.b16 %v2657
    %v2724 = vunpack.c.h.b16 %v2657
    %v2725 = vunpack.c.l.b16 %v2658
    %v2726 = vunpack.c.h.b16 %v2658
    %v2727 = vunpack.c.l.b16 %v2659
    %v2728 = vunpack.c.h.b16 %v2659
    %v2729 = vunpack.c.l.b16 %v2660
    %v2730 = vunpack.c.h.b16 %v2660
    %v2731 = vunpack.c.l.b16 %v2661
    %v2732 = vunpack.c.h.b16 %v2661
    %v2733 = vunpack.c.l.b16 %v2662
    %v2734 = vunpack.c.h.b16 %v2662
    %v2735 = vunpack.c.l.b16 %v2663
    %v2736 = vunpack.c.h.b16 %v2663
    %v2737 = vunpack.c.l.b16 %v2664
    %v2738 = vunpack.c.h.b16 %v2664
    %v2739 = vunpack.c.l.b16 %v2665
    %v2740 = vunpack.c.h.b16 %v2665
    %v2741 = vunpack.c.l.b16 %v2666
    %v2742 = vunpack.c.h.b16 %v2666
    %v2743 = vunpack.c.l.b16 %v2667
    %v2744 = vunpack.c.h.b16 %v2667
    %v2745 = vunpack.c.l.b16 %v2668
    %v2746 = vunpack.c.h.b16 %v2668
    %v2747 = vunpack.c.l.b16 %v2669
    %v2748 = vunpack.c.h.b16 %v2669
    %v2749 = vunpack.c.l.b16 %v2670
    %v2750 = vunpack.c.h.b16 %v2670
    %v2751 = vunpack.c.l.b16 %v2671
    %v2752 = vunpack.c.h.b16 %v2671
    %v2753 = vunpack.c.l.b16 %v2672
    %v2754 = vunpack.c.h.b16 %v2672
    %v2755 = vunpack.c.l.b16 %v2673
    %v2756 = vunpack.c.h.b16 %v2673
    %v2757 = vunpack.c.l.b16 %v2674
    %v2758 = vunpack.c.h.b16 %v2674
    %v2759 = vunpack.c.l.b16 %v2675
    %v2760 = vunpack.c.h.b16 %v2675
    %v2761 = vunpack.c.l.b16 %v2676
    %v2762 = vunpack.c.h.b16 %v2676
    %v2763 = vunpack.c.l.b16 %v2677
    %v2764 = vunpack.c.h.b16 %v2677
    %v2765 = vunpack.c.l.b16 %v2678
    %v2766 = vunpack.c.h.b16 %v2678
    %v2767 = vunpack.c.l.b16 %v2679
    %v2768 = vunpack.c.h.b16 %v2679
    %v2769 = vunpack.c.l.b16 %v2680
    %v2770 = vunpack.c.h.b16 %v2680
    %v2771 = vunpack.c.l.b16 %v2681
    %v2772 = vunpack.c.h.b16 %v2681
    %v2773 = vunpack.c.l.b16 %v2682
    %v2774 = vunpack.c.h.b16 %v2682
    %v2775 = vunpack.c.l.b16 %v2683
    %v2776 = vunpack.c.h.b16 %v2683
    %v2777 = vunpack.c.l.b16 %v2684
    %v2778 = vunpack.c.h.b16 %v2684
    %v2779 = vunpack.c.l.b16 %v2685
    %v2780 = vunpack.c.h.b16 %v2685
    %v2781 = vunpack.c.l.b16 %v2686
    %v2782 = vunpack.c.h.b16 %v2686
    %v2783 = vpack.c.b16 %v2723, %v2719
    %v2784 = vpack.c.b16 %v2724, %v2720
    %v2785 = vpack.c.b16 %v2725, %v2721
    %v2786 = vpack.c.b16 %v2726, %v2722
    %v2787 = vpack.c.b16 %v2731, %v2727
    %v2788 = vpack.c.b16 %v2732, %v2728
    %v2789 = vpack.c.b16 %v2733, %v2729
    %v2790 = vpack.c.b16 %v2734, %v2730
    %v2791 = vpack.c.b16 %v2739, %v2735
    %v2792 = vpack.c.b16 %v2740, %v2736
    %v2793 = vpack.c.b16 %v2741, %v2737
    %v2794 = vpack.c.b16 %v2742, %v2738
    %v2795 = vpack.c.b16 %v2747, %v2743
    %v2796 = vpack.c.b16 %v2748, %v2744
    %v2797 = vpack.c.b16 %v2749, %v2745
    %v2798 = vpack.c.b16 %v2750, %v2746
    %v2799 = vpack.c.b16 %v2755, %v2751
    %v2800 = vpack.c.b16 %v2756, %v2752
    %v2801 = vpack.c.b16 %v2757, %v2753
    %v2802 = vpack.c.b16 %v2758, %v2754
    %v2803 = vpack.c.b16 %v2763, %v2759
    %v2804 = vpack.c.b16 %v2764, %v2760
    %v2805 = vpack.c.b16 %v2765, %v2761
    %v2806 = vpack.c.b16 %v2766, %v2762
    %v2807 = vpack.c.b16 %v2771, %v2767
    %v2808 = vpack.c.b16 %v2772, %v2768
    %v2809 = vpack.c.b16 %v2773, %v2769
    %v2810 = vpack.c.b16 %v2774, %v2770
    %v2811 = vpack.c.b16 %v2779, %v2775
    %v2812 = vpack.c.b16 %v2780, %v2776
    %v2813 = vpack.c.b16 %v2781, %v2777
    %v2814 = vpack.c.b16 %v2782, %v2778
    %2847 = vmatprep.subr.bf16.mxu0 %v2784
    %2848 = vmatpush1.bf16.msra.mxu0 %v2783
    %2849 = vmatprep.subr.bf16.mxu0 %v2788
    %2850 = vmatpush1.bf16.msra.mxu0 %v2787
    %2851 = vmatprep.subr.bf16.mxu0 %v2792
    %2852 = vmatpush1.bf16.msra.mxu0 %v2791
    %2853 = vmatprep.subr.bf16.mxu0 %v2796
    %2854 = vmatpush1.bf16.msra.mxu0 %v2795
    %2855 = vmatprep.subr.bf16.mxu0 %v2800
    %2856 = vmatpush1.bf16.msra.mxu0 %v2799
    %2857 = vmatprep.subr.bf16.mxu0 %v2804
    %2858 = vmatpush1.bf16.msra.mxu0 %v2803
    %2859 = vmatprep.subr.bf16.mxu0 %v2808
    %2860 = vmatpush1.bf16.msra.mxu0 %v2807
    %2861 = vmatprep.subr.bf16.mxu0 %v2812
    %2862 = vmatpush1.bf16.msra.mxu0 %v2811
    %2863 = vmatprep.subr.bf16.mxu0 0
    %2864 = vmatpush1.bf16.msra.mxu0 0
    %2865 = vmatprep.subr.bf16.mxu0 0
    %2866 = vmatpush1.bf16.msra.mxu0 0
    %2867 = vmatprep.subr.bf16.mxu0 0
    %2868 = vmatpush1.bf16.msra.mxu0 0
    %2869 = vmatprep.subr.bf16.mxu0 0
    %2870 = vmatpush1.bf16.msra.mxu0 0
    %2871 = vmatprep.subr.bf16.mxu0 0
    %2872 = vmatpush1.bf16.msra.mxu0 0
    %2873 = vmatprep.subr.bf16.mxu0 0
    %2874 = vmatpush1.bf16.msra.mxu0 0
    %2875 = vmatprep.subr.bf16.mxu0 0
    %2876 = vmatpush1.bf16.msra.mxu0 0
    %2877 = vmatprep.subr.bf16.mxu0 0
    %2878 = vmatpush1.bf16.msra.mxu0 0
    %2879 = vmatprep.mubr.bf16.mxu0 0
    %2880 = vmatmul.mubr.bf16.gmra.mrb[0].mxu0 %v2654
    %v2881 = vpop.f32.mrb[0].mxu0
    %v2882 = vadd.f32 0.0, %v2881
    %v2883 = vpop.f32.mrb[0].mxu0
    %v2884 = vadd.f32 0.0, %v2883
    %v2885 = vpop.f32.mrb[0].mxu0
    %v2886 = vpop.f32.mrb[0].mxu0
    %2887 = vdwg.mxu0
    %2888 = vmatprep.subr.bf16.mxu0 %v2786
    %2889 = vmatpush1.bf16.msra.mxu0 %v2785
    %2890 = vmatprep.subr.bf16.mxu0 %v2790
    %2891 = vmatpush1.bf16.msra.mxu0 %v2789
    %2892 = vmatprep.subr.bf16.mxu0 %v2794
    %2893 = vmatpush1.bf16.msra.mxu0 %v2793
    %2894 = vmatprep.subr.bf16.mxu0 %v2798
    %2895 = vmatpush1.bf16.msra.mxu0 %v2797
    %2896 = vmatprep.subr.bf16.mxu0 %v2802
    %2897 = vmatpush1.bf16.msra.mxu0 %v2801
    %2898 = vmatprep.subr.bf16.mxu0 %v2806
    %2899 = vmatpush1.bf16.msra.mxu0 %v2805
    %2900 = vmatprep.subr.bf16.mxu0 %v2810
    %2901 = vmatpush1.bf16.msra.mxu0 %v2809
    %2902 = vmatprep.subr.bf16.mxu0 %v2814
    %2903 = vmatpush1.bf16.msra.mxu0 %v2813
    %2904 = vmatprep.subr.bf16.mxu0 0
    %2905 = vmatpush1.bf16.msra.mxu0 0
    %2906 = vmatprep.subr.bf16.mxu0 0
    %2907 = vmatpush1.bf16.msra.mxu0 0
    %2908 = vmatprep.subr.bf16.mxu0 0
    %2909 = vmatpush1.bf16.msra.mxu0 0
    %2910 = vmatprep.subr.bf16.mxu0 0
    %2911 = vmatpush1.bf16.msra.mxu0 0
    %2912 = vmatprep.subr.bf16.mxu0 0
    %2913 = vmatpush1.bf16.msra.mxu0 0
    %2914 = vmatprep.subr.bf16.mxu0 0
    %2915 = vmatpush1.bf16.msra.mxu0 0
    %2916 = vmatprep.subr.bf16.mxu0 0
    %2917 = vmatpush1.bf16.msra.mxu0 0
    %2918 = vmatprep.subr.bf16.mxu0 0
    %2919 = vmatpush1.bf16.msra.mxu0 0
    %2920 = vmatprep.mubr.bf16.mxu0 0
    %2921 = vmatmul.mubr.bf16.gmra.mrb[0].mxu0 %v2654
    %v2922 = vpop.f32.mrb[0].mxu0
    %v2923 = vadd.f32 0.0, %v2922
    %v2924 = vpop.f32.mrb[0].mxu0
    %v2925 = vadd.f32 0.0, %v2924
    %v2926 = vpop.f32.mrb[0].mxu0
    %v2927 = vpop.f32.mrb[0].mxu0
    %2928 = vdwg.mxu0
    %v2929 = vadd.f32 %v2650, %v2882
    %v2930 = vadd.f32 %v2651, %v2884
    %v2931 = vadd.f32 %v2652, %v2923
    %v2932 = vadd.f32 %v2653, %v2925
    %v2933 = vmul.f32 %v2929, 0.5
    %v2934 = vtanh.pop %v2933
    %v2935 = vmul.f32 %v2934, 0.5
    %v2936 = vadd.f32 %v2935, 0.5
    %v2937 = vmul.f32 %v2930, 0.5
    %v2938 = vtanh.pop %v2937
    %v2939 = vmul.f32 %v2938, 0.5
    %v2940 = vadd.f32 %v2939, 0.5
    %v2941 = vtanh.pop %v2931
    %v2942 = vmul.f32 %v2932, 0.5
    %v2943 = vtanh.pop %v2942
    %v2944 = vmul.f32 %v2943, 0.5
    %v2945 = vadd.f32 %v2944, 0.5
    %v2946 = vmul.f32 %v2940, %v2648
    %v2947 = vmul.f32 %v2936, %v2941
    %v2948 = vadd.f32 %v2946, %v2947
    %v2949 = vtanh.pop %v2948
    %v2950 = vmul.f32 %v2945, %v2949
    %2951 = vst [vmem:[#allocation3] sm:$0xff] %v2950
    %2952 = vst [vmem:[#allocation4] sm:$0xff] %v2948
    %v2953 = vpack.c.bf16 %v2950, %v2950
    %s2954 = scalar_lea.vmem [#allocation11], 28
    %2955 = vst [vmem:[%s2954] sm:$0xf] %v2953
    // Predicated region
    $region30: #{tpu_custom_call.1} parent=1 // pred_check
      _
    $region31: #{tpu_custom_call.1} parent=1 // pred_check_branch
      %2957 = sbr.rel (0) target = $region33
    $region32: #{tpu_custom_call.1} parent=1 // pred_region
      %s2959 = ssub.s32 512, 512
      %2960 = vsyncadd [#allocation7], %s2959
      %s2961 = sshll.u32 [#allocation11], 4
      %s2962 = int_to_ptr.vmem [resolvable:$true] %s2961
      %2967 = dma.vmem_to_hbm [thread:$0]  %s2962, 512, %s4, [#allocation7], 64, 64, 4
    $region33: #{tpu_custom_call.1} parent=1 // pred_fallthru
      _
    // Predicated region
    $region34: #{tpu_custom_call.1} parent=1 // pred_check
      _
    $region35: #{tpu_custom_call.1} parent=1 // pred_check_branch
      %2969 = sbr.rel (0) target = $region37
    $region36: #{tpu_custom_call.1} parent=1 // pred_region
      %2970 = dma.done [#allocation7], 512
    $region37: #{tpu_custom_call.1} parent=1 // pred_fallthru
      _
    %2971 = vsyncpa [#allocation6], 1
    %2972 = vsyncpa [#allocation9], 1
    %2973 = vsyncpa [#allocation7], 1

</llo_original>
